<compile_context>
chip_gen: v6e
topology: v6e:2x2x1
jax: 0.10.0
libtpu: 0.0.40
codegen_flags: <defaults>
</compile_context>

<pallas_src>
import functools

import jax
import jax.numpy as jnp
from jax.experimental import pallas as pl
from jax.experimental.pallas import tpu as pltpu

_BF16 = jnp.bfloat16
_F32 = jnp.float32


def _leaky(t):
    return jnp.where(t >= 0, t, 0.2 * t)          # LeakyReLU(0.2), f32


def _mm(a, b):
    """MXU matmul with bf16 operands and f32 accumulation."""
    return jnp.dot(a.astype(_BF16), b.astype(_BF16), preferred_element_type=_F32)


def _mm_rt(a, b):
    """a @ b.T without materializing the transpose (contract last dims)."""
    return jax.lax.dot_general(
        a.astype(_BF16), b.astype(_BF16),
        dimension_numbers=(((1,), (1,)), ((), ())),
        preferred_element_type=_F32)


# ----------------------------------------------------------------------------
# Pallas kernel: one grid step processes one batch element end-to-end.
# ----------------------------------------------------------------------------
def add_gcn_kernel(
    x_ref,                                   # (1, Cf, HWp) bf16 feature slab (pad lanes are zero)
    w_sc_ref,                                # (N+Cm, Cf) bf16 : stacked [w_fc ; w_ct]
    b_sc_ref,                                # (N+Cm, 1)  f32  : stacked [0 ; b_ct]
    a_s_t_ref,                               # (N, N)     bf16 : static_adj weight, pre-transposed
    w_sw_ref, b_sw_ref,                      # (Cm, Cm) bf16, (Cm, 1) f32  static_weight
    w_g_ref, b_g_ref,                        # (Cm, Cm) bf16, (Cm, 1) f32  conv_global
    bn_gamma_ref, bn_beta_ref,               # (Cm, 1) f32 each, bn_global affine
    bn_rm_ref, bn_rv_ref,                    # (Cm, 1) f32 each, bn_global running stats
    w_co_g_ref, w_co_x_ref, b_co_ref,        # (N, Cm) bf16 x2, (N, 1) f32  conv_create_co_mat halves
    w_dw_ref, b_dw_ref,                      # (Cm, Cm) bf16, (Cm, 1) f32  dynamic_weight
    w_ll_t_ref,                              # (Cm, N) f32 : last_linear weight, pre-transposed (VPU head)
    b_ll_ref,                                # (1, N)  f32
    out1_ref,                                # (1, N, 1) f32
    out2_ref,                                # (1, 1, N) f32  (lane-oriented)
    *, hw_valid: int,
):
    n_cls = a_s_t_ref.shape[0]
    hw_pad = x_ref.shape[2]

    xf = x_ref[0]                                                     # (Cf, HWp) bf16

    # ---- fc + conv_transform fused into one lane-dense MXU matmul over Cf ----
    sx = _mm(w_sc_ref[...], xf) + b_sc_ref[...]                       # (N+Cm, HWp) f32
    s = sx[:n_cls]                                                    # (N, HWp)   fc (bias-free rows)
    xt = sx[n_cls:]                                                   # (Cm, HWp)  conv_transform

    if hw_valid < hw_pad:                                             # mask zero-padded spatial lanes
        lane = jax.lax.broadcasted_iota(jnp.int32, (1, hw_pad), 1)
        valid = lane < hw_valid
        s_max_in = jnp.where(valid, s, -jnp.inf)                      # exclude pad from the max
        mask = jnp.where(valid, jax.nn.sigmoid(s), 0.0)               # pad lanes contribute 0 to v
    else:
        s_max_in = s
        mask = jax.nn.sigmoid(s)

    # ---- forward_classification_sm: topk(1, -1).mean(-1) == max over HW ----
    # (max over the lane axis naturally yields an (N, 1) column; a lane-oriented
    #  store would need a tiny transpose that costs more than the masked store.)
    out1_ref[...] = jnp.max(s_max_in, axis=-1, keepdims=True).reshape(1, n_cls, 1)

    # ---- forward_sam: v = conv_transform(x) @ sigmoid(fc(x))^T ----
    v = _mm_rt(xt, mask)                                              # (Cm, N)

    # ---- D-GCN static branch (a_s pre-transposed: (A @ v^T)^T == v @ A^T) ----
    sa_t = _leaky(_mm(v, a_s_t_ref[...]))                             # (Cm, N)
    sw = _leaky(_mm(w_sw_ref[...], sa_t) + b_sw_ref[...])             # (Cm, N)
    x1 = v + sw                                                       # residual

    # ---- D-GCN dynamic adjacency ----
    # conv_global(gap(x1)) == mean(conv_global(x1)) by linearity: keeps the MXU
    # RHS N-wide instead of a 1-wide matvec.
    g = jnp.mean(_mm(w_g_ref[...], x1), axis=-1, keepdims=True) + b_g_ref[...]   # (Cm, 1)
    # BatchNorm1d (eval mode, running statistics), f32.
    g = (g - bn_rm_ref[...]) * jax.lax.rsqrt(bn_rv_ref[...] + 1e-5) * bn_gamma_ref[...] + bn_beta_ref[...]
    g = _leaky(g)
    # conv_create_co_mat(cat([expand(g), x1])) == W[:, :Cm] @ g + W[:, Cm:] @ x1 + b
    # TODO(synk): the 1-wide w_co_g @ g matvec still underfills the MXU at
    #             Cm=1024; could move to a VPU broadcast-multiply + lane reduce.
    da = jax.nn.sigmoid(
        _mm(w_co_g_ref[...], g) + _mm(w_co_x_ref[...], x1) + b_co_ref[...])      # (N, N)

    # ---- D-GCN dynamic branch ----
    x2 = _leaky(_mm(x1, da))                                          # (Cm, N)
    x3 = _leaky(_mm(w_dw_ref[...], x2) + b_dw_ref[...])               # (Cm, N)

    # ---- head: mask_mat is the identity, so (w_ll @ z * I).sum(-1) == diag ----
    z = v + x3
    out2 = jnp.sum(w_ll_t_ref[...] * z, axis=0, keepdims=True) + b_ll_ref[...]   # (1, N), VPU + sublane reduce
    out2_ref[...] = out2.reshape(1, 1, n_cls)


# ----------------------------------------------------------------------------
# Wrapper: parameter preprocessing + pallas_call.
# ----------------------------------------------------------------------------
def add_gcn_forward(x, params):
    """x: (B, Cf, H, W) feature map.  Returns (out1, out2), each (B, num_classes)."""
    B, Cf, H, W = x.shape
    HW = H * W
    HWp = ((HW + 127) // 128) * 128                 # lane-dense spatial axis
    N = params["w_fc"].shape[0]

    xf = x.reshape(B, Cf, HW).astype(_F32)
    if HWp != HW:
        xf = jnp.pad(xf, ((0, 0), (0, 0), (0, HWp - HW)))
    xf = xf.astype(_BF16)

    f32 = lambda a: a.astype(_F32)
    bf16 = lambda a: a.astype(_BF16)

    # TODO(synk): the out2 head folds mask_mat == identity (true for stock
    #             ADD_GCN); a general learned mask_mat would need the full
    #             (N, Cm) x (Cm, N) matmul path.
    weights = [
        bf16(jnp.concatenate([params["w_fc"], params["w_ct"]], axis=0)),           # w_sc
        jnp.concatenate([jnp.zeros((N, 1), _F32), f32(params["b_ct"])], axis=0),   # b_sc
        bf16(params["a_s"].T),                                                     # a_s_t
        bf16(params["w_sw"]), f32(params["b_sw"]),
        bf16(params["w_g"]), f32(params["b_g"]),
        f32(params["bn_gamma"]), f32(params["bn_beta"]),
        f32(params["bn_rm"]), f32(params["bn_rv"]),
        bf16(params["w_co_g"]), bf16(params["w_co_x"]), f32(params["b_co"]),
        bf16(params["w_dw"]), f32(params["b_dw"]),
        f32(params["w_ll"].T),                                                     # w_ll_t (VPU head, keep f32)
        f32(params["b_ll"]).reshape(1, N),                                         # b_ll row
    ]

    kernel = functools.partial(add_gcn_kernel, hw_valid=HW)

    x_spec = pl.BlockSpec((1, Cf, HWp), lambda b: (b, 0, 0))
    out_specs = (
        pl.BlockSpec((1, N, 1), lambda b: (b, 0, 0)),
        pl.BlockSpec((1, 1, N), lambda b: (b, 0, 0)),
    )
    out_shape = (
        jax.ShapeDtypeStruct((B, N, 1), _F32),
        jax.ShapeDtypeStruct((B, 1, N), _F32),
    )

    # Explicit VMEM budget: resident weights (x2 headroom) + double-buffered
    # per-batch slab + working-set slack, capped at v7x's 64 MiB physical VMEM.
    weight_bytes = sum(int(w.size) * w.dtype.itemsize for w in weights)
    slab_bytes = Cf * HWp * 2                     # bf16 per-batch feature slab
    vmem_limit = int(min(64 * 1024 * 1024,
                         2 * weight_bytes + 4 * slab_bytes + 16 * 1024 * 1024))

    def build(single_buffer_weights):
        def wspec(arr):
            nd = arr.ndim
            idx = lambda b, _nd=nd: (0,) * _nd
            if single_buffer_weights:
                # Grid-invariant weights: nothing to prefetch, single-buffer them.
                return pl.BlockSpec(arr.shape, idx, pipeline_mode=pl.Buffered(1))
            return pl.BlockSpec(arr.shape, idx)

        return pl.pallas_call(
            kernel,
            grid=(B,),
            in_specs=[x_spec] + [wspec(w) for w in weights],
            out_specs=out_specs,
            out_shape=out_shape,
            compiler_params=pltpu.CompilerParams(
                dimension_semantics=("parallel",),
                vmem_limit_bytes=vmem_limit,
            ),
        )

    try:
        out1, out2 = build(True)(xf, *weights)
    except Exception:
        # Fallback for JAX versions where pl.Buffered(1) single-buffering of
        # grid-invariant inputs is not supported by the Mosaic pipeline.
        out1, out2 = build(False)(xf, *weights)

    return out1[:, :, 0], out2[:, 0, :]


# ----------------------------------------------------------------------------
# Pure-JAX f32 reference (same math as the PyTorch module) for validation.
# ----------------------------------------------------------------------------
def ref_forward(x, p):
    B, Cf, H, W = x.shape
    xf = x.reshape(B, Cf, H * W).astype(jnp.float32)
    leaky = lambda t: jnp.where(t >= 0, t, 0.2 * t)

    s = jnp.einsum("nc,bcl->bnl", p["w_fc"], xf)
    out1 = jnp.max(s, axis=-1)
    mask = jax.nn.sigmoid(s)
    xt = jnp.einsum("mc,bcl->bml", p["w_ct"], xf) + p["b_ct"][None]
    v = jnp.einsum("bml,bnl->bmn", xt, mask)

    sa = leaky(jnp.einsum("ni,bci->bnc", p["a_s"], v))
    sw = leaky(jnp.einsum("oc,bnc->bon", p["w_sw"], sa) + p["b_sw"][None])
    x1 = v + sw

    glb = jnp.mean(x1, axis=-1, keepdims=True)
    g = jnp.einsum("oc,bcl->bol", p["w_g"], glb) + p["b_g"][None]
    g = (g - p["bn_rm"][None]) * jax.lax.rsqrt(p["bn_rv"][None] + 1e-5) * p["bn_gamma"][None] + p["bn_beta"][None]
    g = leaky(g)
    da = jax.nn.sigmoid(
        jnp.einsum("nc,bcl->bnl", p["w_co_g"], g)
        + jnp.einsum("nc,bcl->bnl", p["w_co_x"], x1)
        + p["b_co"][None])

    x2 = leaky(jnp.einsum("bcn,bnm->bcm", x1, da))
    x3 = leaky(jnp.einsum("oc,bcn->bon", p["w_dw"], x2) + p["b_dw"][None])

    z = v + x3
    out2f = jnp.einsum("nc,bcm->bnm", p["w_ll"], z) + p["b_ll"][None]
    out2 = jnp.sum(out2f * p["mask_mat"][None], axis=-1)
    return out1, out2


# ----------------------------------------------------------------------------
# Deterministic parameter init (synthetic; shapes follow the module __init__,
# scaled down: C_feat=64 stands in for 2048, C_mid=32 for 1024).
# ----------------------------------------------------------------------------
def make_params(key, c_feat, c_mid, num_classes):
    ks = jax.random.split(key, 16)
    rnd = lambda k, shape, scale=0.1: (scale * jax.random.normal(k, shape)).astype(jnp.float32)
    p = {
        "w_fc":     rnd(ks[0], (num_classes, c_feat)),
        "w_ct":     rnd(ks[1], (c_mid, c_feat)),
        "b_ct":     rnd(ks[2], (c_mid, 1)),
        "a_s":      rnd(ks[3], (num_classes, num_classes)),
        "w_sw":     rnd(ks[4], (c_mid, c_mid)),
        "b_sw":     rnd(ks[5], (c_mid, 1)),
        "w_g":      rnd(ks[6], (c_mid, c_mid)),
        "b_g":      rnd(ks[7], (c_mid, 1)),
        "bn_gamma": jnp.ones((c_mid, 1), jnp.float32),
        "bn_beta":  jnp.zeros((c_mid, 1), jnp.float32),
        "bn_rm":    rnd(ks[8], (c_mid, 1), 0.05),
        "bn_rv":    (1.0 + 0.1 * jax.random.uniform(ks[9], (c_mid, 1))).astype(jnp.float32),
        "w_co_g":   rnd(ks[10], (num_classes, c_mid)),
        "w_co_x":   rnd(ks[11], (num_classes, c_mid)),
        "b_co":     rnd(ks[12], (num_classes, 1)),
        "w_dw":     rnd(ks[13], (c_mid, c_mid)),
        "b_dw":     rnd(ks[14], (c_mid, 1)),
        "w_ll":     rnd(ks[15], (num_classes, c_mid)),
        "b_ll":     jnp.zeros((num_classes, 1), jnp.float32),
        "mask_mat": jnp.eye(num_classes, dtype=jnp.float32),
    }
    return p


if __name__ == "__main__":
    B, C_FEAT, H, W = 2, 64, 8, 8          # small stand-ins (2048 -> 64)
    C_MID, NUM_CLASSES = 32, 8             # (1024 -> 32), num_classes = 8

    key = jax.random.PRNGKey(0)
    kx, kp = jax.random.split(key)
    x = (0.5 * jax.random.normal(kx, (B, C_FEAT, H, W))).astype(jnp.float32)
    params = make_params(kp, C_FEAT, C_MID, NUM_CLASSES)

    out1, out2 = add_gcn_forward(x, params)
    out1 = jax.block_until_ready(out1)
    out2 = jax.block_until_ready(out2)

    r1, r2 = ref_forward(x, params)
    assert out1.shape == (B, NUM_CLASSES) and out2.shape == (B, NUM_CLASSES)
    # bf16 MXU operands (f32 accumulation) -> looser tolerance than a pure-f32 run.
    assert jnp.allclose(out1, r1, atol=5e-2, rtol=5e-2), "out1 mismatch vs reference"
    assert jnp.allclose(out2, r2, atol=1e-1, rtol=5e-2), "out2 mismatch vs reference"

    print("KERNEL_OK")
</pallas_src>

<mosaic_0001>
module attributes {stable_mosaic.version = 11 : i64} {
  func.func @add_gcn_kernel(%arg0: i32, %arg1: memref<1x64x128xbf16, #tpu.memory_space<vmem>>, %arg2: memref<40x64xbf16, #tpu.memory_space<vmem>>, %arg3: memref<40x1xf32, #tpu.memory_space<vmem>>, %arg4: memref<8x8xbf16, #tpu.memory_space<vmem>>, %arg5: memref<32x32xbf16, #tpu.memory_space<vmem>>, %arg6: memref<32x1xf32, #tpu.memory_space<vmem>>, %arg7: memref<32x32xbf16, #tpu.memory_space<vmem>>, %arg8: memref<32x1xf32, #tpu.memory_space<vmem>>, %arg9: memref<32x1xf32, #tpu.memory_space<vmem>>, %arg10: memref<32x1xf32, #tpu.memory_space<vmem>>, %arg11: memref<32x1xf32, #tpu.memory_space<vmem>>, %arg12: memref<32x1xf32, #tpu.memory_space<vmem>>, %arg13: memref<8x32xbf16, #tpu.memory_space<vmem>>, %arg14: memref<8x32xbf16, #tpu.memory_space<vmem>>, %arg15: memref<8x1xf32, #tpu.memory_space<vmem>>, %arg16: memref<32x32xbf16, #tpu.memory_space<vmem>>, %arg17: memref<32x1xf32, #tpu.memory_space<vmem>>, %arg18: memref<32x8xf32, #tpu.memory_space<vmem>>, %arg19: memref<1x8xf32, #tpu.memory_space<vmem>>, %arg20: memref<1x8x1xf32, #tpu.memory_space<vmem>>, %arg21: memref<1x1x8xf32, #tpu.memory_space<vmem>>) attributes {dimension_semantics = [#tpu.dimension_semantics<parallel>], iteration_bounds = array<i64: 2>, scalar_prefetch = 0 : i64, scratch_operands = 0 : i64, tpu.core_type = #tpu.core_type<tc>, window_params = [{transform_indices = @transform_0, window_bounds = array<i64: 1, 64, 128>}, {pipeline_mode = #tpu.pipeline_mode<synchronous>, transform_indices = @transform_1, window_bounds = array<i64: 40, 64>}, {pipeline_mode = #tpu.pipeline_mode<synchronous>, transform_indices = @transform_2, window_bounds = array<i64: 40, 1>}, {pipeline_mode = #tpu.pipeline_mode<synchronous>, transform_indices = @transform_3, window_bounds = array<i64: 8, 8>}, {pipeline_mode = #tpu.pipeline_mode<synchronous>, transform_indices = @transform_4, window_bounds = array<i64: 32, 32>}, {pipeline_mode = #tpu.pipeline_mode<synchronous>, transform_indices = @transform_5, window_bounds = array<i64: 32, 1>}, {pipeline_mode = #tpu.pipeline_mode<synchronous>, transform_indices = @transform_6, window_bounds = array<i64: 32, 32>}, {pipeline_mode = #tpu.pipeline_mode<synchronous>, transform_indices = @transform_7, window_bounds = array<i64: 32, 1>}, {pipeline_mode = #tpu.pipeline_mode<synchronous>, transform_indices = @transform_8, window_bounds = array<i64: 32, 1>}, {pipeline_mode = #tpu.pipeline_mode<synchronous>, transform_indices = @transform_9, window_bounds = array<i64: 32, 1>}, {pipeline_mode = #tpu.pipeline_mode<synchronous>, transform_indices = @transform_10, window_bounds = array<i64: 32, 1>}, {pipeline_mode = #tpu.pipeline_mode<synchronous>, transform_indices = @transform_11, window_bounds = array<i64: 32, 1>}, {pipeline_mode = #tpu.pipeline_mode<synchronous>, transform_indices = @transform_12, window_bounds = array<i64: 8, 32>}, {pipeline_mode = #tpu.pipeline_mode<synchronous>, transform_indices = @transform_13, window_bounds = array<i64: 8, 32>}, {pipeline_mode = #tpu.pipeline_mode<synchronous>, transform_indices = @transform_14, window_bounds = array<i64: 8, 1>}, {pipeline_mode = #tpu.pipeline_mode<synchronous>, transform_indices = @transform_15, window_bounds = array<i64: 32, 32>}, {pipeline_mode = #tpu.pipeline_mode<synchronous>, transform_indices = @transform_16, window_bounds = array<i64: 32, 1>}, {pipeline_mode = #tpu.pipeline_mode<synchronous>, transform_indices = @transform_17, window_bounds = array<i64: 32, 8>}, {pipeline_mode = #tpu.pipeline_mode<synchronous>, transform_indices = @transform_18, window_bounds = array<i64: 1, 8>}, {transform_indices = @transform_19, window_bounds = array<i64: 1, 8, 1>}, {transform_indices = @transform_20, window_bounds = array<i64: 1, 1, 8>}]} {
    %c0 = arith.constant 0 : index
    %c0_0 = arith.constant 0 : index
    %c0_1 = arith.constant 0 : index
    %0 = vector.load %arg1[%c0, %c0_0, %c0_1] : memref<1x64x128xbf16, #tpu.memory_space<vmem>>, vector<1x64x128xbf16>
    %1 = vector.shape_cast %0 : vector<1x64x128xbf16> to vector<64x128xbf16>
    %c0_2 = arith.constant 0 : index
    %c0_3 = arith.constant 0 : index
    %2 = vector.load %arg2[%c0_2, %c0_3] : memref<40x64xbf16, #tpu.memory_space<vmem>>, vector<40x64xbf16>
    %cst = arith.constant dense<0.000000e+00> : vector<40x128xf32>
    %3 = tpu.matmul %2, %1, %cst {dimension_numbers = #tpu.dot_dimension_numbers<[1], [0], [0], [1], [0, 0, 1, 1], [], []>} : vector<40x64xbf16>, vector<64x128xbf16>, vector<40x128xf32> -> vector<40x128xf32>
    %c0_4 = arith.constant 0 : index
    %c0_5 = arith.constant 0 : index
    %4 = vector.load %arg3[%c0_4, %c0_5] : memref<40x1xf32, #tpu.memory_space<vmem>>, vector<40x1xf32>
    %5 = vector.broadcast %4 : vector<40x1xf32> to vector<40x128xf32>
    %6 = arith.addf %3, %5 : vector<40x128xf32>
    %7 = vector.extract_strided_slice %6 {offsets = [0, 0], sizes = [8, 128], strides = [1, 1]} : vector<40x128xf32> to vector<8x128xf32>
    %8 = vector.extract_strided_slice %6 {offsets = [8, 0], sizes = [32, 128], strides = [1, 1]} : vector<40x128xf32> to vector<32x128xf32>
    %9 = tpu.iota {dimensions = array<i32: 1>} : vector<1x128xi32>
    %c64_i32 = arith.constant 64 : i32
    %10 = vector.broadcast %c64_i32 : i32 to vector<1x128xi32>
    %11 = arith.cmpi slt, %9, %10 : vector<1x128xi32>
    %cst_6 = arith.constant 0xFF800000 : f32
    %12 = vector.shape_cast %11 : vector<1x128xi1> to vector<1x128xi1>
    %13 = vector.broadcast %12 : vector<1x128xi1> to vector<8x128xi1>
    %14 = vector.broadcast %cst_6 : f32 to vector<8x128xf32>
    %15 = arith.select %13, %7, %14 : vector<8x128xi1>, vector<8x128xf32>
    %16 = arith.negf %7 : vector<8x128xf32>
    %17 = math.exp %16 : vector<8x128xf32>
    %cst_7 = arith.constant 1.000000e+00 : f32
    %18 = vector.broadcast %cst_7 : f32 to vector<8x128xf32>
    %19 = arith.addf %18, %17 : vector<8x128xf32>
    %20 = arith.divf %18, %19 : vector<8x128xf32>
    %cst_8 = arith.constant 0.000000e+00 : f32
    %21 = vector.shape_cast %11 : vector<1x128xi1> to vector<1x128xi1>
    %22 = vector.broadcast %21 : vector<1x128xi1> to vector<8x128xi1>
    %23 = vector.broadcast %cst_8 : f32 to vector<8x128xf32>
    %24 = arith.select %22, %20, %23 : vector<8x128xi1>, vector<8x128xf32>
    %cst_9 = arith.constant dense<0xFF800000> : vector<8xf32>
    %25 = vector.multi_reduction <maximumf>, %15, %cst_9 [1] : vector<8x128xf32> to vector<8xf32>
    %26 = vector.shape_cast %25 : vector<8xf32> to vector<8x1xf32>
    %27 = vector.shape_cast %26 : vector<8x1xf32> to vector<1x8x1xf32>
    %c0_10 = arith.constant 0 : index
    %c0_11 = arith.constant 0 : index
    %c0_12 = arith.constant 0 : index
    %28 = vector.load %arg20[%c0_10, %c0_11, %c0_12] : memref<1x8x1xf32, #tpu.memory_space<vmem>>, vector<1x8x1xf32>
    tpu.vector_store %arg20[%c0_10, %c0_11, %c0_12], %27 {strides = array<i32>} : memref<1x8x1xf32, #tpu.memory_space<vmem>>, vector<1x8x1xf32>,
    %29 = arith.truncf %8 : vector<32x128xf32> to vector<32x128xbf16>
    %30 = arith.truncf %24 : vector<8x128xf32> to vector<8x128xbf16>
    %cst_13 = arith.constant dense<0.000000e+00> : vector<32x8xf32>
    %31 = tpu.matmul %29, %30, %cst_13 {dimension_numbers = #tpu.dot_dimension_numbers<[1], [1], [0], [0], [0, 0, 1, 0], [], []>} : vector<32x128xbf16>, vector<8x128xbf16>, vector<32x8xf32> -> vector<32x8xf32>
    %c0_14 = arith.constant 0 : index
    %c0_15 = arith.constant 0 : index
    %32 = vector.load %arg4[%c0_14, %c0_15] : memref<8x8xbf16, #tpu.memory_space<vmem>>, vector<8x8xbf16>
    %33 = arith.truncf %31 : vector<32x8xf32> to vector<32x8xbf16>
    %cst_16 = arith.constant dense<0.000000e+00> : vector<32x8xf32>
    %34 = tpu.matmul %33, %32, %cst_16 {dimension_numbers = #tpu.dot_dimension_numbers<[1], [0], [0], [1], [0, 0, 1, 1], [], []>} : vector<32x8xbf16>, vector<8x8xbf16>, vector<32x8xf32> -> vector<32x8xf32>
    %cst_17 = arith.constant 0.000000e+00 : f32
    %35 = vector.broadcast %cst_17 : f32 to vector<32x8xf32>
    %36 = arith.cmpf oge, %34, %35 : vector<32x8xf32>
    %cst_18 = arith.constant 2.000000e-01 : f32
    %37 = vector.broadcast %cst_18 : f32 to vector<32x8xf32>
    %38 = arith.mulf %37, %34 : vector<32x8xf32>
    %39 = arith.select %36, %34, %38 : vector<32x8xi1>, vector<32x8xf32>
    %c0_19 = arith.constant 0 : index
    %c0_20 = arith.constant 0 : index
    %40 = vector.load %arg5[%c0_19, %c0_20] : memref<32x32xbf16, #tpu.memory_space<vmem>>, vector<32x32xbf16>
    %41 = arith.truncf %39 : vector<32x8xf32> to vector<32x8xbf16>
    %cst_21 = arith.constant dense<0.000000e+00> : vector<32x8xf32>
    %42 = tpu.matmul %40, %41, %cst_21 {dimension_numbers = #tpu.dot_dimension_numbers<[1], [0], [0], [1], [0, 0, 1, 1], [], []>} : vector<32x32xbf16>, vector<32x8xbf16>, vector<32x8xf32> -> vector<32x8xf32>
    %c0_22 = arith.constant 0 : index
    %c0_23 = arith.constant 0 : index
    %43 = vector.load %arg6[%c0_22, %c0_23] : memref<32x1xf32, #tpu.memory_space<vmem>>, vector<32x1xf32>
    %44 = vector.broadcast %43 : vector<32x1xf32> to vector<32x8xf32>
    %45 = arith.addf %42, %44 : vector<32x8xf32>
    %cst_24 = arith.constant 0.000000e+00 : f32
    %46 = vector.broadcast %cst_24 : f32 to vector<32x8xf32>
    %47 = arith.cmpf oge, %45, %46 : vector<32x8xf32>
    %cst_25 = arith.constant 2.000000e-01 : f32
    %48 = vector.broadcast %cst_25 : f32 to vector<32x8xf32>
    %49 = arith.mulf %48, %45 : vector<32x8xf32>
    %50 = arith.select %47, %45, %49 : vector<32x8xi1>, vector<32x8xf32>
    %51 = arith.addf %31, %50 : vector<32x8xf32>
    %c0_26 = arith.constant 0 : index
    %c0_27 = arith.constant 0 : index
    %52 = vector.load %arg7[%c0_26, %c0_27] : memref<32x32xbf16, #tpu.memory_space<vmem>>, vector<32x32xbf16>
    %53 = arith.truncf %51 : vector<32x8xf32> to vector<32x8xbf16>
    %cst_28 = arith.constant dense<0.000000e+00> : vector<32x8xf32>
    %54 = tpu.matmul %52, %53, %cst_28 {dimension_numbers = #tpu.dot_dimension_numbers<[1], [0], [0], [1], [0, 0, 1, 1], [], []>} : vector<32x32xbf16>, vector<32x8xbf16>, vector<32x8xf32> -> vector<32x8xf32>
    %cst_29 = arith.constant dense<0.000000e+00> : vector<32xf32>
    %55 = vector.multi_reduction <add>, %54, %cst_29 [1] : vector<32x8xf32> to vector<32xf32>
    %56 = vector.shape_cast %55 : vector<32xf32> to vector<32x1xf32>
    %cst_30 = arith.constant 8.000000e+00 : f32
    %57 = vector.broadcast %cst_30 : f32 to vector<32x1xf32>
    %58 = arith.divf %56, %57 : vector<32x1xf32>
    %c0_31 = arith.constant 0 : index
    %c0_32 = arith.constant 0 : index
    %59 = vector.load %arg8[%c0_31, %c0_32] : memref<32x1xf32, #tpu.memory_space<vmem>>, vector<32x1xf32>
    %60 = arith.addf %58, %59 : vector<32x1xf32>
    %c0_33 = arith.constant 0 : index
    %c0_34 = arith.constant 0 : index
    %61 = vector.load %arg11[%c0_33, %c0_34] : memref<32x1xf32, #tpu.memory_space<vmem>>, vector<32x1xf32>
    %62 = arith.subf %60, %61 : vector<32x1xf32>
    %c0_35 = arith.constant 0 : index
    %c0_36 = arith.constant 0 : index
    %63 = vector.load %arg12[%c0_35, %c0_36] : memref<32x1xf32, #tpu.memory_space<vmem>>, vector<32x1xf32>
    %cst_37 = arith.constant 9.99999974E-6 : f32
    %64 = vector.broadcast %cst_37 : f32 to vector<32x1xf32>
    %65 = arith.addf %63, %64 : vector<32x1xf32>
    %66 = math.rsqrt %65 : vector<32x1xf32>
    %67 = arith.mulf %62, %66 : vector<32x1xf32>
    %c0_38 = arith.constant 0 : index
    %c0_39 = arith.constant 0 : index
    %68 = vector.load %arg9[%c0_38, %c0_39] : memref<32x1xf32, #tpu.memory_space<vmem>>, vector<32x1xf32>
    %69 = arith.mulf %67, %68 : vector<32x1xf32>
    %c0_40 = arith.constant 0 : index
    %c0_41 = arith.constant 0 : index
    %70 = vector.load %arg10[%c0_40, %c0_41] : memref<32x1xf32, #tpu.memory_space<vmem>>, vector<32x1xf32>
    %71 = arith.addf %69, %70 : vector<32x1xf32>
    %cst_42 = arith.constant 0.000000e+00 : f32
    %72 = vector.broadcast %cst_42 : f32 to vector<32x1xf32>
    %73 = arith.cmpf oge, %71, %72 : vector<32x1xf32>
    %cst_43 = arith.constant 2.000000e-01 : f32
    %74 = vector.broadcast %cst_43 : f32 to vector<32x1xf32>
    %75 = arith.mulf %74, %71 : vector<32x1xf32>
    %76 = arith.select %73, %71, %75 : vector<32x1xi1>, vector<32x1xf32>
    %c0_44 = arith.constant 0 : index
    %c0_45 = arith.constant 0 : index
    %77 = vector.load %arg13[%c0_44, %c0_45] : memref<8x32xbf16, #tpu.memory_space<vmem>>, vector<8x32xbf16>
    %78 = arith.truncf %76 : vector<32x1xf32> to vector<32x1xbf16>
    %cst_46 = arith.constant dense<0.000000e+00> : vector<8x1xf32>
    %79 = tpu.matmul %77, %78, %cst_46 {dimension_numbers = #tpu.dot_dimension_numbers<[1], [0], [0], [1], [0, 0, 1, 1], [], []>} : vector<8x32xbf16>, vector<32x1xbf16>, vector<8x1xf32> -> vector<8x1xf32>
    %c0_47 = arith.constant 0 : index
    %c0_48 = arith.constant 0 : index
    %80 = vector.load %arg14[%c0_47, %c0_48] : memref<8x32xbf16, #tpu.memory_space<vmem>>, vector<8x32xbf16>
    %81 = arith.truncf %51 : vector<32x8xf32> to vector<32x8xbf16>
    %cst_49 = arith.constant dense<0.000000e+00> : vector<8x8xf32>
    %82 = tpu.matmul %80, %81, %cst_49 {dimension_numbers = #tpu.dot_dimension_numbers<[1], [0], [0], [1], [0, 0, 1, 1], [], []>} : vector<8x32xbf16>, vector<32x8xbf16>, vector<8x8xf32> -> vector<8x8xf32>
    %83 = vector.broadcast %79 : vector<8x1xf32> to vector<8x8xf32>
    %84 = arith.addf %83, %82 : vector<8x8xf32>
    %c0_50 = arith.constant 0 : index
    %c0_51 = arith.constant 0 : index
    %85 = vector.load %arg15[%c0_50, %c0_51] : memref<8x1xf32, #tpu.memory_space<vmem>>, vector<8x1xf32>
    %86 = vector.broadcast %85 : vector<8x1xf32> to vector<8x8xf32>
    %87 = arith.addf %84, %86 : vector<8x8xf32>
    %88 = arith.negf %87 : vector<8x8xf32>
    %89 = math.exp %88 : vector<8x8xf32>
    %cst_52 = arith.constant 1.000000e+00 : f32
    %90 = vector.broadcast %cst_52 : f32 to vector<8x8xf32>
    %91 = arith.addf %90, %89 : vector<8x8xf32>
    %92 = arith.divf %90, %91 : vector<8x8xf32>
    %93 = arith.truncf %51 : vector<32x8xf32> to vector<32x8xbf16>
    %94 = arith.truncf %92 : vector<8x8xf32> to vector<8x8xbf16>
    %cst_53 = arith.constant dense<0.000000e+00> : vector<32x8xf32>
    %95 = tpu.matmul %93, %94, %cst_53 {dimension_numbers = #tpu.dot_dimension_numbers<[1], [0], [0], [1], [0, 0, 1, 1], [], []>} : vector<32x8xbf16>, vector<8x8xbf16>, vector<32x8xf32> -> vector<32x8xf32>
    %cst_54 = arith.constant 0.000000e+00 : f32
    %96 = vector.broadcast %cst_54 : f32 to vector<32x8xf32>
    %97 = arith.cmpf oge, %95, %96 : vector<32x8xf32>
    %cst_55 = arith.constant 2.000000e-01 : f32
    %98 = vector.broadcast %cst_55 : f32 to vector<32x8xf32>
    %99 = arith.mulf %98, %95 : vector<32x8xf32>
    %100 = arith.select %97, %95, %99 : vector<32x8xi1>, vector<32x8xf32>
    %c0_56 = arith.constant 0 : index
    %c0_57 = arith.constant 0 : index
    %101 = vector.load %arg16[%c0_56, %c0_57] : memref<32x32xbf16, #tpu.memory_space<vmem>>, vector<32x32xbf16>
    %102 = arith.truncf %100 : vector<32x8xf32> to vector<32x8xbf16>
    %cst_58 = arith.constant dense<0.000000e+00> : vector<32x8xf32>
    %103 = tpu.matmul %101, %102, %cst_58 {dimension_numbers = #tpu.dot_dimension_numbers<[1], [0], [0], [1], [0, 0, 1, 1], [], []>} : vector<32x32xbf16>, vector<32x8xbf16>, vector<32x8xf32> -> vector<32x8xf32>
    %c0_59 = arith.constant 0 : index
    %c0_60 = arith.constant 0 : index
    %104 = vector.load %arg17[%c0_59, %c0_60] : memref<32x1xf32, #tpu.memory_space<vmem>>, vector<32x1xf32>
    %105 = vector.broadcast %104 : vector<32x1xf32> to vector<32x8xf32>
    %106 = arith.addf %103, %105 : vector<32x8xf32>
    %cst_61 = arith.constant 0.000000e+00 : f32
    %107 = vector.broadcast %cst_61 : f32 to vector<32x8xf32>
    %108 = arith.cmpf oge, %106, %107 : vector<32x8xf32>
    %cst_62 = arith.constant 2.000000e-01 : f32
    %109 = vector.broadcast %cst_62 : f32 to vector<32x8xf32>
    %110 = arith.mulf %109, %106 : vector<32x8xf32>
    %111 = arith.select %108, %106, %110 : vector<32x8xi1>, vector<32x8xf32>
    %112 = arith.addf %31, %111 : vector<32x8xf32>
    %c0_63 = arith.constant 0 : index
    %c0_64 = arith.constant 0 : index
    %113 = vector.load %arg18[%c0_63, %c0_64] : memref<32x8xf32, #tpu.memory_space<vmem>>, vector<32x8xf32>
    %114 = arith.mulf %113, %112 : vector<32x8xf32>
    %cst_65 = arith.constant dense<0.000000e+00> : vector<8xf32>
    %115 = vector.multi_reduction <add>, %114, %cst_65 [0] : vector<32x8xf32> to vector<8xf32>
    %116 = vector.shape_cast %115 : vector<8xf32> to vector<1x8xf32>
    %c0_66 = arith.constant 0 : index
    %c0_67 = arith.constant 0 : index
    %117 = vector.load %arg19[%c0_66, %c0_67] : memref<1x8xf32, #tpu.memory_space<vmem>>, vector<1x8xf32>
    %118 = arith.addf %116, %117 : vector<1x8xf32>
    %119 = vector.shape_cast %118 : vector<1x8xf32> to vector<1x1x8xf32>
    %c0_68 = arith.constant 0 : index
    %c0_69 = arith.constant 0 : index
    %c0_70 = arith.constant 0 : index
    %120 = vector.load %arg21[%c0_68, %c0_69, %c0_70] : memref<1x1x8xf32, #tpu.memory_space<vmem>>, vector<1x1x8xf32>
    tpu.vector_store %arg21[%c0_68, %c0_69, %c0_70], %119 {strides = array<i32>} : memref<1x1x8xf32, #tpu.memory_space<vmem>>, vector<1x1x8xf32>,
    return
  }
  func.func @transform_0(%arg0: i32) -> (i32, i32, i32) {
    %c0_i32 = arith.constant 0 : i32
    %c0_i32_0 = arith.constant 0 : i32
    %c0_i32_1 = arith.constant 0 : i32
    return %arg0, %c0_i32, %c0_i32_0 : i32, i32, i32
  }
  func.func @transform_1(%arg0: i32) -> (i32, i32) {
    %c0_i32 = arith.constant 0 : i32
    %c0_i32_0 = arith.constant 0 : i32
    %c0_i32_1 = arith.constant 0 : i32
    return %c0_i32, %c0_i32_0 : i32, i32
  }
  func.func @transform_2(%arg0: i32) -> (i32, i32) {
    %c0_i32 = arith.constant 0 : i32
    %c0_i32_0 = arith.constant 0 : i32
    %c0_i32_1 = arith.constant 0 : i32
    return %c0_i32, %c0_i32_0 : i32, i32
  }
  func.func @transform_3(%arg0: i32) -> (i32, i32) {
    %c0_i32 = arith.constant 0 : i32
    %c0_i32_0 = arith.constant 0 : i32
    %c0_i32_1 = arith.constant 0 : i32
    return %c0_i32, %c0_i32_0 : i32, i32
  }
  func.func @transform_4(%arg0: i32) -> (i32, i32) {
    %c0_i32 = arith.constant 0 : i32
    %c0_i32_0 = arith.constant 0 : i32
    %c0_i32_1 = arith.constant 0 : i32
    return %c0_i32, %c0_i32_0 : i32, i32
  }
  func.func @transform_5(%arg0: i32) -> (i32, i32) {
    %c0_i32 = arith.constant 0 : i32
    %c0_i32_0 = arith.constant 0 : i32
    %c0_i32_1 = arith.constant 0 : i32
    return %c0_i32, %c0_i32_0 : i32, i32
  }
  func.func @transform_6(%arg0: i32) -> (i32, i32) {
    %c0_i32 = arith.constant 0 : i32
    %c0_i32_0 = arith.constant 0 : i32
    %c0_i32_1 = arith.constant 0 : i32
    return %c0_i32, %c0_i32_0 : i32, i32
  }
  func.func @transform_7(%arg0: i32) -> (i32, i32) {
    %c0_i32 = arith.constant 0 : i32
    %c0_i32_0 = arith.constant 0 : i32
    %c0_i32_1 = arith.constant 0 : i32
    return %c0_i32, %c0_i32_0 : i32, i32
  }
  func.func @transform_8(%arg0: i32) -> (i32, i32) {
    %c0_i32 = arith.constant 0 : i32
    %c0_i32_0 = arith.constant 0 : i32
    %c0_i32_1 = arith.constant 0 : i32
    return %c0_i32, %c0_i32_0 : i32, i32
  }
  func.func @transform_9(%arg0: i32) -> (i32, i32) {
    %c0_i32 = arith.constant 0 : i32
    %c0_i32_0 = arith.constant 0 : i32
    %c0_i32_1 = arith.constant 0 : i32
    return %c0_i32, %c0_i32_0 : i32, i32
  }
  func.func @transform_10(%arg0: i32) -> (i32, i32) {
    %c0_i32 = arith.constant 0 : i32
    %c0_i32_0 = arith.constant 0 : i32
    %c0_i32_1 = arith.constant 0 : i32
    return %c0_i32, %c0_i32_0 : i32, i32
  }
  func.func @transform_11(%arg0: i32) -> (i32, i32) {
    %c0_i32 = arith.constant 0 : i32
    %c0_i32_0 = arith.constant 0 : i32
    %c0_i32_1 = arith.constant 0 : i32
    return %c0_i32, %c0_i32_0 : i32, i32
  }
  func.func @transform_12(%arg0: i32) -> (i32, i32) {
    %c0_i32 = arith.constant 0 : i32
    %c0_i32_0 = arith.constant 0 : i32
    %c0_i32_1 = arith.constant 0 : i32
    return %c0_i32, %c0_i32_0 : i32, i32
  }
  func.func @transform_13(%arg0: i32) -> (i32, i32) {
    %c0_i32 = arith.constant 0 : i32
    %c0_i32_0 = arith.constant 0 : i32
    %c0_i32_1 = arith.constant 0 : i32
    return %c0_i32, %c0_i32_0 : i32, i32
  }
  func.func @transform_14(%arg0: i32) -> (i32, i32) {
    %c0_i32 = arith.constant 0 : i32
    %c0_i32_0 = arith.constant 0 : i32
    %c0_i32_1 = arith.constant 0 : i32
    return %c0_i32, %c0_i32_0 : i32, i32
  }
  func.func @transform_15(%arg0: i32) -> (i32, i32) {
    %c0_i32 = arith.constant 0 : i32
    %c0_i32_0 = arith.constant 0 : i32
    %c0_i32_1 = arith.constant 0 : i32
    return %c0_i32, %c0_i32_0 : i32, i32
  }
  func.func @transform_16(%arg0: i32) -> (i32, i32) {
    %c0_i32 = arith.constant 0 : i32
    %c0_i32_0 = arith.constant 0 : i32
    %c0_i32_1 = arith.constant 0 : i32
    return %c0_i32, %c0_i32_0 : i32, i32
  }
  func.func @transform_17(%arg0: i32) -> (i32, i32) {
    %c0_i32 = arith.constant 0 : i32
    %c0_i32_0 = arith.constant 0 : i32
    %c0_i32_1 = arith.constant 0 : i32
    return %c0_i32, %c0_i32_0 : i32, i32
  }
  func.func @transform_18(%arg0: i32) -> (i32, i32) {
    %c0_i32 = arith.constant 0 : i32
    %c0_i32_0 = arith.constant 0 : i32
    %c0_i32_1 = arith.constant 0 : i32
    return %c0_i32, %c0_i32_0 : i32, i32
  }
  func.func @transform_19(%arg0: i32) -> (i32, i32, i32) {
    %c0_i32 = arith.constant 0 : i32
    %c0_i32_0 = arith.constant 0 : i32
    %c0_i32_1 = arith.constant 0 : i32
    return %arg0, %c0_i32, %c0_i32_0 : i32, i32, i32
  }
  func.func @transform_20(%arg0: i32) -> (i32, i32, i32) {
    %c0_i32 = arith.constant 0 : i32
    %c0_i32_0 = arith.constant 0 : i32
    %c0_i32_1 = arith.constant 0 : i32
    return %arg0, %c0_i32, %c0_i32_0 : i32, i32, i32
  }
}

module attributes {stable_mosaic.version = 11 : i64} {
  func.func @add_gcn_kernel(%arg0: i32, %arg1: memref<1x64x128xbf16, #tpu.memory_space<vmem>>, %arg2: memref<40x64xbf16, #tpu.memory_space<vmem>>, %arg3: memref<40x1xf32, #tpu.memory_space<vmem>>, %arg4: memref<8x8xbf16, #tpu.memory_space<vmem>>, %arg5: memref<32x32xbf16, #tpu.memory_space<vmem>>, %arg6: memref<32x1xf32, #tpu.memory_space<vmem>>, %arg7: memref<32x32xbf16, #tpu.memory_space<vmem>>, %arg8: memref<32x1xf32, #tpu.memory_space<vmem>>, %arg9: memref<32x1xf32, #tpu.memory_space<vmem>>, %arg10: memref<32x1xf32, #tpu.memory_space<vmem>>, %arg11: memref<32x1xf32, #tpu.memory_space<vmem>>, %arg12: memref<32x1xf32, #tpu.memory_space<vmem>>, %arg13: memref<8x32xbf16, #tpu.memory_space<vmem>>, %arg14: memref<8x32xbf16, #tpu.memory_space<vmem>>, %arg15: memref<8x1xf32, #tpu.memory_space<vmem>>, %arg16: memref<32x32xbf16, #tpu.memory_space<vmem>>, %arg17: memref<32x1xf32, #tpu.memory_space<vmem>>, %arg18: memref<32x8xf32, #tpu.memory_space<vmem>>, %arg19: memref<1x8xf32, #tpu.memory_space<vmem>>, %arg20: memref<1x8x1xf32, #tpu.memory_space<vmem>>, %arg21: memref<1x1x8xf32, #tpu.memory_space<vmem>>) attributes {dimension_semantics = [#tpu.dimension_semantics<parallel>], iteration_bounds = array<i64: 2>, scalar_prefetch = 0 : i64, scratch_operands = 0 : i64, tpu.core_type = #tpu.core_type<tc>, window_params = [{transform_indices = @transform_0, window_bounds = array<i64: 1, 64, 128>}, {pipeline_mode = #tpu.pipeline_mode<synchronous>, transform_indices = @transform_1, window_bounds = array<i64: 40, 64>}, {pipeline_mode = #tpu.pipeline_mode<synchronous>, transform_indices = @transform_2, window_bounds = array<i64: 40, 1>}, {pipeline_mode = #tpu.pipeline_mode<synchronous>, transform_indices = @transform_3, window_bounds = array<i64: 8, 8>}, {pipeline_mode = #tpu.pipeline_mode<synchronous>, transform_indices = @transform_4, window_bounds = array<i64: 32, 32>}, {pipeline_mode = #tpu.pipeline_mode<synchronous>, transform_indices = @transform_5, window_bounds = array<i64: 32, 1>}, {pipeline_mode = #tpu.pipeline_mode<synchronous>, transform_indices = @transform_6, window_bounds = array<i64: 32, 32>}, {pipeline_mode = #tpu.pipeline_mode<synchronous>, transform_indices = @transform_7, window_bounds = array<i64: 32, 1>}, {pipeline_mode = #tpu.pipeline_mode<synchronous>, transform_indices = @transform_8, window_bounds = array<i64: 32, 1>}, {pipeline_mode = #tpu.pipeline_mode<synchronous>, transform_indices = @transform_9, window_bounds = array<i64: 32, 1>}, {pipeline_mode = #tpu.pipeline_mode<synchronous>, transform_indices = @transform_10, window_bounds = array<i64: 32, 1>}, {pipeline_mode = #tpu.pipeline_mode<synchronous>, transform_indices = @transform_11, window_bounds = array<i64: 32, 1>}, {pipeline_mode = #tpu.pipeline_mode<synchronous>, transform_indices = @transform_12, window_bounds = array<i64: 8, 32>}, {pipeline_mode = #tpu.pipeline_mode<synchronous>, transform_indices = @transform_13, window_bounds = array<i64: 8, 32>}, {pipeline_mode = #tpu.pipeline_mode<synchronous>, transform_indices = @transform_14, window_bounds = array<i64: 8, 1>}, {pipeline_mode = #tpu.pipeline_mode<synchronous>, transform_indices = @transform_15, window_bounds = array<i64: 32, 32>}, {pipeline_mode = #tpu.pipeline_mode<synchronous>, transform_indices = @transform_16, window_bounds = array<i64: 32, 1>}, {pipeline_mode = #tpu.pipeline_mode<synchronous>, transform_indices = @transform_17, window_bounds = array<i64: 32, 8>}, {pipeline_mode = #tpu.pipeline_mode<synchronous>, transform_indices = @transform_18, window_bounds = array<i64: 1, 8>}, {transform_indices = @transform_19, window_bounds = array<i64: 1, 8, 1>}, {transform_indices = @transform_20, window_bounds = array<i64: 1, 1, 8>}]} {
    %c0 = arith.constant 0 : index
    %c0_0 = arith.constant 0 : index
    %c0_1 = arith.constant 0 : index
    %0 = vector.load %arg1[%c0, %c0_0, %c0_1] : memref<1x64x128xbf16, #tpu.memory_space<vmem>>, vector<1x64x128xbf16>
    %1 = vector.shape_cast %0 : vector<1x64x128xbf16> to vector<64x128xbf16>
    %c0_2 = arith.constant 0 : index
    %c0_3 = arith.constant 0 : index
    %2 = vector.load %arg2[%c0_2, %c0_3] : memref<40x64xbf16, #tpu.memory_space<vmem>>, vector<40x64xbf16>
    %cst = arith.constant dense<0.000000e+00> : vector<40x128xf32>
    %3 = tpu.matmul %2, %1, %cst {dimension_numbers = #tpu.dot_dimension_numbers<[1], [0], [0], [1], [0, 0, 1, 1], [], []>} : vector<40x64xbf16>, vector<64x128xbf16>, vector<40x128xf32> -> vector<40x128xf32>
    %c0_4 = arith.constant 0 : index
    %c0_5 = arith.constant 0 : index
    %4 = vector.load %arg3[%c0_4, %c0_5] : memref<40x1xf32, #tpu.memory_space<vmem>>, vector<40x1xf32>
    %5 = vector.broadcast %4 : vector<40x1xf32> to vector<40x128xf32>
    %6 = arith.addf %3, %5 : vector<40x128xf32>
    %7 = vector.extract_strided_slice %6 {offsets = [0, 0], sizes = [8, 128], strides = [1, 1]} : vector<40x128xf32> to vector<8x128xf32>
    %8 = vector.extract_strided_slice %6 {offsets = [8, 0], sizes = [32, 128], strides = [1, 1]} : vector<40x128xf32> to vector<32x128xf32>
    %9 = tpu.iota {dimensions = array<i32: 1>} : vector<1x128xi32>
    %c64_i32 = arith.constant 64 : i32
    %10 = vector.broadcast %c64_i32 : i32 to vector<1x128xi32>
    %11 = arith.cmpi slt, %9, %10 : vector<1x128xi32>
    %cst_6 = arith.constant 0xFF800000 : f32
    %12 = vector.shape_cast %11 : vector<1x128xi1> to vector<1x128xi1>
    %13 = vector.broadcast %12 : vector<1x128xi1> to vector<8x128xi1>
    %14 = vector.broadcast %cst_6 : f32 to vector<8x128xf32>
    %15 = arith.select %13, %7, %14 : vector<8x128xi1>, vector<8x128xf32>
    %16 = arith.negf %7 : vector<8x128xf32>
    %17 = math.exp %16 : vector<8x128xf32>
    %cst_7 = arith.constant 1.000000e+00 : f32
    %18 = vector.broadcast %cst_7 : f32 to vector<8x128xf32>
    %19 = arith.addf %18, %17 : vector<8x128xf32>
    %20 = arith.divf %18, %19 : vector<8x128xf32>
    %cst_8 = arith.constant 0.000000e+00 : f32
    %21 = vector.shape_cast %11 : vector<1x128xi1> to vector<1x128xi1>
    %22 = vector.broadcast %21 : vector<1x128xi1> to vector<8x128xi1>
    %23 = vector.broadcast %cst_8 : f32 to vector<8x128xf32>
    %24 = arith.select %22, %20, %23 : vector<8x128xi1>, vector<8x128xf32>
    %cst_9 = arith.constant dense<0xFF800000> : vector<8xf32>
    %25 = vector.multi_reduction <maximumf>, %15, %cst_9 [1] : vector<8x128xf32> to vector<8xf32>
    %26 = vector.shape_cast %25 : vector<8xf32> to vector<8x1xf32>
    %27 = vector.shape_cast %26 : vector<8x1xf32> to vector<1x8x1xf32>
    %c0_10 = arith.constant 0 : index
    %c0_11 = arith.constant 0 : index
    %c0_12 = arith.constant 0 : index
    %28 = vector.load %arg20[%c0_10, %c0_11, %c0_12] : memref<1x8x1xf32, #tpu.memory_space<vmem>>, vector<1x8x1xf32>
    tpu.vector_store %arg20[%c0_10, %c0_11, %c0_12], %27 {strides = array<i32>} : memref<1x8x1xf32, #tpu.memory_space<vmem>>, vector<1x8x1xf32>,
    %29 = arith.truncf %8 : vector<32x128xf32> to vector<32x128xbf16>
    %30 = arith.truncf %24 : vector<8x128xf32> to vector<8x128xbf16>
    %cst_13 = arith.constant dense<0.000000e+00> : vector<32x8xf32>
    %31 = tpu.matmul %29, %30, %cst_13 {dimension_numbers = #tpu.dot_dimension_numbers<[1], [1], [0], [0], [0, 0, 1, 0], [], []>} : vector<32x128xbf16>, vector<8x128xbf16>, vector<32x8xf32> -> vector<32x8xf32>
    %c0_14 = arith.constant 0 : index
    %c0_15 = arith.constant 0 : index
    %32 = vector.load %arg4[%c0_14, %c0_15] : memref<8x8xbf16, #tpu.memory_space<vmem>>, vector<8x8xbf16>
    %33 = arith.truncf %31 : vector<32x8xf32> to vector<32x8xbf16>
    %cst_16 = arith.constant dense<0.000000e+00> : vector<32x8xf32>
    %34 = tpu.matmul %33, %32, %cst_16 {dimension_numbers = #tpu.dot_dimension_numbers<[1], [0], [0], [1], [0, 0, 1, 1], [], []>} : vector<32x8xbf16>, vector<8x8xbf16>, vector<32x8xf32> -> vector<32x8xf32>
    %cst_17 = arith.constant 0.000000e+00 : f32
    %35 = vector.broadcast %cst_17 : f32 to vector<32x8xf32>
    %36 = arith.cmpf oge, %34, %35 : vector<32x8xf32>
    %cst_18 = arith.constant 2.000000e-01 : f32
    %37 = vector.broadcast %cst_18 : f32 to vector<32x8xf32>
    %38 = arith.mulf %37, %34 : vector<32x8xf32>
    %39 = arith.select %36, %34, %38 : vector<32x8xi1>, vector<32x8xf32>
    %c0_19 = arith.constant 0 : index
    %c0_20 = arith.constant 0 : index
    %40 = vector.load %arg5[%c0_19, %c0_20] : memref<32x32xbf16, #tpu.memory_space<vmem>>, vector<32x32xbf16>
    %41 = arith.truncf %39 : vector<32x8xf32> to vector<32x8xbf16>
    %cst_21 = arith.constant dense<0.000000e+00> : vector<32x8xf32>
    %42 = tpu.matmul %40, %41, %cst_21 {dimension_numbers = #tpu.dot_dimension_numbers<[1], [0], [0], [1], [0, 0, 1, 1], [], []>} : vector<32x32xbf16>, vector<32x8xbf16>, vector<32x8xf32> -> vector<32x8xf32>
    %c0_22 = arith.constant 0 : index
    %c0_23 = arith.constant 0 : index
    %43 = vector.load %arg6[%c0_22, %c0_23] : memref<32x1xf32, #tpu.memory_space<vmem>>, vector<32x1xf32>
    %44 = vector.broadcast %43 : vector<32x1xf32> to vector<32x8xf32>
    %45 = arith.addf %42, %44 : vector<32x8xf32>
    %cst_24 = arith.constant 0.000000e+00 : f32
    %46 = vector.broadcast %cst_24 : f32 to vector<32x8xf32>
    %47 = arith.cmpf oge, %45, %46 : vector<32x8xf32>
    %cst_25 = arith.constant 2.000000e-01 : f32
    %48 = vector.broadcast %cst_25 : f32 to vector<32x8xf32>
    %49 = arith.mulf %48, %45 : vector<32x8xf32>
    %50 = arith.select %47, %45, %49 : vector<32x8xi1>, vector<32x8xf32>
    %51 = arith.addf %31, %50 : vector<32x8xf32>
    %c0_26 = arith.constant 0 : index
    %c0_27 = arith.constant 0 : index
    %52 = vector.load %arg7[%c0_26, %c0_27] : memref<32x32xbf16, #tpu.memory_space<vmem>>, vector<32x32xbf16>
    %53 = arith.truncf %51 : vector<32x8xf32> to vector<32x8xbf16>
    %cst_28 = arith.constant dense<0.000000e+00> : vector<32x8xf32>
    %54 = tpu.matmul %52, %53, %cst_28 {dimension_numbers = #tpu.dot_dimension_numbers<[1], [0], [0], [1], [0, 0, 1, 1], [], []>} : vector<32x32xbf16>, vector<32x8xbf16>, vector<32x8xf32> -> vector<32x8xf32>
    %cst_29 = arith.constant dense<0.000000e+00> : vector<32xf32>
    %55 = vector.multi_reduction <add>, %54, %cst_29 [1] : vector<32x8xf32> to vector<32xf32>
    %56 = vector.shape_cast %55 : vector<32xf32> to vector<32x1xf32>
    %cst_30 = arith.constant 8.000000e+00 : f32
    %57 = vector.broadcast %cst_30 : f32 to vector<32x1xf32>
    %58 = arith.divf %56, %57 : vector<32x1xf32>
    %c0_31 = arith.constant 0 : index
    %c0_32 = arith.constant 0 : index
    %59 = vector.load %arg8[%c0_31, %c0_32] : memref<32x1xf32, #tpu.memory_space<vmem>>, vector<32x1xf32>
    %60 = arith.addf %58, %59 : vector<32x1xf32>
    %c0_33 = arith.constant 0 : index
    %c0_34 = arith.constant 0 : index
    %61 = vector.load %arg11[%c0_33, %c0_34] : memref<32x1xf32, #tpu.memory_space<vmem>>, vector<32x1xf32>
    %62 = arith.subf %60, %61 : vector<32x1xf32>
    %c0_35 = arith.constant 0 : index
    %c0_36 = arith.constant 0 : index
    %63 = vector.load %arg12[%c0_35, %c0_36] : memref<32x1xf32, #tpu.memory_space<vmem>>, vector<32x1xf32>
    %cst_37 = arith.constant 9.99999974E-6 : f32
    %64 = vector.broadcast %cst_37 : f32 to vector<32x1xf32>
    %65 = arith.addf %63, %64 : vector<32x1xf32>
    %66 = math.rsqrt %65 : vector<32x1xf32>
    %67 = arith.mulf %62, %66 : vector<32x1xf32>
    %c0_38 = arith.constant 0 : index
    %c0_39 = arith.constant 0 : index
    %68 = vector.load %arg9[%c0_38, %c0_39] : memref<32x1xf32, #tpu.memory_space<vmem>>, vector<32x1xf32>
    %69 = arith.mulf %67, %68 : vector<32x1xf32>
    %c0_40 = arith.constant 0 : index
    %c0_41 = arith.constant 0 : index
    %70 = vector.load %arg10[%c0_40, %c0_41] : memref<32x1xf32, #tpu.memory_space<vmem>>, vector<32x1xf32>
    %71 = arith.addf %69, %70 : vector<32x1xf32>
    %cst_42 = arith.constant 0.000000e+00 : f32
    %72 = vector.broadcast %cst_42 : f32 to vector<32x1xf32>
    %73 = arith.cmpf oge, %71, %72 : vector<32x1xf32>
    %cst_43 = arith.constant 2.000000e-01 : f32
    %74 = vector.broadcast %cst_43 : f32 to vector<32x1xf32>
    %75 = arith.mulf %74, %71 : vector<32x1xf32>
    %76 = arith.select %73, %71, %75 : vector<32x1xi1>, vector<32x1xf32>
    %c0_44 = arith.constant 0 : index
    %c0_45 = arith.constant 0 : index
    %77 = vector.load %arg13[%c0_44, %c0_45] : memref<8x32xbf16, #tpu.memory_space<vmem>>, vector<8x32xbf16>
    %78 = arith.truncf %76 : vector<32x1xf32> to vector<32x1xbf16>
    %cst_46 = arith.constant dense<0.000000e+00> : vector<8x1xf32>
    %79 = tpu.matmul %77, %78, %cst_46 {dimension_numbers = #tpu.dot_dimension_numbers<[1], [0], [0], [1], [0, 0, 1, 1], [], []>} : vector<8x32xbf16>, vector<32x1xbf16>, vector<8x1xf32> -> vector<8x1xf32>
    %c0_47 = arith.constant 0 : index
    %c0_48 = arith.constant 0 : index
    %80 = vector.load %arg14[%c0_47, %c0_48] : memref<8x32xbf16, #tpu.memory_space<vmem>>, vector<8x32xbf16>
    %81 = arith.truncf %51 : vector<32x8xf32> to vector<32x8xbf16>
    %cst_49 = arith.constant dense<0.000000e+00> : vector<8x8xf32>
    %82 = tpu.matmul %80, %81, %cst_49 {dimension_numbers = #tpu.dot_dimension_numbers<[1], [0], [0], [1], [0, 0, 1, 1], [], []>} : vector<8x32xbf16>, vector<32x8xbf16>, vector<8x8xf32> -> vector<8x8xf32>
    %83 = vector.broadcast %79 : vector<8x1xf32> to vector<8x8xf32>
    %84 = arith.addf %83, %82 : vector<8x8xf32>
    %c0_50 = arith.constant 0 : index
    %c0_51 = arith.constant 0 : index
    %85 = vector.load %arg15[%c0_50, %c0_51] : memref<8x1xf32, #tpu.memory_space<vmem>>, vector<8x1xf32>
    %86 = vector.broadcast %85 : vector<8x1xf32> to vector<8x8xf32>
    %87 = arith.addf %84, %86 : vector<8x8xf32>
    %88 = arith.negf %87 : vector<8x8xf32>
    %89 = math.exp %88 : vector<8x8xf32>
    %cst_52 = arith.constant 1.000000e+00 : f32
    %90 = vector.broadcast %cst_52 : f32 to vector<8x8xf32>
    %91 = arith.addf %90, %89 : vector<8x8xf32>
    %92 = arith.divf %90, %91 : vector<8x8xf32>
    %93 = arith.truncf %51 : vector<32x8xf32> to vector<32x8xbf16>
    %94 = arith.truncf %92 : vector<8x8xf32> to vector<8x8xbf16>
    %cst_53 = arith.constant dense<0.000000e+00> : vector<32x8xf32>
    %95 = tpu.matmul %93, %94, %cst_53 {dimension_numbers = #tpu.dot_dimension_numbers<[1], [0], [0], [1], [0, 0, 1, 1], [], []>} : vector<32x8xbf16>, vector<8x8xbf16>, vector<32x8xf32> -> vector<32x8xf32>
    %cst_54 = arith.constant 0.000000e+00 : f32
    %96 = vector.broadcast %cst_54 : f32 to vector<32x8xf32>
    %97 = arith.cmpf oge, %95, %96 : vector<32x8xf32>
    %cst_55 = arith.constant 2.000000e-01 : f32
    %98 = vector.broadcast %cst_55 : f32 to vector<32x8xf32>
    %99 = arith.mulf %98, %95 : vector<32x8xf32>
    %100 = arith.select %97, %95, %99 : vector<32x8xi1>, vector<32x8xf32>
    %c0_56 = arith.constant 0 : index
    %c0_57 = arith.constant 0 : index
    %101 = vector.load %arg16[%c0_56, %c0_57] : memref<32x32xbf16, #tpu.memory_space<vmem>>, vector<32x32xbf16>
    %102 = arith.truncf %100 : vector<32x8xf32> to vector<32x8xbf16>
    %cst_58 = arith.constant dense<0.000000e+00> : vector<32x8xf32>
    %103 = tpu.matmul %101, %102, %cst_58 {dimension_numbers = #tpu.dot_dimension_numbers<[1], [0], [0], [1], [0, 0, 1, 1], [], []>} : vector<32x32xbf16>, vector<32x8xbf16>, vector<32x8xf32> -> vector<32x8xf32>
    %c0_59 = arith.constant 0 : index
    %c0_60 = arith.constant 0 : index
    %104 = vector.load %arg17[%c0_59, %c0_60] : memref<32x1xf32, #tpu.memory_space<vmem>>, vector<32x1xf32>
    %105 = vector.broadcast %104 : vector<32x1xf32> to vector<32x8xf32>
    %106 = arith.addf %103, %105 : vector<32x8xf32>
    %cst_61 = arith.constant 0.000000e+00 : f32
    %107 = vector.broadcast %cst_61 : f32 to vector<32x8xf32>
    %108 = arith.cmpf oge, %106, %107 : vector<32x8xf32>
    %cst_62 = arith.constant 2.000000e-01 : f32
    %109 = vector.broadcast %cst_62 : f32 to vector<32x8xf32>
    %110 = arith.mulf %109, %106 : vector<32x8xf32>
    %111 = arith.select %108, %106, %110 : vector<32x8xi1>, vector<32x8xf32>
    %112 = arith.addf %31, %111 : vector<32x8xf32>
    %c0_63 = arith.constant 0 : index
    %c0_64 = arith.constant 0 : index
    %113 = vector.load %arg18[%c0_63, %c0_64] : memref<32x8xf32, #tpu.memory_space<vmem>>, vector<32x8xf32>
    %114 = arith.mulf %113, %112 : vector<32x8xf32>
    %cst_65 = arith.constant dense<0.000000e+00> : vector<8xf32>
    %115 = vector.multi_reduction <add>, %114, %cst_65 [0] : vector<32x8xf32> to vector<8xf32>
    %116 = vector.shape_cast %115 : vector<8xf32> to vector<1x8xf32>
    %c0_66 = arith.constant 0 : index
    %c0_67 = arith.constant 0 : index
    %117 = vector.load %arg19[%c0_66, %c0_67] : memref<1x8xf32, #tpu.memory_space<vmem>>, vector<1x8xf32>
    %118 = arith.addf %116, %117 : vector<1x8xf32>
    %119 = vector.shape_cast %118 : vector<1x8xf32> to vector<1x1x8xf32>
    %c0_68 = arith.constant 0 : index
    %c0_69 = arith.constant 0 : index
    %c0_70 = arith.constant 0 : index
    %120 = vector.load %arg21[%c0_68, %c0_69, %c0_70] : memref<1x1x8xf32, #tpu.memory_space<vmem>>, vector<1x1x8xf32>
    tpu.vector_store %arg21[%c0_68, %c0_69, %c0_70], %119 {strides = array<i32>} : memref<1x1x8xf32, #tpu.memory_space<vmem>>, vector<1x1x8xf32>,
    return
  }
  func.func @transform_0(%arg0: i32) -> (i32, i32, i32) {
    %c0_i32 = arith.constant 0 : i32
    %c0_i32_0 = arith.constant 0 : i32
    %c0_i32_1 = arith.constant 0 : i32
    return %arg0, %c0_i32, %c0_i32_0 : i32, i32, i32
  }
  func.func @transform_1(%arg0: i32) -> (i32, i32) {
    %c0_i32 = arith.constant 0 : i32
    %c0_i32_0 = arith.constant 0 : i32
    %c0_i32_1 = arith.constant 0 : i32
    return %c0_i32, %c0_i32_0 : i32, i32
  }
  func.func @transform_2(%arg0: i32) -> (i32, i32) {
    %c0_i32 = arith.constant 0 : i32
    %c0_i32_0 = arith.constant 0 : i32
    %c0_i32_1 = arith.constant 0 : i32
    return %c0_i32, %c0_i32_0 : i32, i32
  }
  func.func @transform_3(%arg0: i32) -> (i32, i32) {
    %c0_i32 = arith.constant 0 : i32
    %c0_i32_0 = arith.constant 0 : i32
    %c0_i32_1 = arith.constant 0 : i32
    return %c0_i32, %c0_i32_0 : i32, i32
  }
  func.func @transform_4(%arg0: i32) -> (i32, i32) {
    %c0_i32 = arith.constant 0 : i32
    %c0_i32_0 = arith.constant 0 : i32
    %c0_i32_1 = arith.constant 0 : i32
    return %c0_i32, %c0_i32_0 : i32, i32
  }
  func.func @transform_5(%arg0: i32) -> (i32, i32) {
    %c0_i32 = arith.constant 0 : i32
    %c0_i32_0 = arith.constant 0 : i32
    %c0_i32_1 = arith.constant 0 : i32
    return %c0_i32, %c0_i32_0 : i32, i32
  }
  func.func @transform_6(%arg0: i32) -> (i32, i32) {
    %c0_i32 = arith.constant 0 : i32
    %c0_i32_0 = arith.constant 0 : i32
    %c0_i32_1 = arith.constant 0 : i32
    return %c0_i32, %c0_i32_0 : i32, i32
  }
  func.func @transform_7(%arg0: i32) -> (i32, i32) {
    %c0_i32 = arith.constant 0 : i32
    %c0_i32_0 = arith.constant 0 : i32
    %c0_i32_1 = arith.constant 0 : i32
    return %c0_i32, %c0_i32_0 : i32, i32
  }
  func.func @transform_8(%arg0: i32) -> (i32, i32) {
    %c0_i32 = arith.constant 0 : i32
    %c0_i32_0 = arith.constant 0 : i32
    %c0_i32_1 = arith.constant 0 : i32
    return %c0_i32, %c0_i32_0 : i32, i32
  }
  func.func @transform_9(%arg0: i32) -> (i32, i32) {
    %c0_i32 = arith.constant 0 : i32
    %c0_i32_0 = arith.constant 0 : i32
    %c0_i32_1 = arith.constant 0 : i32
    return %c0_i32, %c0_i32_0 : i32, i32
  }
  func.func @transform_10(%arg0: i32) -> (i32, i32) {
    %c0_i32 = arith.constant 0 : i32
    %c0_i32_0 = arith.constant 0 : i32
    %c0_i32_1 = arith.constant 0 : i32
    return %c0_i32, %c0_i32_0 : i32, i32
  }
  func.func @transform_11(%arg0: i32) -> (i32, i32) {
    %c0_i32 = arith.constant 0 : i32
    %c0_i32_0 = arith.constant 0 : i32
    %c0_i32_1 = arith.constant 0 : i32
    return %c0_i32, %c0_i32_0 : i32, i32
  }
  func.func @transform_12(%arg0: i32) -> (i32, i32) {
    %c0_i32 = arith.constant 0 : i32
    %c0_i32_0 = arith.constant 0 : i32
    %c0_i32_1 = arith.constant 0 : i32
    return %c0_i32, %c0_i32_0 : i32, i32
  }
  func.func @transform_13(%arg0: i32) -> (i32, i32) {
    %c0_i32 = arith.constant 0 : i32
    %c0_i32_0 = arith.constant 0 : i32
    %c0_i32_1 = arith.constant 0 : i32
    return %c0_i32, %c0_i32_0 : i32, i32
  }
  func.func @transform_14(%arg0: i32) -> (i32, i32) {
    %c0_i32 = arith.constant 0 : i32
    %c0_i32_0 = arith.constant 0 : i32
    %c0_i32_1 = arith.constant 0 : i32
    return %c0_i32, %c0_i32_0 : i32, i32
  }
  func.func @transform_15(%arg0: i32) -> (i32, i32) {
    %c0_i32 = arith.constant 0 : i32
    %c0_i32_0 = arith.constant 0 : i32
    %c0_i32_1 = arith.constant 0 : i32
    return %c0_i32, %c0_i32_0 : i32, i32
  }
  func.func @transform_16(%arg0: i32) -> (i32, i32) {
    %c0_i32 = arith.constant 0 : i32
    %c0_i32_0 = arith.constant 0 : i32
    %c0_i32_1 = arith.constant 0 : i32
    return %c0_i32, %c0_i32_0 : i32, i32
  }
  func.func @transform_17(%arg0: i32) -> (i32, i32) {
    %c0_i32 = arith.constant 0 : i32
    %c0_i32_0 = arith.constant 0 : i32
    %c0_i32_1 = arith.constant 0 : i32
    return %c0_i32, %c0_i32_0 : i32, i32
  }
  func.func @transform_18(%arg0: i32) -> (i32, i32) {
    %c0_i32 = arith.constant 0 : i32
    %c0_i32_0 = arith.constant 0 : i32
    %c0_i32_1 = arith.constant 0 : i32
    return %c0_i32, %c0_i32_0 : i32, i32
  }
  func.func @transform_19(%arg0: i32) -> (i32, i32, i32) {
    %c0_i32 = arith.constant 0 : i32
    %c0_i32_0 = arith.constant 0 : i32
    %c0_i32_1 = arith.constant 0 : i32
    return %arg0, %c0_i32, %c0_i32_0 : i32, i32, i32
  }
  func.func @transform_20(%arg0: i32) -> (i32, i32, i32) {
    %c0_i32 = arith.constant 0 : i32
    %c0_i32_0 = arith.constant 0 : i32
    %c0_i32_1 = arith.constant 0 : i32
    return %arg0, %c0_i32, %c0_i32_0 : i32, i32, i32
  }
}

</mosaic_0001>

<llo_original>
// kernel: tpu_custom_call.1
$region0: #{tpu_custom_call.1}
  #allocation0 [shape = 'u32[]', space=smem, size = 0x4, offset = 0x4, fixed_abs, tag = 'smem constant byte address 0x4 - core index']
  #allocation1 [shape = 'u32[144,128]{1,0:T(1,128)}', space=vmem, size = 0x12000, scoped, tag = 'internal scratch']
  %s0 = inlined_call_operand.vmem [shape: bf16[2,64,128], index: 0, kind: input, shape index: {}]
  %s1 = inlined_call_operand.vmem [shape: bf16[40,64], index: 1, kind: input, shape index: {}]
  %s2 = inlined_call_operand.vmem [shape: f32[40,1], index: 2, kind: input, shape index: {}]
  %s3 = inlined_call_operand.vmem [shape: bf16[8,8], index: 3, kind: input, shape index: {}]
  %s4 = inlined_call_operand.vmem [shape: bf16[32,32], index: 4, kind: input, shape index: {}]
  %s5 = inlined_call_operand.vmem [shape: f32[32,1], index: 5, kind: input, shape index: {}]
  %s6 = inlined_call_operand.vmem [shape: bf16[32,32], index: 6, kind: input, shape index: {}]
  %s7 = inlined_call_operand.vmem [shape: f32[32,1], index: 7, kind: input, shape index: {}]
  %s8 = inlined_call_operand.vmem [shape: f32[32,1], index: 8, kind: input, shape index: {}]
  %s9 = inlined_call_operand.vmem [shape: f32[32,1], index: 9, kind: input, shape index: {}]
  %s10 = inlined_call_operand.vmem [shape: f32[32,1], index: 10, kind: input, shape index: {}]
  %s11 = inlined_call_operand.vmem [shape: f32[32,1], index: 11, kind: input, shape index: {}]
  %s12 = inlined_call_operand.vmem [shape: bf16[8,32], index: 12, kind: input, shape index: {}]
  %s13 = inlined_call_operand.vmem [shape: bf16[8,32], index: 13, kind: input, shape index: {}]
  %s14 = inlined_call_operand.vmem [shape: f32[8,1], index: 14, kind: input, shape index: {}]
  %s15 = inlined_call_operand.vmem [shape: bf16[32,32], index: 15, kind: input, shape index: {}]
  %s16 = inlined_call_operand.vmem [shape: f32[32,1], index: 16, kind: input, shape index: {}]
  %s17 = inlined_call_operand.vmem [shape: f32[32,8], index: 17, kind: input, shape index: {}]
  %s18 = inlined_call_operand.vmem [shape: f32[1,8], index: 18, kind: input, shape index: {}]
  %s19 = inlined_call_operand.vmem [shape: f32[2,8,1], index: 19, kind: output, shape index: {0}]
  %s20 = inlined_call_operand.hbm [shape: f32[2,1,8], index: 20, kind: output, shape index: {1}]
  %21 = xla_tuple %s19, %s20
  %s22 = sld [smem:[#allocation0]]
  $region117: #{tpu_custom_call.1} parent=0
    _
  %s24 = ssub.s32 1, %s22
  %s25 = scalar_select 0, %s24, %s22
  $region1: #{tpu_custom_call.1} parent=0
    #allocation2 [shape = 'u8[1024]{0}', space=vmem, size = 0x400, scoped, tag = 'output window, operand 1']
    #allocation3 [shape = 's32[2]{0}', space=sflag, size = 0x8, scoped, tag = 'scoped memory for tpu_custom_call.1']
    %26 = vsyncpa [#allocation3], 0
    %s27 = scalar_lea.sflag [#allocation3], 1
    %28 = vsyncpa %s27, 0
    loop: start=0, step=1, limit=4
    $region2: #{tpu_custom_call.1} parent=1 // loop_pre_header
      _
    $region3: #{tpu_custom_call.1} parent=1 // loop_header
      %s30 = sphi 0, %s34
      %p31 = scmp.ge.s32.totalorder %s30, 4
      %s40 = sphi 0, %s42
      %s43 = sphi 0, %s40
      %s44 = sphi 0, %s43
      %s60 = sphi 0, %s44
      %s64 = sphi 0, %s64
      %s66 = sphi 0, %s64
      %s67 = sphi 0, %s66
      %s81 = sphi 0, %s67
      %s85 = sphi 0, %s85
      %s87 = sphi 0, %s85
      %s88 = sphi 0, %s87
      %s102 = sphi 0, %s88
      %s106 = sphi 0, %s106
      %s108 = sphi 0, %s106
      %s109 = sphi 0, %s108
      %s123 = sphi 0, %s109
      %s127 = sphi 0, %s127
      %s129 = sphi 0, %s127
      %s130 = sphi 0, %s129
      %s144 = sphi 0, %s130
      %s148 = sphi 0, %s148
      %s150 = sphi 0, %s148
      %s151 = sphi 0, %s150
      %s165 = sphi 0, %s151
      %s169 = sphi 0, %s169
      %s171 = sphi 0, %s169
      %s172 = sphi 0, %s171
      %s186 = sphi 0, %s172
      %s190 = sphi 0, %s190
      %s192 = sphi 0, %s190
      %s193 = sphi 0, %s192
      %s207 = sphi 0, %s193
      %s211 = sphi 0, %s211
      %s213 = sphi 0, %s211
      %s214 = sphi 0, %s213
      %s228 = sphi 0, %s214
      %s232 = sphi 0, %s232
      %s234 = sphi 0, %s232
      %s235 = sphi 0, %s234
      %s249 = sphi 0, %s235
      %s253 = sphi 0, %s253
      %s255 = sphi 0, %s253
      %s256 = sphi 0, %s255
      %s270 = sphi 0, %s256
      %s274 = sphi 0, %s274
      %s276 = sphi 0, %s274
      %s277 = sphi 0, %s276
      %s291 = sphi 0, %s277
      %s295 = sphi 0, %s295
      %s297 = sphi 0, %s295
      %s298 = sphi 0, %s297
      %s312 = sphi 0, %s298
      %s316 = sphi 0, %s316
      %s318 = sphi 0, %s316
      %s319 = sphi 0, %s318
      %s333 = sphi 0, %s319
      %s337 = sphi 0, %s337
      %s339 = sphi 0, %s337
      %s340 = sphi 0, %s339
      %s354 = sphi 0, %s340
      %s358 = sphi 0, %s358
      %s360 = sphi 0, %s358
      %s361 = sphi 0, %s360
      %s375 = sphi 0, %s361
      %s379 = sphi 0, %s379
      %s381 = sphi 0, %s379
      %s382 = sphi 0, %s381
      %s396 = sphi 0, %s382
      %s400 = sphi 0, %s400
      %s402 = sphi 0, %s400
      %s403 = sphi 0, %s402
      %s417 = sphi 0, %s403
      %s421 = sphi 0, %s421
      %s423 = sphi 0, %s421
      %s424 = sphi 0, %s423
      %s438 = sphi 0, %s424
      %s444 = sphi 0, %s446
      %s447 = sphi 0, %s444
      %s448 = sphi 0, %s447
      %s464 = sphi 0, %s448
      %s470 = sphi 0, %s472
      %s473 = sphi 0, %s470
      %s474 = sphi 0, %s473
      %s490 = sphi 0, %s474
    $region4: #{tpu_custom_call.1} parent=1 // loop_header_branch
      %33 = sbr.rel (%p31) target = $region8
    $region5: #{tpu_custom_call.1} parent=1 // loop_body
      %s35 = ssub.s32 %s30, 1
      %s36 = ssub.s32 %s30, 2
      %s37 = sadd.s32 %s30, 1
      %s38 = ssub.s32 %s30, %s37
      %p39 = scmp.eq.s32.totalorder %s38, 0
      %s41 = sadd.s32 %s40, 1
      %s42 = scalar_select %p39, %s40, %s41
      %p45 = pneg %p39
      %p46 = scmp.eq.s32.totalorder %s30, 1
      %p47 = por %p45, %p46
      %p48 = scmp.ne.s32.totalorder %s40, %s43
      %p49 = scmp.eq.s32.totalorder %s30, 0
      %p50 = por %p48, %p49
      %p51 = scmp.ne.s32.totalorder %s40, %s43
      %p52 = scmp.eq.s32.totalorder %s35, 1
      %p53 = por %p51, %p52
      %p54 = scmp.ne.s32.totalorder %s43, %s44
      %p55 = scmp.eq.s32.totalorder %s35, 0
      %p56 = por %p54, %p55
      %p57 = scmp.ne.s32.totalorder %s43, %s44
      %p58 = scmp.eq.s32.totalorder %s36, 1
      %p59 = por %p57, %p58
      %p61 = scmp.ne.s32.totalorder %s44, %s60
      %p62 = scmp.eq.s32.totalorder %s36, 0
      %p63 = por %p61, %p62
      %s65 = sadd.s32 %s64, 1
      %p68 = scmp.eq.s32.totalorder %s30, 1
      %p69 = scmp.ne.s32.totalorder %s64, %s66
      %p70 = scmp.eq.s32.totalorder %s30, 0
      %p71 = por %p69, %p70
      %p72 = scmp.ne.s32.totalorder %s64, %s66
      %p73 = scmp.eq.s32.totalorder %s35, 1
      %p74 = por %p72, %p73
      %p75 = scmp.ne.s32.totalorder %s66, %s67
      %p76 = scmp.eq.s32.totalorder %s35, 0
      %p77 = por %p75, %p76
      %p78 = scmp.ne.s32.totalorder %s66, %s67
      %p79 = scmp.eq.s32.totalorder %s36, 1
      %p80 = por %p78, %p79
      %p82 = scmp.ne.s32.totalorder %s67, %s81
      %p83 = scmp.eq.s32.totalorder %s36, 0
      %p84 = por %p82, %p83
      %s86 = sadd.s32 %s85, 1
      %p89 = scmp.eq.s32.totalorder %s30, 1
      %p90 = scmp.ne.s32.totalorder %s85, %s87
      %p91 = scmp.eq.s32.totalorder %s30, 0
      %p92 = por %p90, %p91
      %p93 = scmp.ne.s32.totalorder %s85, %s87
      %p94 = scmp.eq.s32.totalorder %s35, 1
      %p95 = por %p93, %p94
      %p96 = scmp.ne.s32.totalorder %s87, %s88
      %p97 = scmp.eq.s32.totalorder %s35, 0
      %p98 = por %p96, %p97
      %p99 = scmp.ne.s32.totalorder %s87, %s88
      %p100 = scmp.eq.s32.totalorder %s36, 1
      %p101 = por %p99, %p100
      %p103 = scmp.ne.s32.totalorder %s88, %s102
      %p104 = scmp.eq.s32.totalorder %s36, 0
      %p105 = por %p103, %p104
      %s107 = sadd.s32 %s106, 1
      %p110 = scmp.eq.s32.totalorder %s30, 1
      %p111 = scmp.ne.s32.totalorder %s106, %s108
      %p112 = scmp.eq.s32.totalorder %s30, 0
      %p113 = por %p111, %p112
      %p114 = scmp.ne.s32.totalorder %s106, %s108
      %p115 = scmp.eq.s32.totalorder %s35, 1
      %p116 = por %p114, %p115
      %p117 = scmp.ne.s32.totalorder %s108, %s109
      %p118 = scmp.eq.s32.totalorder %s35, 0
      %p119 = por %p117, %p118
      %p120 = scmp.ne.s32.totalorder %s108, %s109
      %p121 = scmp.eq.s32.totalorder %s36, 1
      %p122 = por %p120, %p121
      %p124 = scmp.ne.s32.totalorder %s109, %s123
      %p125 = scmp.eq.s32.totalorder %s36, 0
      %p126 = por %p124, %p125
      %s128 = sadd.s32 %s127, 1
      %p131 = scmp.eq.s32.totalorder %s30, 1
      %p132 = scmp.ne.s32.totalorder %s127, %s129
      %p133 = scmp.eq.s32.totalorder %s30, 0
      %p134 = por %p132, %p133
      %p135 = scmp.ne.s32.totalorder %s127, %s129
      %p136 = scmp.eq.s32.totalorder %s35, 1
      %p137 = por %p135, %p136
      %p138 = scmp.ne.s32.totalorder %s129, %s130
      %p139 = scmp.eq.s32.totalorder %s35, 0
      %p140 = por %p138, %p139
      %p141 = scmp.ne.s32.totalorder %s129, %s130
      %p142 = scmp.eq.s32.totalorder %s36, 1
      %p143 = por %p141, %p142
      %p145 = scmp.ne.s32.totalorder %s130, %s144
      %p146 = scmp.eq.s32.totalorder %s36, 0
      %p147 = por %p145, %p146
      %s149 = sadd.s32 %s148, 1
      %p152 = scmp.eq.s32.totalorder %s30, 1
      %p153 = scmp.ne.s32.totalorder %s148, %s150
      %p154 = scmp.eq.s32.totalorder %s30, 0
      %p155 = por %p153, %p154
      %p156 = scmp.ne.s32.totalorder %s148, %s150
      %p157 = scmp.eq.s32.totalorder %s35, 1
      %p158 = por %p156, %p157
      %p159 = scmp.ne.s32.totalorder %s150, %s151
      %p160 = scmp.eq.s32.totalorder %s35, 0
      %p161 = por %p159, %p160
      %p162 = scmp.ne.s32.totalorder %s150, %s151
      %p163 = scmp.eq.s32.totalorder %s36, 1
      %p164 = por %p162, %p163
      %p166 = scmp.ne.s32.totalorder %s151, %s165
      %p167 = scmp.eq.s32.totalorder %s36, 0
      %p168 = por %p166, %p167
      %s170 = sadd.s32 %s169, 1
      %p173 = scmp.eq.s32.totalorder %s30, 1
      %p174 = scmp.ne.s32.totalorder %s169, %s171
      %p175 = scmp.eq.s32.totalorder %s30, 0
      %p176 = por %p174, %p175
      %p177 = scmp.ne.s32.totalorder %s169, %s171
      %p178 = scmp.eq.s32.totalorder %s35, 1
      %p179 = por %p177, %p178
      %p180 = scmp.ne.s32.totalorder %s171, %s172
      %p181 = scmp.eq.s32.totalorder %s35, 0
      %p182 = por %p180, %p181
      %p183 = scmp.ne.s32.totalorder %s171, %s172
      %p184 = scmp.eq.s32.totalorder %s36, 1
      %p185 = por %p183, %p184
      %p187 = scmp.ne.s32.totalorder %s172, %s186
      %p188 = scmp.eq.s32.totalorder %s36, 0
      %p189 = por %p187, %p188
      %s191 = sadd.s32 %s190, 1
      %p194 = scmp.eq.s32.totalorder %s30, 1
      %p195 = scmp.ne.s32.totalorder %s190, %s192
      %p196 = scmp.eq.s32.totalorder %s30, 0
      %p197 = por %p195, %p196
      %p198 = scmp.ne.s32.totalorder %s190, %s192
      %p199 = scmp.eq.s32.totalorder %s35, 1
      %p200 = por %p198, %p199
      %p201 = scmp.ne.s32.totalorder %s192, %s193
      %p202 = scmp.eq.s32.totalorder %s35, 0
      %p203 = por %p201, %p202
      %p204 = scmp.ne.s32.totalorder %s192, %s193
      %p205 = scmp.eq.s32.totalorder %s36, 1
      %p206 = por %p204, %p205
      %p208 = scmp.ne.s32.totalorder %s193, %s207
      %p209 = scmp.eq.s32.totalorder %s36, 0
      %p210 = por %p208, %p209
      %s212 = sadd.s32 %s211, 1
      %p215 = scmp.eq.s32.totalorder %s30, 1
      %p216 = scmp.ne.s32.totalorder %s211, %s213
      %p217 = scmp.eq.s32.totalorder %s30, 0
      %p218 = por %p216, %p217
      %p219 = scmp.ne.s32.totalorder %s211, %s213
      %p220 = scmp.eq.s32.totalorder %s35, 1
      %p221 = por %p219, %p220
      %p222 = scmp.ne.s32.totalorder %s213, %s214
      %p223 = scmp.eq.s32.totalorder %s35, 0
      %p224 = por %p222, %p223
      %p225 = scmp.ne.s32.totalorder %s213, %s214
      %p226 = scmp.eq.s32.totalorder %s36, 1
      %p227 = por %p225, %p226
      %p229 = scmp.ne.s32.totalorder %s214, %s228
      %p230 = scmp.eq.s32.totalorder %s36, 0
      %p231 = por %p229, %p230
      %s233 = sadd.s32 %s232, 1
      %p236 = scmp.eq.s32.totalorder %s30, 1
      %p237 = scmp.ne.s32.totalorder %s232, %s234
      %p238 = scmp.eq.s32.totalorder %s30, 0
      %p239 = por %p237, %p238
      %p240 = scmp.ne.s32.totalorder %s232, %s234
      %p241 = scmp.eq.s32.totalorder %s35, 1
      %p242 = por %p240, %p241
      %p243 = scmp.ne.s32.totalorder %s234, %s235
      %p244 = scmp.eq.s32.totalorder %s35, 0
      %p245 = por %p243, %p244
      %p246 = scmp.ne.s32.totalorder %s234, %s235
      %p247 = scmp.eq.s32.totalorder %s36, 1
      %p248 = por %p246, %p247
      %p250 = scmp.ne.s32.totalorder %s235, %s249
      %p251 = scmp.eq.s32.totalorder %s36, 0
      %p252 = por %p250, %p251
      %s254 = sadd.s32 %s253, 1
      %p257 = scmp.eq.s32.totalorder %s30, 1
      %p258 = scmp.ne.s32.totalorder %s253, %s255
      %p259 = scmp.eq.s32.totalorder %s30, 0
      %p260 = por %p258, %p259
      %p261 = scmp.ne.s32.totalorder %s253, %s255
      %p262 = scmp.eq.s32.totalorder %s35, 1
      %p263 = por %p261, %p262
      %p264 = scmp.ne.s32.totalorder %s255, %s256
      %p265 = scmp.eq.s32.totalorder %s35, 0
      %p266 = por %p264, %p265
      %p267 = scmp.ne.s32.totalorder %s255, %s256
      %p268 = scmp.eq.s32.totalorder %s36, 1
      %p269 = por %p267, %p268
      %p271 = scmp.ne.s32.totalorder %s256, %s270
      %p272 = scmp.eq.s32.totalorder %s36, 0
      %p273 = por %p271, %p272
      %s275 = sadd.s32 %s274, 1
      %p278 = scmp.eq.s32.totalorder %s30, 1
      %p279 = scmp.ne.s32.totalorder %s274, %s276
      %p280 = scmp.eq.s32.totalorder %s30, 0
      %p281 = por %p279, %p280
      %p282 = scmp.ne.s32.totalorder %s274, %s276
      %p283 = scmp.eq.s32.totalorder %s35, 1
      %p284 = por %p282, %p283
      %p285 = scmp.ne.s32.totalorder %s276, %s277
      %p286 = scmp.eq.s32.totalorder %s35, 0
      %p287 = por %p285, %p286
      %p288 = scmp.ne.s32.totalorder %s276, %s277
      %p289 = scmp.eq.s32.totalorder %s36, 1
      %p290 = por %p288, %p289
      %p292 = scmp.ne.s32.totalorder %s277, %s291
      %p293 = scmp.eq.s32.totalorder %s36, 0
      %p294 = por %p292, %p293
      %s296 = sadd.s32 %s295, 1
      %p299 = scmp.eq.s32.totalorder %s30, 1
      %p300 = scmp.ne.s32.totalorder %s295, %s297
      %p301 = scmp.eq.s32.totalorder %s30, 0
      %p302 = por %p300, %p301
      %p303 = scmp.ne.s32.totalorder %s295, %s297
      %p304 = scmp.eq.s32.totalorder %s35, 1
      %p305 = por %p303, %p304
      %p306 = scmp.ne.s32.totalorder %s297, %s298
      %p307 = scmp.eq.s32.totalorder %s35, 0
      %p308 = por %p306, %p307
      %p309 = scmp.ne.s32.totalorder %s297, %s298
      %p310 = scmp.eq.s32.totalorder %s36, 1
      %p311 = por %p309, %p310
      %p313 = scmp.ne.s32.totalorder %s298, %s312
      %p314 = scmp.eq.s32.totalorder %s36, 0
      %p315 = por %p313, %p314
      %s317 = sadd.s32 %s316, 1
      %p320 = scmp.eq.s32.totalorder %s30, 1
      %p321 = scmp.ne.s32.totalorder %s316, %s318
      %p322 = scmp.eq.s32.totalorder %s30, 0
      %p323 = por %p321, %p322
      %p324 = scmp.ne.s32.totalorder %s316, %s318
      %p325 = scmp.eq.s32.totalorder %s35, 1
      %p326 = por %p324, %p325
      %p327 = scmp.ne.s32.totalorder %s318, %s319
      %p328 = scmp.eq.s32.totalorder %s35, 0
      %p329 = por %p327, %p328
      %p330 = scmp.ne.s32.totalorder %s318, %s319
      %p331 = scmp.eq.s32.totalorder %s36, 1
      %p332 = por %p330, %p331
      %p334 = scmp.ne.s32.totalorder %s319, %s333
      %p335 = scmp.eq.s32.totalorder %s36, 0
      %p336 = por %p334, %p335
      %s338 = sadd.s32 %s337, 1
      %p341 = scmp.eq.s32.totalorder %s30, 1
      %p342 = scmp.ne.s32.totalorder %s337, %s339
      %p343 = scmp.eq.s32.totalorder %s30, 0
      %p344 = por %p342, %p343
      %p345 = scmp.ne.s32.totalorder %s337, %s339
      %p346 = scmp.eq.s32.totalorder %s35, 1
      %p347 = por %p345, %p346
      %p348 = scmp.ne.s32.totalorder %s339, %s340
      %p349 = scmp.eq.s32.totalorder %s35, 0
      %p350 = por %p348, %p349
      %p351 = scmp.ne.s32.totalorder %s339, %s340
      %p352 = scmp.eq.s32.totalorder %s36, 1
      %p353 = por %p351, %p352
      %p355 = scmp.ne.s32.totalorder %s340, %s354
      %p356 = scmp.eq.s32.totalorder %s36, 0
      %p357 = por %p355, %p356
      %s359 = sadd.s32 %s358, 1
      %p362 = scmp.eq.s32.totalorder %s30, 1
      %p363 = scmp.ne.s32.totalorder %s358, %s360
      %p364 = scmp.eq.s32.totalorder %s30, 0
      %p365 = por %p363, %p364
      %p366 = scmp.ne.s32.totalorder %s358, %s360
      %p367 = scmp.eq.s32.totalorder %s35, 1
      %p368 = por %p366, %p367
      %p369 = scmp.ne.s32.totalorder %s360, %s361
      %p370 = scmp.eq.s32.totalorder %s35, 0
      %p371 = por %p369, %p370
      %p372 = scmp.ne.s32.totalorder %s360, %s361
      %p373 = scmp.eq.s32.totalorder %s36, 1
      %p374 = por %p372, %p373
      %p376 = scmp.ne.s32.totalorder %s361, %s375
      %p377 = scmp.eq.s32.totalorder %s36, 0
      %p378 = por %p376, %p377
      %s380 = sadd.s32 %s379, 1
      %p383 = scmp.eq.s32.totalorder %s30, 1
      %p384 = scmp.ne.s32.totalorder %s379, %s381
      %p385 = scmp.eq.s32.totalorder %s30, 0
      %p386 = por %p384, %p385
      %p387 = scmp.ne.s32.totalorder %s379, %s381
      %p388 = scmp.eq.s32.totalorder %s35, 1
      %p389 = por %p387, %p388
      %p390 = scmp.ne.s32.totalorder %s381, %s382
      %p391 = scmp.eq.s32.totalorder %s35, 0
      %p392 = por %p390, %p391
      %p393 = scmp.ne.s32.totalorder %s381, %s382
      %p394 = scmp.eq.s32.totalorder %s36, 1
      %p395 = por %p393, %p394
      %p397 = scmp.ne.s32.totalorder %s382, %s396
      %p398 = scmp.eq.s32.totalorder %s36, 0
      %p399 = por %p397, %p398
      %s401 = sadd.s32 %s400, 1
      %p404 = scmp.eq.s32.totalorder %s30, 1
      %p405 = scmp.ne.s32.totalorder %s400, %s402
      %p406 = scmp.eq.s32.totalorder %s30, 0
      %p407 = por %p405, %p406
      %p408 = scmp.ne.s32.totalorder %s400, %s402
      %p409 = scmp.eq.s32.totalorder %s35, 1
      %p410 = por %p408, %p409
      %p411 = scmp.ne.s32.totalorder %s402, %s403
      %p412 = scmp.eq.s32.totalorder %s35, 0
      %p413 = por %p411, %p412
      %p414 = scmp.ne.s32.totalorder %s402, %s403
      %p415 = scmp.eq.s32.totalorder %s36, 1
      %p416 = por %p414, %p415
      %p418 = scmp.ne.s32.totalorder %s403, %s417
      %p419 = scmp.eq.s32.totalorder %s36, 0
      %p420 = por %p418, %p419
      %s422 = sadd.s32 %s421, 1
      %p425 = scmp.eq.s32.totalorder %s30, 1
      %p426 = scmp.ne.s32.totalorder %s421, %s423
      %p427 = scmp.eq.s32.totalorder %s30, 0
      %p428 = por %p426, %p427
      %p429 = scmp.ne.s32.totalorder %s421, %s423
      %p430 = scmp.eq.s32.totalorder %s35, 1
      %p431 = por %p429, %p430
      %p432 = scmp.ne.s32.totalorder %s423, %s424
      %p433 = scmp.eq.s32.totalorder %s35, 0
      %p434 = por %p432, %p433
      %p435 = scmp.ne.s32.totalorder %s423, %s424
      %p436 = scmp.eq.s32.totalorder %s36, 1
      %p437 = por %p435, %p436
      %p439 = scmp.ne.s32.totalorder %s424, %s438
      %p440 = scmp.eq.s32.totalorder %s36, 0
      %p441 = por %p439, %p440
      %s442 = ssub.s32 %s30, %s37
      %p443 = scmp.eq.s32.totalorder %s442, 0
      %s445 = sadd.s32 %s444, 1
      %s446 = scalar_select %p443, %s444, %s445
      %p449 = pneg %p443
      %p450 = scmp.eq.s32.totalorder %s30, 1
      %p451 = por %p449, %p450
      %p452 = scmp.ne.s32.totalorder %s444, %s447
      %p453 = scmp.eq.s32.totalorder %s30, 0
      %p454 = por %p452, %p453
      %p455 = scmp.ne.s32.totalorder %s444, %s447
      %p456 = scmp.eq.s32.totalorder %s35, 1
      %p457 = por %p455, %p456
      %p458 = scmp.ne.s32.totalorder %s447, %s448
      %p459 = scmp.eq.s32.totalorder %s35, 0
      %p460 = por %p458, %p459
      %p461 = scmp.ne.s32.totalorder %s447, %s448
      %p462 = scmp.eq.s32.totalorder %s36, 1
      %p463 = por %p461, %p462
      %p465 = scmp.ne.s32.totalorder %s448, %s464
      %p466 = scmp.eq.s32.totalorder %s36, 0
      %p467 = por %p465, %p466
      %s468 = ssub.s32 %s30, %s37
      %p469 = scmp.eq.s32.totalorder %s468, 0
      %s471 = sadd.s32 %s470, 1
      %s472 = scalar_select %p469, %s470, %s471
      %p475 = pneg %p469
      %p476 = scmp.eq.s32.totalorder %s30, 1
      %p477 = por %p475, %p476
      %p478 = scmp.ne.s32.totalorder %s470, %s473
      %p479 = scmp.eq.s32.totalorder %s30, 0
      %p480 = por %p478, %p479
      %p481 = scmp.ne.s32.totalorder %s470, %s473
      %p482 = scmp.eq.s32.totalorder %s35, 1
      %p483 = por %p481, %p482
      %p484 = scmp.ne.s32.totalorder %s473, %s474
      %p485 = scmp.eq.s32.totalorder %s35, 0
      %p486 = por %p484, %p485
      %p487 = scmp.ne.s32.totalorder %s473, %s474
      %p488 = scmp.eq.s32.totalorder %s36, 1
      %p489 = por %p487, %p488
      %p491 = scmp.ne.s32.totalorder %s474, %s490
      %p492 = scmp.eq.s32.totalorder %s36, 0
      %p493 = por %p491, %p492
      %p494 = scmp.le.s32.totalorder 1, %s30
      %p495 = scmp.lt.s32.totalorder %s30, 3
      %p496 = pnand %p494, %p495
      %p497 = pneg %p496
      // Predicated region
      $region9: #{tpu_custom_call.1} parent=5 // pred_check
        _
      $region10: #{tpu_custom_call.1} parent=5 // pred_check_branch
        %499 = sbr.rel (%p496) target = $region12
      $region11: #{tpu_custom_call.1} parent=5 // pred_region
        %s500 = ssub.s32 %s30, 1
        // Predicated region
        $region13: #{tpu_custom_call.1} parent=11 // pred_check
          %p501 = pneg %p77
        $region14: #{tpu_custom_call.1} parent=11 // pred_check_branch
          %503 = sbr.rel (%p501) target = $region16
        $region15: #{tpu_custom_call.1} parent=11 // pred_region
          _
        $region16: #{tpu_custom_call.1} parent=11 // pred_fallthru
          _
        // Predicated region
        $region17: #{tpu_custom_call.1} parent=11 // pred_check
          %p504 = pneg %p98
        $region18: #{tpu_custom_call.1} parent=11 // pred_check_branch
          %506 = sbr.rel (%p504) target = $region20
        $region19: #{tpu_custom_call.1} parent=11 // pred_region
          _
        $region20: #{tpu_custom_call.1} parent=11 // pred_fallthru
          _
        // Predicated region
        $region21: #{tpu_custom_call.1} parent=11 // pred_check
          %p507 = pneg %p119
        $region22: #{tpu_custom_call.1} parent=11 // pred_check_branch
          %509 = sbr.rel (%p507) target = $region24
        $region23: #{tpu_custom_call.1} parent=11 // pred_region
          _
        $region24: #{tpu_custom_call.1} parent=11 // pred_fallthru
          _
        // Predicated region
        $region25: #{tpu_custom_call.1} parent=11 // pred_check
          %p510 = pneg %p140
        $region26: #{tpu_custom_call.1} parent=11 // pred_check_branch
          %512 = sbr.rel (%p510) target = $region28
        $region27: #{tpu_custom_call.1} parent=11 // pred_region
          _
        $region28: #{tpu_custom_call.1} parent=11 // pred_fallthru
          _
        // Predicated region
        $region29: #{tpu_custom_call.1} parent=11 // pred_check
          %p513 = pneg %p161
        $region30: #{tpu_custom_call.1} parent=11 // pred_check_branch
          %515 = sbr.rel (%p513) target = $region32
        $region31: #{tpu_custom_call.1} parent=11 // pred_region
          _
        $region32: #{tpu_custom_call.1} parent=11 // pred_fallthru
          _
        // Predicated region
        $region33: #{tpu_custom_call.1} parent=11 // pred_check
          %p516 = pneg %p182
        $region34: #{tpu_custom_call.1} parent=11 // pred_check_branch
          %518 = sbr.rel (%p516) target = $region36
        $region35: #{tpu_custom_call.1} parent=11 // pred_region
          _
        $region36: #{tpu_custom_call.1} parent=11 // pred_fallthru
          _
        // Predicated region
        $region37: #{tpu_custom_call.1} parent=11 // pred_check
          %p519 = pneg %p203
        $region38: #{tpu_custom_call.1} parent=11 // pred_check_branch
          %521 = sbr.rel (%p519) target = $region40
        $region39: #{tpu_custom_call.1} parent=11 // pred_region
          _
        $region40: #{tpu_custom_call.1} parent=11 // pred_fallthru
          _
        // Predicated region
        $region41: #{tpu_custom_call.1} parent=11 // pred_check
          %p522 = pneg %p224
        $region42: #{tpu_custom_call.1} parent=11 // pred_check_branch
          %524 = sbr.rel (%p522) target = $region44
        $region43: #{tpu_custom_call.1} parent=11 // pred_region
          _
        $region44: #{tpu_custom_call.1} parent=11 // pred_fallthru
          _
        // Predicated region
        $region45: #{tpu_custom_call.1} parent=11 // pred_check
          %p525 = pneg %p245
        $region46: #{tpu_custom_call.1} parent=11 // pred_check_branch
          %527 = sbr.rel (%p525) target = $region48
        $region47: #{tpu_custom_call.1} parent=11 // pred_region
          _
        $region48: #{tpu_custom_call.1} parent=11 // pred_fallthru
          _
        // Predicated region
        $region49: #{tpu_custom_call.1} parent=11 // pred_check
          %p528 = pneg %p266
        $region50: #{tpu_custom_call.1} parent=11 // pred_check_branch
          %530 = sbr.rel (%p528) target = $region52
        $region51: #{tpu_custom_call.1} parent=11 // pred_region
          _
        $region52: #{tpu_custom_call.1} parent=11 // pred_fallthru
          _
        // Predicated region
        $region53: #{tpu_custom_call.1} parent=11 // pred_check
          %p531 = pneg %p287
        $region54: #{tpu_custom_call.1} parent=11 // pred_check_branch
          %533 = sbr.rel (%p531) target = $region56
        $region55: #{tpu_custom_call.1} parent=11 // pred_region
          _
        $region56: #{tpu_custom_call.1} parent=11 // pred_fallthru
          _
        // Predicated region
        $region57: #{tpu_custom_call.1} parent=11 // pred_check
          %p534 = pneg %p308
        $region58: #{tpu_custom_call.1} parent=11 // pred_check_branch
          %536 = sbr.rel (%p534) target = $region60
        $region59: #{tpu_custom_call.1} parent=11 // pred_region
          _
        $region60: #{tpu_custom_call.1} parent=11 // pred_fallthru
          _
        // Predicated region
        $region61: #{tpu_custom_call.1} parent=11 // pred_check
          %p537 = pneg %p329
        $region62: #{tpu_custom_call.1} parent=11 // pred_check_branch
          %539 = sbr.rel (%p537) target = $region64
        $region63: #{tpu_custom_call.1} parent=11 // pred_region
          _
        $region64: #{tpu_custom_call.1} parent=11 // pred_fallthru
          _
        // Predicated region
        $region65: #{tpu_custom_call.1} parent=11 // pred_check
          %p540 = pneg %p350
        $region66: #{tpu_custom_call.1} parent=11 // pred_check_branch
          %542 = sbr.rel (%p540) target = $region68
        $region67: #{tpu_custom_call.1} parent=11 // pred_region
          _
        $region68: #{tpu_custom_call.1} parent=11 // pred_fallthru
          _
        // Predicated region
        $region69: #{tpu_custom_call.1} parent=11 // pred_check
          %p543 = pneg %p371
        $region70: #{tpu_custom_call.1} parent=11 // pred_check_branch
          %545 = sbr.rel (%p543) target = $region72
        $region71: #{tpu_custom_call.1} parent=11 // pred_region
          _
        $region72: #{tpu_custom_call.1} parent=11 // pred_fallthru
          _
        // Predicated region
        $region73: #{tpu_custom_call.1} parent=11 // pred_check
          %p546 = pneg %p392
        $region74: #{tpu_custom_call.1} parent=11 // pred_check_branch
          %548 = sbr.rel (%p546) target = $region76
        $region75: #{tpu_custom_call.1} parent=11 // pred_region
          _
        $region76: #{tpu_custom_call.1} parent=11 // pred_fallthru
          _
        // Predicated region
        $region77: #{tpu_custom_call.1} parent=11 // pred_check
          %p549 = pneg %p413
        $region78: #{tpu_custom_call.1} parent=11 // pred_check_branch
          %551 = sbr.rel (%p549) target = $region80
        $region79: #{tpu_custom_call.1} parent=11 // pred_region
          _
        $region80: #{tpu_custom_call.1} parent=11 // pred_fallthru
          _
        // Predicated region
        $region81: #{tpu_custom_call.1} parent=11 // pred_check
          %p552 = pneg %p434
        $region82: #{tpu_custom_call.1} parent=11 // pred_check_branch
          %554 = sbr.rel (%p552) target = $region84
        $region83: #{tpu_custom_call.1} parent=11 // pred_region
          _
        $region84: #{tpu_custom_call.1} parent=11 // pred_fallthru
          _
      $region12: #{tpu_custom_call.1} parent=5 // pred_fallthru
        _
      %p555 = scmp.lt.s32.totalorder %s30, 2
      // Predicated region
      $region85: #{tpu_custom_call.1} parent=5 // pred_check
        %p556 = pneg %p555
      $region86: #{tpu_custom_call.1} parent=5 // pred_check_branch
        %558 = sbr.rel (%p556) target = $region88
      $region87: #{tpu_custom_call.1} parent=5 // pred_region
        // Predicated region
        $region89: #{tpu_custom_call.1} parent=87 // pred_check
          %p559 = pneg %p50
        $region90: #{tpu_custom_call.1} parent=87 // pred_check_branch
          %561 = sbr.rel (%p559) target = $region92
        $region91: #{tpu_custom_call.1} parent=87 // pred_region
          %p562 = scmp.lt.s32.totalorder %s30, 1
          %s563 = scalar_select %p562, %s30, 1
          %s564 = smul.addr %s563, 8
          %s565 = smul.addr %s564, 4
          %s566 = scalar_lea.vmem %s0, %s565
        $region92: #{tpu_custom_call.1} parent=87 // pred_fallthru
          _
      $region88: #{tpu_custom_call.1} parent=5 // pred_fallthru
        _
      %p567 = scmp.le.s32.totalorder 1, %s30
      %p568 = scmp.lt.s32.totalorder %s30, 3
      %p569 = pnand %p567, %p568
      %p570 = pneg %p569
      // Predicated region
      $region93: #{tpu_custom_call.1} parent=5 // pred_check
        _
      $region94: #{tpu_custom_call.1} parent=5 // pred_check_branch
        %572 = sbr.rel (%p569) target = $region96
      $region95: #{tpu_custom_call.1} parent=5 // pred_region
        %s573 = ssub.s32 %s30, 1
        %p574 = scmp.lt.s32.totalorder %s35, 1
        %s575 = scalar_select %p574, %s35, 1
        %s576 = smul.addr %s575, 8
        %s577 = smul.addr %s576, 4
        %s578 = scalar_lea.vmem %s0, %s577
        %p579 = pneg %p56
        %p580 = pneg %p53
        %p581 = pneg %p77
        %p582 = pneg %p74
        %p583 = pneg %p98
        %p584 = pneg %p95
        %p585 = pneg %p119
        %p586 = pneg %p116
        %p587 = pneg %p140
        %p588 = pneg %p137
        %p589 = pneg %p161
        %p590 = pneg %p158
        %p591 = pneg %p182
        %p592 = pneg %p179
        %p593 = pneg %p203
        %p594 = pneg %p200
        %p595 = pneg %p224
        %p596 = pneg %p221
        %p597 = pneg %p245
        %p598 = pneg %p242
        %p599 = pneg %p266
        %p600 = pneg %p263
        %p601 = pneg %p287
        %p602 = pneg %p284
        %p603 = pneg %p308
        %p604 = pneg %p305
        %p605 = pneg %p329
        %p606 = pneg %p326
        %p607 = pneg %p350
        %p608 = pneg %p347
        %p609 = pneg %p371
        %p610 = pneg %p368
        %p611 = pneg %p392
        %p612 = pneg %p389
        %p613 = pneg %p413
        %p614 = pneg %p410
        %p615 = pneg %p434
        %p616 = pneg %p431
        %p617 = pneg %p460
        %p618 = pneg %p457
        %p619 = scmp.lt.s32.totalorder %s35, 1
        %s620 = scalar_select %p619, %s35, 1
        %s621 = smul.addr %s620, 8
        %s622 = scalar_lea.vmem %s19, %s621
        %p623 = pneg %p486
        %p624 = pneg %p483
        %s625 = sand.u32 %s473, 1
        %s626 = scalar_lea.sflag [#allocation3], %s625
        %s627 = sand.u32 %s473, 1
        %s628 = scalar_lea.vmem [#allocation2], %s627
        %p629 = scmp.lt.s32.totalorder %s35, 1
        %s630 = scalar_select %p629, %s35, 1
        %s631 = smul.addr %s630, 8
        %s632 = smul.addr %s631, 4
        %s633 = scalar_lea.vmem %s0, %s632
        %p634 = scmp.lt.s32.totalorder %s35, 1
        %s635 = scalar_select %p634, %s35, 1
        %s636 = smul.addr %s635, 8
        %s637 = scalar_lea.vmem %s19, %s636
        %v639 = vld [vmem:[%s633] sm:$0xf]
        %v640 = vld [vmem:[%s633 + $0x4] sm:$0xf]
        %v641 = vld [vmem:[%s633 + $0x8] sm:$0xf]
        %v642 = vld [vmem:[%s633 + $0xc] sm:$0xf]
        %v643 = vld [vmem:[%s633 + $0x10] sm:$0xf]
        %v644 = vld [vmem:[%s633 + $0x14] sm:$0xf]
        %v645 = vld [vmem:[%s633 + $0x18] sm:$0xf]
        %v646 = vld [vmem:[%s633 + $0x1c] sm:$0xf]
        %v647 = vld [vmem:[%s1] sm:$0xf]
        %v648 = vld [vmem:[%s1 + $0x4] sm:$0xf]
        %v649 = vld [vmem:[%s1 + $0x8] sm:$0xf]
        %v650 = vld [vmem:[%s1 + $0xc] sm:$0xf]
        %v651 = vld [vmem:[%s1 + $0x10] sm:$0xf]
        %v652 = vld [vmem:[%s2] sm:$0xff]
        %v653 = vld [vmem:[%s2 + $0x8] sm:$0xff]
        %v654 = vld [vmem:[%s2 + $0x10] sm:$0xff]
        %v655 = vld [vmem:[%s2 + $0x18] sm:$0xff]
        %v656 = vld [vmem:[%s2 + $0x20] sm:$0xff]
        %658 = vset.pattern.permute.xlu0 0
        %659 = vperm.xlu0 %658, %v652
        %v660 = vpop.permute.xlu0 %659
        %663 = vset.pattern.permute.xlu0 0
        %664 = vperm.xlu0 %663, %v653
        %v665 = vpop.permute.xlu0 %664
        %668 = vset.pattern.permute.xlu0 0
        %669 = vperm.xlu0 %668, %v654
        %v670 = vpop.permute.xlu0 %669
        %673 = vset.pattern.permute.xlu0 0
        %674 = vperm.xlu0 %673, %v655
        %v675 = vpop.permute.xlu0 %674
        %678 = vset.pattern.permute.xlu0 0
        %679 = vperm.xlu0 %678, %v656
        %v680 = vpop.permute.xlu0 %679
        %v687 = vunpack.c.l.b16 %v647
        %v688 = vunpack.c.l.b16 %v648
        %v689 = vunpack.c.l.b16 %v649
        %v690 = vunpack.c.l.b16 %v650
        %v691 = vunpack.c.l.b16 %v651
        %v692 = vpack.c.b16 %v688, %v687
        %v693 = vpack.c.b16 %v690, %v689
        %v694 = vpack.c.b16 %v691, %v691
        %v703 = vunpack.c.l.b16 %v639
        %v704 = vunpack.c.l.b16 %v640
        %v705 = vunpack.c.l.b16 %v641
        %v706 = vunpack.c.l.b16 %v642
        %v707 = vunpack.c.l.b16 %v643
        %v708 = vunpack.c.l.b16 %v644
        %v709 = vunpack.c.l.b16 %v645
        %v710 = vunpack.c.l.b16 %v646
        %v711 = vpack.c.b16 %v704, %v703
        %v712 = vpack.c.b16 %v706, %v705
        %v713 = vpack.c.b16 %v708, %v707
        %v714 = vpack.c.b16 %v710, %v709
        %vm719 = vcmask 523264
        %v721 = vsel %vm719, %v692, 0
        %v724 = vsel %vm719, %v693, 0
        %v727 = vsel %vm719, %v694, 0
        %729 = vmatprep.subr.bf16.mxu0 0
        %730 = vmatpush1.bf16.msra.mxu0 0
        %731 = vmatprep.subr.bf16.mxu0 0
        %732 = vmatpush1.bf16.msra.mxu0 0
        %733 = vmatprep.subr.bf16.mxu0 0
        %734 = vmatpush1.bf16.msra.mxu0 0
        %735 = vmatprep.subr.bf16.mxu0 0
        %736 = vmatpush1.bf16.msra.mxu0 0
        %737 = vmatprep.subr.bf16.mxu0 0
        %738 = vmatpush1.bf16.msra.mxu0 %v714
        %739 = vmatprep.subr.bf16.mxu0 0
        %740 = vmatpush1.bf16.msra.mxu0 %v713
        %741 = vmatprep.subr.bf16.mxu0 0
        %742 = vmatpush1.bf16.msra.mxu0 %v712
        %743 = vmatprep.subr.bf16.mxu0 0
        %744 = vmatpush1.bf16.msra.mxu0 %v711
        %745 = vmatprep.subr.bf16.mxu0 0
        %746 = vmatpush2.bf16.msra.mxu0 0
        %747 = vmatprep.subr.bf16.mxu0 0
        %748 = vmatpush2.bf16.msra.mxu0 0
        %749 = vmatprep.subr.bf16.mxu0 0
        %750 = vmatpush2.bf16.msra.mxu0 0
        %751 = vmatprep.subr.bf16.mxu0 0
        %752 = vmatpush2.bf16.msra.mxu0 0
        %753 = vmatprep.subr.bf16.mxu0 0
        %754 = vmatpush2.bf16.msra.mxu0 0
        %755 = vmatprep.subr.bf16.mxu0 0
        %756 = vmatpush2.bf16.msra.mxu0 0
        %757 = vmatprep.subr.bf16.mxu0 0
        %758 = vmatpush2.bf16.msra.mxu0 0
        %759 = vmatprep.subr.bf16.mxu0 0
        %760 = vmatpush2.bf16.msra.mxu0 0
        %761 = vmatprep.mubr.bf16.mxu0 0
        %762 = vmatmul.mubr.bf16.gmra.mxu0 %v721
        %v763 = vpop.f32.mrf.mxu0
        %v764 = vadd.f32 %v660, %v763
        %v765 = vpop.f32.mrf.mxu0
        %v766 = vpop.f32.mrf.mxu0
        %v767 = vadd.f32 %v665, %v766
        %v768 = vpop.f32.mrf.mxu0
        %769 = vmatprep.mubr.bf16.mxu0 0
        %770 = vmatmul.mubr.bf16.gmra.mxu0 %v724
        %v771 = vpop.f32.mrf.mxu0
        %v772 = vadd.f32 %v670, %v771
        %v773 = vpop.f32.mrf.mxu0
        %v774 = vpop.f32.mrf.mxu0
        %v775 = vadd.f32 %v675, %v774
        %v776 = vpop.f32.mrf.mxu0
        %777 = vmatprep.mubr.bf16.mxu0 0
        %778 = vmatmul.mubr.bf16.gmra.mxu0 %v727
        %v779 = vpop.f32.mrf.mxu0
        %v780 = vadd.f32 %v680, %v779
        %v781 = vpop.f32.mrf.mxu0
        %v782 = vpop.f32.mrf.mxu0
        %v783 = vpop.f32.mrf.mxu0
        %784 = vdwg.mxu0
        %v785 = vlaneseq
        %v786 = vand.u32 %v785, 127
        %vm787 = vcmp.lt.s32.totalorder %v786, 64
        %v788 = vsel %vm787, 1, 0
        %vm789 = vcmp.eq.s32.totalorder %v788, 1
        %v790 = vsel %vm789, %v764, -inf
        %v791 = vxor.u32 %v764, 2147483648
        %v792 = vmul.f32 %v791, 1.442695
        %v793 = vpow.pop %v792
        %v794 = vadd.f32 %v793, 1.0
        %v795 = vrcp.pop %v794
        %v796 = vmul.f32 1.0, %v795
        %v797 = vsel %vm789, %v796, 0.0
        %798 = vmax.xlane.f32.xlu0 %v790
        %v799 = vpop.xlane.xlu0 %798
        %vm800 = vcmask 7168
        %801 = vst.msk [vmem:[%s637] sm:$0xff] %vm800, %v799
        %v802 = vpack.c.bf16 %v772, %v767
        %v803 = vpack.c.bf16 %v780, %v775
        %v804 = vpack.c.bf16 %v797, %v797
        %805 = vmatprep.subr.bf16.mxu0 0
        %806 = vmatpush1.bf16.xpose.msra.mxu0 0
        %807 = vmatprep.subr.bf16.mxu0 0
        %808 = vmatpush1.bf16.xpose.msra.mxu0 0
        %809 = vmatprep.subr.bf16.mxu0 0
        %810 = vmatpush1.bf16.xpose.msra.mxu0 0
        %811 = vmatprep.subr.bf16.mxu0 0
        %812 = vmatpush1.bf16.xpose.msra.mxu0 0
        %813 = vmatprep.subr.bf16.mxu0 0
        %814 = vmatpush1.bf16.xpose.msra.mxu0 0
        %815 = vmatprep.subr.bf16.mxu0 0
        %816 = vmatpush1.bf16.xpose.msra.mxu0 0
        %817 = vmatprep.subr.bf16.mxu0 0
        %818 = vmatpush1.bf16.xpose.msra.mxu0 0
        %819 = vmatprep.subr.bf16.mxu0 0
        %820 = vmatpush1.bf16.xpose.msra.mxu0 %v804
        %821 = vmatprep.subr.bf16.mxu0 0
        %822 = vmatpush2.bf16.xpose.msra.mxu0 0
        %823 = vmatprep.subr.bf16.mxu0 0
        %824 = vmatpush2.bf16.xpose.msra.mxu0 0
        %825 = vmatprep.subr.bf16.mxu0 0
        %826 = vmatpush2.bf16.xpose.msra.mxu0 0
        %827 = vmatprep.subr.bf16.mxu0 0
        %828 = vmatpush2.bf16.xpose.msra.mxu0 0
        %829 = vmatprep.subr.bf16.mxu0 0
        %830 = vmatpush2.bf16.xpose.msra.mxu0 0
        %831 = vmatprep.subr.bf16.mxu0 0
        %832 = vmatpush2.bf16.xpose.msra.mxu0 0
        %833 = vmatprep.subr.bf16.mxu0 0
        %834 = vmatpush2.bf16.xpose.msra.mxu0 0
        %835 = vmatprep.subr.bf16.mxu0 0
        %836 = vmatpush2.bf16.xpose.msra.mxu0 0
        %837 = vmatprep.mubr.bf16.mxu0 0
        %838 = vmatmul.mubr.bf16.gmra.mxu0 %v802
        %v839 = vpop.f32.mrf.mxu0
        %v840 = vadd.f32 0.0, %v839
        %v841 = vpop.f32.mrf.mxu0
        %v842 = vpop.f32.mrf.mxu0
        %v843 = vadd.f32 0.0, %v842
        %v844 = vpop.f32.mrf.mxu0
        %845 = vmatprep.mubr.bf16.mxu0 0
        %846 = vmatmul.mubr.bf16.gmra.mxu0 %v803
        %v847 = vpop.f32.mrf.mxu0
        %v848 = vadd.f32 0.0, %v847
        %v849 = vpop.f32.mrf.mxu0
        %v850 = vpop.f32.mrf.mxu0
        %v851 = vadd.f32 0.0, %v850
        %v852 = vpop.f32.mrf.mxu0
        %853 = vdwg.mxu0
        %v854 = vld [vmem:[%s3] sm:$0xf]
        %v855 = vpack.c.bf16 %v843, %v840
        %v856 = vpack.c.bf16 %v851, %v848
        %vm857 = vcmask 64512
        %v859 = vsel %vm857, %v855, 0
        %v862 = vsel %vm857, %v856, 0
        %vm864 = vcmask 1043456
        %v866 = vsel %vm864, %v854, 0
        %868 = vmatprep.subr.bf16.mxu0 0
        %869 = vmatpush1.bf16.msra.mxu0 0
        %870 = vmatprep.subr.bf16.mxu0 0
        %871 = vmatpush1.bf16.msra.mxu0 0
        %872 = vmatprep.subr.bf16.mxu0 0
        %873 = vmatpush1.bf16.msra.mxu0 0
        %874 = vmatprep.subr.bf16.mxu0 0
        %875 = vmatpush1.bf16.msra.mxu0 0
        %876 = vmatprep.subr.bf16.mxu0 0
        %877 = vmatpush1.bf16.msra.mxu0 0
        %878 = vmatprep.subr.bf16.mxu0 0
        %879 = vmatpush1.bf16.msra.mxu0 0
        %880 = vmatprep.subr.bf16.mxu0 0
        %881 = vmatpush1.bf16.msra.mxu0 0
        %882 = vmatprep.subr.bf16.mxu0 0
        %883 = vmatpush1.bf16.msra.mxu0 %v866
        %884 = vmatprep.subr.bf16.mxu0 0
        %885 = vmatpush2.bf16.msra.mxu0 0
        %886 = vmatprep.subr.bf16.mxu0 0
        %887 = vmatpush2.bf16.msra.mxu0 0
        %888 = vmatprep.subr.bf16.mxu0 0
        %889 = vmatpush2.bf16.msra.mxu0 0
        %890 = vmatprep.subr.bf16.mxu0 0
        %891 = vmatpush2.bf16.msra.mxu0 0
        %892 = vmatprep.subr.bf16.mxu0 0
        %893 = vmatpush2.bf16.msra.mxu0 0
        %894 = vmatprep.subr.bf16.mxu0 0
        %895 = vmatpush2.bf16.msra.mxu0 0
        %896 = vmatprep.subr.bf16.mxu0 0
        %897 = vmatpush2.bf16.msra.mxu0 0
        %898 = vmatprep.subr.bf16.mxu0 0
        %899 = vmatpush2.bf16.msra.mxu0 0
        %900 = vmatprep.mubr.bf16.mxu0 0
        %901 = vmatmul.mubr.bf16.gmra.mxu0 %v859
        %v902 = vpop.f32.mrf.mxu0
        %v903 = vadd.f32 0.0, %v902
        %v904 = vpop.f32.mrf.mxu0
        %v905 = vpop.f32.mrf.mxu0
        %v906 = vadd.f32 0.0, %v905
        %v907 = vpop.f32.mrf.mxu0
        %908 = vmatprep.mubr.bf16.mxu0 0
        %909 = vmatmul.mubr.bf16.gmra.mxu0 %v862
        %v910 = vpop.f32.mrf.mxu0
        %v911 = vadd.f32 0.0, %v910
        %v912 = vpop.f32.mrf.mxu0
        %v913 = vpop.f32.mrf.mxu0
        %v914 = vadd.f32 0.0, %v913
        %v915 = vpop.f32.mrf.mxu0
        %916 = vdwg.mxu0
        %vm917 = vcmp.ge.f32.partialorder %v903, 0.0
        %vm918 = vcmp.ge.f32.partialorder %v906, 0.0
        %vm919 = vcmp.ge.f32.partialorder %v911, 0.0
        %vm920 = vcmp.ge.f32.partialorder %v914, 0.0
        %v921 = vmul.f32 %v903, 0.2
        %v922 = vmul.f32 %v906, 0.2
        %v923 = vmul.f32 %v911, 0.2
        %v924 = vmul.f32 %v914, 0.2
        %v925 = vsel %vm917, %v903, %v921
        %v926 = vsel %vm918, %v906, %v922
        %v927 = vsel %vm919, %v911, %v923
        %v928 = vsel %vm920, %v914, %v924
        %v929 = vld [vmem:[%s4] sm:$0xf]
        %v930 = vld [vmem:[%s4 + $0x4] sm:$0xf]
        %v931 = vld [vmem:[%s4 + $0x8] sm:$0xf]
        %v932 = vld [vmem:[%s4 + $0xc] sm:$0xf]
        %v933 = vpack.c.bf16 %v926, %v925
        %v934 = vpack.c.bf16 %v928, %v927
        %v935 = vld [vmem:[%s5] sm:$0xff]
        %v936 = vld [vmem:[%s5 + $0x8] sm:$0xff]
        %v937 = vld [vmem:[%s5 + $0x10] sm:$0xff]
        %v938 = vld [vmem:[%s5 + $0x18] sm:$0xff]
        %940 = vset.pattern.permute.xlu0 0
        %941 = vperm.xlu0 %940, %v935
        %v942 = vpop.permute.xlu0 %941
        %945 = vset.pattern.permute.xlu0 0
        %946 = vperm.xlu0 %945, %v936
        %v947 = vpop.permute.xlu0 %946
        %950 = vset.pattern.permute.xlu0 0
        %951 = vperm.xlu0 %950, %v937
        %v952 = vpop.permute.xlu0 %951
        %955 = vset.pattern.permute.xlu0 0
        %956 = vperm.xlu0 %955, %v938
        %v957 = vpop.permute.xlu0 %956
        %v963 = vunpack.c.l.b16 %v929
        %v964 = vunpack.c.l.b16 %v930
        %v965 = vunpack.c.l.b16 %v931
        %v966 = vunpack.c.l.b16 %v932
        %v967 = vpack.c.b16 %v964, %v963
        %v968 = vpack.c.b16 %v966, %v965
        %vm969 = vcmask 261120
        %v971 = vsel %vm969, %v967, 0
        %v974 = vsel %vm969, %v968, 0
        %976 = vmatprep.subr.bf16.mxu0 0
        %977 = vmatpush1.bf16.msra.mxu0 0
        %978 = vmatprep.subr.bf16.mxu0 0
        %979 = vmatpush1.bf16.msra.mxu0 0
        %980 = vmatprep.subr.bf16.mxu0 0
        %981 = vmatpush1.bf16.msra.mxu0 0
        %982 = vmatprep.subr.bf16.mxu0 0
        %983 = vmatpush1.bf16.msra.mxu0 0
        %984 = vmatprep.subr.bf16.mxu0 0
        %985 = vmatpush1.bf16.msra.mxu0 0
        %986 = vmatprep.subr.bf16.mxu0 0
        %987 = vmatpush1.bf16.msra.mxu0 0
        %988 = vmatprep.subr.bf16.mxu0 0
        %989 = vmatpush1.bf16.msra.mxu0 %v934
        %990 = vmatprep.subr.bf16.mxu0 0
        %991 = vmatpush1.bf16.msra.mxu0 %v933
        %992 = vmatprep.subr.bf16.mxu0 0
        %993 = vmatpush2.bf16.msra.mxu0 0
        %994 = vmatprep.subr.bf16.mxu0 0
        %995 = vmatpush2.bf16.msra.mxu0 0
        %996 = vmatprep.subr.bf16.mxu0 0
        %997 = vmatpush2.bf16.msra.mxu0 0
        %998 = vmatprep.subr.bf16.mxu0 0
        %999 = vmatpush2.bf16.msra.mxu0 0
        %1000 = vmatprep.subr.bf16.mxu0 0
        %1001 = vmatpush2.bf16.msra.mxu0 0
        %1002 = vmatprep.subr.bf16.mxu0 0
        %1003 = vmatpush2.bf16.msra.mxu0 0
        %1004 = vmatprep.subr.bf16.mxu0 0
        %1005 = vmatpush2.bf16.msra.mxu0 0
        %1006 = vmatprep.subr.bf16.mxu0 0
        %1007 = vmatpush2.bf16.msra.mxu0 0
        %1008 = vmatprep.mubr.bf16.mxu0 0
        %1009 = vmatmul.mubr.bf16.gmra.mxu0 %v971
        %v1010 = vpop.f32.mrf.mxu0
        %v1011 = vadd.f32 %v942, %v1010
        %v1012 = vpop.f32.mrf.mxu0
        %v1013 = vpop.f32.mrf.mxu0
        %v1014 = vadd.f32 %v947, %v1013
        %v1015 = vpop.f32.mrf.mxu0
        %1016 = vmatprep.mubr.bf16.mxu0 0
        %1017 = vmatmul.mubr.bf16.gmra.mxu0 %v974
        %v1018 = vpop.f32.mrf.mxu0
        %v1019 = vadd.f32 %v952, %v1018
        %v1020 = vpop.f32.mrf.mxu0
        %v1021 = vpop.f32.mrf.mxu0
        %v1022 = vadd.f32 %v957, %v1021
        %v1023 = vpop.f32.mrf.mxu0
        %1024 = vdwg.mxu0
        %vm1025 = vcmp.ge.f32.partialorder %v1011, 0.0
        %vm1026 = vcmp.ge.f32.partialorder %v1014, 0.0
        %vm1027 = vcmp.ge.f32.partialorder %v1019, 0.0
        %vm1028 = vcmp.ge.f32.partialorder %v1022, 0.0
        %v1029 = vmul.f32 %v1011, 0.2
        %v1030 = vmul.f32 %v1014, 0.2
        %v1031 = vmul.f32 %v1019, 0.2
        %v1032 = vmul.f32 %v1022, 0.2
        %v1033 = vsel %vm1025, %v1011, %v1029
        %v1034 = vsel %vm1026, %v1014, %v1030
        %v1035 = vsel %vm1027, %v1019, %v1031
        %v1036 = vsel %vm1028, %v1022, %v1032
        %v1037 = vadd.f32 %v840, %v1033
        %v1038 = vadd.f32 %v843, %v1034
        %v1039 = vadd.f32 %v848, %v1035
        %v1040 = vadd.f32 %v851, %v1036
        %v1041 = vld [vmem:[%s6] sm:$0xf]
        %v1042 = vld [vmem:[%s6 + $0x4] sm:$0xf]
        %v1043 = vld [vmem:[%s6 + $0x8] sm:$0xf]
        %v1044 = vld [vmem:[%s6 + $0xc] sm:$0xf]
        %v1045 = vpack.c.bf16 %v1038, %v1037
        %v1046 = vpack.c.bf16 %v1040, %v1039
        %v1051 = vunpack.c.l.b16 %v1041
        %v1052 = vunpack.c.l.b16 %v1042
        %v1053 = vunpack.c.l.b16 %v1043
        %v1054 = vunpack.c.l.b16 %v1044
        %v1055 = vpack.c.b16 %v1052, %v1051
        %v1056 = vpack.c.b16 %v1054, %v1053
        %v1058 = vsel %vm969, %v1055, 0
        %v1061 = vsel %vm969, %v1056, 0
        %1063 = vmatprep.subr.bf16.mxu0 0
        %1064 = vmatpush1.bf16.msra.mxu0 0
        %1065 = vmatprep.subr.bf16.mxu0 0
        %1066 = vmatpush1.bf16.msra.mxu0 0
        %1067 = vmatprep.subr.bf16.mxu0 0
        %1068 = vmatpush1.bf16.msra.mxu0 0
        %1069 = vmatprep.subr.bf16.mxu0 0
        %1070 = vmatpush1.bf16.msra.mxu0 0
        %1071 = vmatprep.subr.bf16.mxu0 0
        %1072 = vmatpush1.bf16.msra.mxu0 0
        %1073 = vmatprep.subr.bf16.mxu0 0
        %1074 = vmatpush1.bf16.msra.mxu0 0
        %1075 = vmatprep.subr.bf16.mxu0 0
        %1076 = vmatpush1.bf16.msra.mxu0 %v1046
        %1077 = vmatprep.subr.bf16.mxu0 0
        %1078 = vmatpush1.bf16.msra.mxu0 %v1045
        %1079 = vmatprep.subr.bf16.mxu0 0
        %1080 = vmatpush2.bf16.msra.mxu0 0
        %1081 = vmatprep.subr.bf16.mxu0 0
        %1082 = vmatpush2.bf16.msra.mxu0 0
        %1083 = vmatprep.subr.bf16.mxu0 0
        %1084 = vmatpush2.bf16.msra.mxu0 0
        %1085 = vmatprep.subr.bf16.mxu0 0
        %1086 = vmatpush2.bf16.msra.mxu0 0
        %1087 = vmatprep.subr.bf16.mxu0 0
        %1088 = vmatpush2.bf16.msra.mxu0 0
        %1089 = vmatprep.subr.bf16.mxu0 0
        %1090 = vmatpush2.bf16.msra.mxu0 0
        %1091 = vmatprep.subr.bf16.mxu0 0
        %1092 = vmatpush2.bf16.msra.mxu0 0
        %1093 = vmatprep.subr.bf16.mxu0 0
        %1094 = vmatpush2.bf16.msra.mxu0 0
        %1095 = vmatprep.mubr.bf16.mxu0 0
        %1096 = vmatmul.mubr.bf16.gmra.mxu0 %v1058
        %v1097 = vpop.f32.mrf.mxu0
        %v1098 = vadd.f32 0.0, %v1097
        %v1099 = vpop.f32.mrf.mxu0
        %v1100 = vpop.f32.mrf.mxu0
        %v1101 = vadd.f32 0.0, %v1100
        %v1102 = vpop.f32.mrf.mxu0
        %1103 = vmatprep.mubr.bf16.mxu0 0
        %1104 = vmatmul.mubr.bf16.gmra.mxu0 %v1061
        %v1105 = vpop.f32.mrf.mxu0
        %v1106 = vadd.f32 0.0, %v1105
        %v1107 = vpop.f32.mrf.mxu0
        %v1108 = vpop.f32.mrf.mxu0
        %v1109 = vadd.f32 0.0, %v1108
        %v1110 = vpop.f32.mrf.mxu0
        %1111 = vdwg.mxu0
        %v1112 = vsel %vm857, %v1098, 0.0
        %1113 = vadd.xlane.f32.xlu0 %v1112
        %v1114 = vpop.xlane.xlu0 %1113
        %v1115 = vsel %vm857, %v1101, 0.0
        %1116 = vadd.xlane.f32.xlu0 %v1115
        %v1117 = vpop.xlane.xlu0 %1116
        %v1118 = vsel %vm857, %v1106, 0.0
        %1119 = vadd.xlane.f32.xlu0 %v1118
        %v1120 = vpop.xlane.xlu0 %1119
        %v1121 = vsel %vm857, %v1109, 0.0
        %1122 = vadd.xlane.f32.xlu0 %v1121
        %v1123 = vpop.xlane.xlu0 %1122
        %v1124 = vrcp.pop 8.0
        %v1125 = vmul.f32 %v1114, %v1124
        %v1126 = vmul.f32 %v1117, %v1124
        %v1127 = vmul.f32 %v1120, %v1124
        %v1128 = vmul.f32 %v1123, %v1124
        %v1129 = vld [vmem:[%s7] sm:$0xff]
        %v1130 = vld [vmem:[%s7 + $0x8] sm:$0xff]
        %v1131 = vld [vmem:[%s7 + $0x10] sm:$0xff]
        %v1132 = vld [vmem:[%s7 + $0x18] sm:$0xff]
        %v1133 = vadd.f32 %v1125, %v1129
        %v1134 = vadd.f32 %v1126, %v1130
        %v1135 = vadd.f32 %v1127, %v1131
        %v1136 = vadd.f32 %v1128, %v1132
        %v1137 = vld [vmem:[%s10] sm:$0xff]
        %v1138 = vld [vmem:[%s10 + $0x8] sm:$0xff]
        %v1139 = vld [vmem:[%s10 + $0x10] sm:$0xff]
        %v1140 = vld [vmem:[%s10 + $0x18] sm:$0xff]
        %v1141 = vsub.f32 %v1133, %v1137
        %v1142 = vsub.f32 %v1134, %v1138
        %v1143 = vsub.f32 %v1135, %v1139
        %v1144 = vsub.f32 %v1136, %v1140
        %v1145 = vld [vmem:[%s11] sm:$0xff]
        %v1146 = vld [vmem:[%s11 + $0x8] sm:$0xff]
        %v1147 = vld [vmem:[%s11 + $0x10] sm:$0xff]
        %v1148 = vld [vmem:[%s11 + $0x18] sm:$0xff]
        %v1149 = vadd.f32 %v1145, 1e-05
        %v1150 = vadd.f32 %v1146, 1e-05
        %v1151 = vadd.f32 %v1147, 1e-05
        %v1152 = vadd.f32 %v1148, 1e-05
        %v1153 = vrsqrt.pop %v1149
        %v1154 = vrsqrt.pop %v1150
        %v1155 = vrsqrt.pop %v1151
        %v1156 = vrsqrt.pop %v1152
        %v1157 = vmul.f32 %v1141, %v1153
        %v1158 = vmul.f32 %v1142, %v1154
        %v1159 = vmul.f32 %v1143, %v1155
        %v1160 = vmul.f32 %v1144, %v1156
        %v1161 = vld [vmem:[%s8] sm:$0xff]
        %v1162 = vld [vmem:[%s8 + $0x8] sm:$0xff]
        %v1163 = vld [vmem:[%s8 + $0x10] sm:$0xff]
        %v1164 = vld [vmem:[%s8 + $0x18] sm:$0xff]
        %v1165 = vmul.f32 %v1157, %v1161
        %v1166 = vmul.f32 %v1158, %v1162
        %v1167 = vmul.f32 %v1159, %v1163
        %v1168 = vmul.f32 %v1160, %v1164
        %v1169 = vld [vmem:[%s9] sm:$0xff]
        %v1170 = vld [vmem:[%s9 + $0x8] sm:$0xff]
        %v1171 = vld [vmem:[%s9 + $0x10] sm:$0xff]
        %v1172 = vld [vmem:[%s9 + $0x18] sm:$0xff]
        %v1173 = vadd.f32 %v1165, %v1169
        %v1174 = vadd.f32 %v1166, %v1170
        %v1175 = vadd.f32 %v1167, %v1171
        %v1176 = vadd.f32 %v1168, %v1172
        %vm1177 = vcmp.ge.f32.partialorder %v1173, 0.0
        %vm1178 = vcmp.ge.f32.partialorder %v1174, 0.0
        %vm1179 = vcmp.ge.f32.partialorder %v1175, 0.0
        %vm1180 = vcmp.ge.f32.partialorder %v1176, 0.0
        %v1181 = vmul.f32 %v1173, 0.2
        %v1182 = vmul.f32 %v1174, 0.2
        %v1183 = vmul.f32 %v1175, 0.2
        %v1184 = vmul.f32 %v1176, 0.2
        %v1185 = vsel %vm1177, %v1173, %v1181
        %v1186 = vsel %vm1178, %v1174, %v1182
        %v1187 = vsel %vm1179, %v1175, %v1183
        %v1188 = vsel %vm1180, %v1176, %v1184
        %v1189 = vld [vmem:[%s12] sm:$0xf]
        %v1190 = vpack.c.bf16 %v1186, %v1185
        %v1191 = vpack.c.bf16 %v1188, %v1187
        %v1193 = vsel %vm969, %v1189, 0
        %1195 = vmatprep.subr.bf16.mxu0 0
        %1196 = vmatpush1.bf16.msra.mxu0 0
        %1197 = vmatprep.subr.bf16.mxu0 0
        %1198 = vmatpush1.bf16.msra.mxu0 0
        %1199 = vmatprep.subr.bf16.mxu0 0
        %1200 = vmatpush1.bf16.msra.mxu0 0
        %1201 = vmatprep.subr.bf16.mxu0 0
        %1202 = vmatpush1.bf16.msra.mxu0 0
        %1203 = vmatprep.subr.bf16.mxu0 0
        %1204 = vmatpush1.bf16.msra.mxu0 0
        %1205 = vmatprep.subr.bf16.mxu0 0
        %1206 = vmatpush1.bf16.msra.mxu0 0
        %1207 = vmatprep.subr.bf16.mxu0 0
        %1208 = vmatpush1.bf16.msra.mxu0 %v1191
        %1209 = vmatprep.subr.bf16.mxu0 0
        %1210 = vmatpush1.bf16.msra.mxu0 %v1190
        %1211 = vmatprep.subr.bf16.mxu0 0
        %1212 = vmatpush2.bf16.msra.mxu0 0
        %1213 = vmatprep.subr.bf16.mxu0 0
        %1214 = vmatpush2.bf16.msra.mxu0 0
        %1215 = vmatprep.subr.bf16.mxu0 0
        %1216 = vmatpush2.bf16.msra.mxu0 0
        %1217 = vmatprep.subr.bf16.mxu0 0
        %1218 = vmatpush2.bf16.msra.mxu0 0
        %1219 = vmatprep.subr.bf16.mxu0 0
        %1220 = vmatpush2.bf16.msra.mxu0 0
        %1221 = vmatprep.subr.bf16.mxu0 0
        %1222 = vmatpush2.bf16.msra.mxu0 0
        %1223 = vmatprep.subr.bf16.mxu0 0
        %1224 = vmatpush2.bf16.msra.mxu0 0
        %1225 = vmatprep.subr.bf16.mxu0 0
        %1226 = vmatpush2.bf16.msra.mxu0 0
        %1227 = vmatprep.mubr.bf16.mxu0 0
        %1228 = vmatmul.mubr.bf16.gmra.mxu0 %v1193
        %v1229 = vpop.f32.mrf.mxu0
        %v1230 = vadd.f32 0.0, %v1229
        %v1231 = vpop.f32.mrf.mxu0
        %v1232 = vpop.f32.mrf.mxu0
        %v1233 = vpop.f32.mrf.mxu0
        %1234 = vdwg.mxu0
        %v1235 = vld [vmem:[%s13] sm:$0xf]
        %v1237 = vsel %vm969, %v1235, 0
        %1239 = vmatprep.subr.bf16.mxu0 0
        %1240 = vmatpush1.bf16.msra.mxu0 0
        %1241 = vmatprep.subr.bf16.mxu0 0
        %1242 = vmatpush1.bf16.msra.mxu0 0
        %1243 = vmatprep.subr.bf16.mxu0 0
        %1244 = vmatpush1.bf16.msra.mxu0 0
        %1245 = vmatprep.subr.bf16.mxu0 0
        %1246 = vmatpush1.bf16.msra.mxu0 0
        %1247 = vmatprep.subr.bf16.mxu0 0
        %1248 = vmatpush1.bf16.msra.mxu0 0
        %1249 = vmatprep.subr.bf16.mxu0 0
        %1250 = vmatpush1.bf16.msra.mxu0 0
        %1251 = vmatprep.subr.bf16.mxu0 0
        %1252 = vmatpush1.bf16.msra.mxu0 %v1046
        %1253 = vmatprep.subr.bf16.mxu0 0
        %1254 = vmatpush1.bf16.msra.mxu0 %v1045
        %1255 = vmatprep.subr.bf16.mxu0 0
        %1256 = vmatpush2.bf16.msra.mxu0 0
        %1257 = vmatprep.subr.bf16.mxu0 0
        %1258 = vmatpush2.bf16.msra.mxu0 0
        %1259 = vmatprep.subr.bf16.mxu0 0
        %1260 = vmatpush2.bf16.msra.mxu0 0
        %1261 = vmatprep.subr.bf16.mxu0 0
        %1262 = vmatpush2.bf16.msra.mxu0 0
        %1263 = vmatprep.subr.bf16.mxu0 0
        %1264 = vmatpush2.bf16.msra.mxu0 0
        %1265 = vmatprep.subr.bf16.mxu0 0
        %1266 = vmatpush2.bf16.msra.mxu0 0
        %1267 = vmatprep.subr.bf16.mxu0 0
        %1268 = vmatpush2.bf16.msra.mxu0 0
        %1269 = vmatprep.subr.bf16.mxu0 0
        %1270 = vmatpush2.bf16.msra.mxu0 0
        %1271 = vmatprep.mubr.bf16.mxu0 0
        %1272 = vmatmul.mubr.bf16.gmra.mxu0 %v1237
        %v1273 = vpop.f32.mrf.mxu0
        %v1274 = vadd.f32 0.0, %v1273
        %v1275 = vpop.f32.mrf.mxu0
        %v1276 = vpop.f32.mrf.mxu0
        %v1277 = vpop.f32.mrf.mxu0
        %1278 = vdwg.mxu0
        %1280 = vset.pattern.permute.xlu0 0
        %1281 = vperm.xlu0 %1280, %v1230
        %v1282 = vpop.permute.xlu0 %1281
        %v1284 = vadd.f32 %v1282, %v1274
        %v1285 = vld [vmem:[%s14] sm:$0xff]
        %1287 = vset.pattern.permute.xlu0 0
        %1288 = vperm.xlu0 %1287, %v1285
        %v1289 = vpop.permute.xlu0 %1288
        %v1291 = vadd.f32 %v1284, %v1289
        %v1292 = vxor.u32 %v1291, 2147483648
        %v1293 = vmul.f32 %v1292, 1.442695
        %v1294 = vpow.pop %v1293
        %v1295 = vadd.f32 %v1294, 1.0
        %v1296 = vrcp.pop %v1295
        %v1297 = vmul.f32 1.0, %v1296
        %v1298 = vpack.c.bf16 %v1297, %v1297
        %v1300 = vsel %vm857, %v1045, 0
        %v1303 = vsel %vm857, %v1046, 0
        %v1306 = vsel %vm864, %v1298, 0
        %1308 = vmatprep.subr.bf16.mxu0 0
        %1309 = vmatpush1.bf16.msra.mxu0 0
        %1310 = vmatprep.subr.bf16.mxu0 0
        %1311 = vmatpush1.bf16.msra.mxu0 0
        %1312 = vmatprep.subr.bf16.mxu0 0
        %1313 = vmatpush1.bf16.msra.mxu0 0
        %1314 = vmatprep.subr.bf16.mxu0 0
        %1315 = vmatpush1.bf16.msra.mxu0 0
        %1316 = vmatprep.subr.bf16.mxu0 0
        %1317 = vmatpush1.bf16.msra.mxu0 0
        %1318 = vmatprep.subr.bf16.mxu0 0
        %1319 = vmatpush1.bf16.msra.mxu0 0
        %1320 = vmatprep.subr.bf16.mxu0 0
        %1321 = vmatpush1.bf16.msra.mxu0 0
        %1322 = vmatprep.subr.bf16.mxu0 0
        %1323 = vmatpush1.bf16.msra.mxu0 %v1306
        %1324 = vmatprep.subr.bf16.mxu0 0
        %1325 = vmatpush2.bf16.msra.mxu0 0
        %1326 = vmatprep.subr.bf16.mxu0 0
        %1327 = vmatpush2.bf16.msra.mxu0 0
        %1328 = vmatprep.subr.bf16.mxu0 0
        %1329 = vmatpush2.bf16.msra.mxu0 0
        %1330 = vmatprep.subr.bf16.mxu0 0
        %1331 = vmatpush2.bf16.msra.mxu0 0
        %1332 = vmatprep.subr.bf16.mxu0 0
        %1333 = vmatpush2.bf16.msra.mxu0 0
        %1334 = vmatprep.subr.bf16.mxu0 0
        %1335 = vmatpush2.bf16.msra.mxu0 0
        %1336 = vmatprep.subr.bf16.mxu0 0
        %1337 = vmatpush2.bf16.msra.mxu0 0
        %1338 = vmatprep.subr.bf16.mxu0 0
        %1339 = vmatpush2.bf16.msra.mxu0 0
        %1340 = vmatprep.mubr.bf16.mxu0 0
        %1341 = vmatmul.mubr.bf16.gmra.mxu0 %v1300
        %v1342 = vpop.f32.mrf.mxu0
        %v1343 = vadd.f32 0.0, %v1342
        %v1344 = vpop.f32.mrf.mxu0
        %v1345 = vpop.f32.mrf.mxu0
        %v1346 = vadd.f32 0.0, %v1345
        %v1347 = vpop.f32.mrf.mxu0
        %1348 = vmatprep.mubr.bf16.mxu0 0
        %1349 = vmatmul.mubr.bf16.gmra.mxu0 %v1303
        %v1350 = vpop.f32.mrf.mxu0
        %v1351 = vadd.f32 0.0, %v1350
        %v1352 = vpop.f32.mrf.mxu0
        %v1353 = vpop.f32.mrf.mxu0
        %v1354 = vadd.f32 0.0, %v1353
        %v1355 = vpop.f32.mrf.mxu0
        %1356 = vdwg.mxu0
        %vm1357 = vcmp.ge.f32.partialorder %v1343, 0.0
        %vm1358 = vcmp.ge.f32.partialorder %v1346, 0.0
        %vm1359 = vcmp.ge.f32.partialorder %v1351, 0.0
        %vm1360 = vcmp.ge.f32.partialorder %v1354, 0.0
        %v1361 = vmul.f32 %v1343, 0.2
        %v1362 = vmul.f32 %v1346, 0.2
        %v1363 = vmul.f32 %v1351, 0.2
        %v1364 = vmul.f32 %v1354, 0.2
        %v1365 = vsel %vm1357, %v1343, %v1361
        %v1366 = vsel %vm1358, %v1346, %v1362
        %v1367 = vsel %vm1359, %v1351, %v1363
        %v1368 = vsel %vm1360, %v1354, %v1364
        %v1369 = vld [vmem:[%s15] sm:$0xf]
        %v1370 = vld [vmem:[%s15 + $0x4] sm:$0xf]
        %v1371 = vld [vmem:[%s15 + $0x8] sm:$0xf]
        %v1372 = vld [vmem:[%s15 + $0xc] sm:$0xf]
        %v1373 = vpack.c.bf16 %v1366, %v1365
        %v1374 = vpack.c.bf16 %v1368, %v1367
        %v1375 = vld [vmem:[%s16] sm:$0xff]
        %v1376 = vld [vmem:[%s16 + $0x8] sm:$0xff]
        %v1377 = vld [vmem:[%s16 + $0x10] sm:$0xff]
        %v1378 = vld [vmem:[%s16 + $0x18] sm:$0xff]
        %1380 = vset.pattern.permute.xlu0 0
        %1381 = vperm.xlu0 %1380, %v1375
        %v1382 = vpop.permute.xlu0 %1381
        %1385 = vset.pattern.permute.xlu0 0
        %1386 = vperm.xlu0 %1385, %v1376
        %v1387 = vpop.permute.xlu0 %1386
        %1390 = vset.pattern.permute.xlu0 0
        %1391 = vperm.xlu0 %1390, %v1377
        %v1392 = vpop.permute.xlu0 %1391
        %1395 = vset.pattern.permute.xlu0 0
        %1396 = vperm.xlu0 %1395, %v1378
        %v1397 = vpop.permute.xlu0 %1396
        %v1403 = vunpack.c.l.b16 %v1369
        %v1404 = vunpack.c.l.b16 %v1370
        %v1405 = vunpack.c.l.b16 %v1371
        %v1406 = vunpack.c.l.b16 %v1372
        %v1407 = vpack.c.b16 %v1404, %v1403
        %v1408 = vpack.c.b16 %v1406, %v1405
        %v1410 = vsel %vm969, %v1407, 0
        %v1413 = vsel %vm969, %v1408, 0
        %1415 = vmatprep.subr.bf16.mxu0 0
        %1416 = vmatpush1.bf16.msra.mxu0 0
        %1417 = vmatprep.subr.bf16.mxu0 0
        %1418 = vmatpush1.bf16.msra.mxu0 0
        %1419 = vmatprep.subr.bf16.mxu0 0
        %1420 = vmatpush1.bf16.msra.mxu0 0
        %1421 = vmatprep.subr.bf16.mxu0 0
        %1422 = vmatpush1.bf16.msra.mxu0 0
        %1423 = vmatprep.subr.bf16.mxu0 0
        %1424 = vmatpush1.bf16.msra.mxu0 0
        %1425 = vmatprep.subr.bf16.mxu0 0
        %1426 = vmatpush1.bf16.msra.mxu0 0
        %1427 = vmatprep.subr.bf16.mxu0 0
        %1428 = vmatpush1.bf16.msra.mxu0 %v1374
        %1429 = vmatprep.subr.bf16.mxu0 0
        %1430 = vmatpush1.bf16.msra.mxu0 %v1373
        %1431 = vmatprep.subr.bf16.mxu0 0
        %1432 = vmatpush2.bf16.msra.mxu0 0
        %1433 = vmatprep.subr.bf16.mxu0 0
        %1434 = vmatpush2.bf16.msra.mxu0 0
        %1435 = vmatprep.subr.bf16.mxu0 0
        %1436 = vmatpush2.bf16.msra.mxu0 0
        %1437 = vmatprep.subr.bf16.mxu0 0
        %1438 = vmatpush2.bf16.msra.mxu0 0
        %1439 = vmatprep.subr.bf16.mxu0 0
        %1440 = vmatpush2.bf16.msra.mxu0 0
        %1441 = vmatprep.subr.bf16.mxu0 0
        %1442 = vmatpush2.bf16.msra.mxu0 0
        %1443 = vmatprep.subr.bf16.mxu0 0
        %1444 = vmatpush2.bf16.msra.mxu0 0
        %1445 = vmatprep.subr.bf16.mxu0 0
        %1446 = vmatpush2.bf16.msra.mxu0 0
        %1447 = vmatprep.mubr.bf16.mxu0 0
        %1448 = vmatmul.mubr.bf16.gmra.mxu0 %v1410
        %v1449 = vpop.f32.mrf.mxu0
        %v1450 = vadd.f32 %v1382, %v1449
        %v1451 = vpop.f32.mrf.mxu0
        %v1452 = vpop.f32.mrf.mxu0
        %v1453 = vadd.f32 %v1387, %v1452
        %v1454 = vpop.f32.mrf.mxu0
        %1455 = vmatprep.mubr.bf16.mxu0 0
        %1456 = vmatmul.mubr.bf16.gmra.mxu0 %v1413
        %v1457 = vpop.f32.mrf.mxu0
        %v1458 = vadd.f32 %v1392, %v1457
        %v1459 = vpop.f32.mrf.mxu0
        %v1460 = vpop.f32.mrf.mxu0
        %v1461 = vadd.f32 %v1397, %v1460
        %v1462 = vpop.f32.mrf.mxu0
        %1463 = vdwg.mxu0
        %vm1464 = vcmp.ge.f32.partialorder %v1450, 0.0
        %vm1465 = vcmp.ge.f32.partialorder %v1453, 0.0
        %vm1466 = vcmp.ge.f32.partialorder %v1458, 0.0
        %vm1467 = vcmp.ge.f32.partialorder %v1461, 0.0
        %v1468 = vmul.f32 %v1450, 0.2
        %v1469 = vmul.f32 %v1453, 0.2
        %v1470 = vmul.f32 %v1458, 0.2
        %v1471 = vmul.f32 %v1461, 0.2
        %v1472 = vsel %vm1464, %v1450, %v1468
        %v1473 = vsel %vm1465, %v1453, %v1469
        %v1474 = vsel %vm1466, %v1458, %v1470
        %v1475 = vsel %vm1467, %v1461, %v1471
        %v1476 = vadd.f32 %v840, %v1472
        %v1477 = vadd.f32 %v843, %v1473
        %v1478 = vadd.f32 %v848, %v1474
        %v1479 = vadd.f32 %v851, %v1475
        %v1480 = vld [vmem:[%s17] sm:$0xff]
        %v1481 = vld [vmem:[%s17 + $0x8] sm:$0xff]
        %v1482 = vld [vmem:[%s17 + $0x10] sm:$0xff]
        %v1483 = vld [vmem:[%s17 + $0x18] sm:$0xff]
        %v1484 = vmul.f32 %v1480, %v1476
        %v1485 = vmul.f32 %v1481, %v1477
        %v1486 = vmul.f32 %v1482, %v1478
        %v1487 = vmul.f32 %v1483, %v1479
        %v1488 = vsel %vm857, %v1484, 0.0
        %v1489 = vsel %vm857, %v1485, 0.0
        %v1490 = vadd.f32 %v1488, %v1489
        %v1491 = vsel %vm857, %v1486, 0.0
        %v1492 = vadd.f32 %v1490, %v1491
        %v1493 = vsel %vm857, %v1487, 0.0
        %v1494 = vadd.f32 %v1492, %v1493
        %v1495 = vrot.slane %v1494, 4
        %v1496 = vadd.f32 %v1494, %v1495
        %v1497 = vrot.slane %v1496, 2
        %v1498 = vadd.f32 %v1496, %v1497
        %v1499 = vrot.slane %v1498, 1
        %v1500 = vadd.f32 %v1498, %v1499
        %v1501 = vld [vmem:[%s18] sm:$0x1]
        %v1502 = vadd.f32 %v1500, %v1501
        %vm1503 = vcmask 57344
        %1504 = vst.msk [vmem:[%s628] sm:$0x1] %vm1503, %v1502
        %p1505 = scmp.lt.s32.totalorder %s35, 1
        %s1506 = scalar_select %p1505, %s35, 1
        %s1507 = smul.addr %s1506, 8
        %s1508 = scalar_lea.vmem %s19, %s1507
        %s1509 = sand.u32 %s473, 1
        %s1510 = scalar_lea.sflag [#allocation3], %s1509
        %s1511 = sand.u32 %s473, 1
        %s1512 = scalar_lea.vmem [#allocation2], %s1511
        // Predicated region
        $region97: #{tpu_custom_call.1} parent=95 // pred_check
          %p1513 = pneg %p457
        $region98: #{tpu_custom_call.1} parent=95 // pred_check_branch
          %1515 = sbr.rel (%p1513) target = $region100
        $region99: #{tpu_custom_call.1} parent=95 // pred_region
          _
        $region100: #{tpu_custom_call.1} parent=95 // pred_fallthru
          _
        // Predicated region
        $region101: #{tpu_custom_call.1} parent=95 // pred_check
          %p1516 = pneg %p483
        $region102: #{tpu_custom_call.1} parent=95 // pred_check_branch
          %1518 = sbr.rel (%p1516) target = $region104
        $region103: #{tpu_custom_call.1} parent=95 // pred_region
          %s1520 = ssub.s32 16, 16
          %1521 = vsyncadd %s1510, %s1520
          %s1522 = smul.addr %s35, 16
          %s1523 = scalar_lea.hbm %s20, %s1522
          %s1525 = sshll.u32 %s1512, 4
          %s1526 = int_to_ptr.vmem [resolvable:$true] %s1525
          %1528 = dma.vmem_to_hbm [thread:$0]  %s1526, 16, %s1523, %s1510
        $region104: #{tpu_custom_call.1} parent=95 // pred_fallthru
          _
      $region96: #{tpu_custom_call.1} parent=5 // pred_fallthru
        _
      %p1529 = scmp.le.s32.totalorder 2, %s30
      // Predicated region
      $region105: #{tpu_custom_call.1} parent=5 // pred_check
        %p1530 = pneg %p1529
      $region106: #{tpu_custom_call.1} parent=5 // pred_check_branch
        %1532 = sbr.rel (%p1530) target = $region108
      $region107: #{tpu_custom_call.1} parent=5 // pred_region
        %s1533 = ssub.s32 %s30, 2
        // Predicated region
        $region109: #{tpu_custom_call.1} parent=107 // pred_check
          %p1534 = pneg %p463
        $region110: #{tpu_custom_call.1} parent=107 // pred_check_branch
          %1536 = sbr.rel (%p1534) target = $region112
        $region111: #{tpu_custom_call.1} parent=107 // pred_region
          %p1537 = scmp.lt.s32.totalorder %s36, 1
          %s1538 = scalar_select %p1537, %s36, 1
          %s1539 = smul.addr %s1538, 8
          %s1540 = scalar_lea.vmem %s19, %s1539
        $region112: #{tpu_custom_call.1} parent=107 // pred_fallthru
          _
        // Predicated region
        $region113: #{tpu_custom_call.1} parent=107 // pred_check
          %p1541 = pneg %p489
        $region114: #{tpu_custom_call.1} parent=107 // pred_check_branch
          %1543 = sbr.rel (%p1541) target = $region116
        $region115: #{tpu_custom_call.1} parent=107 // pred_region
          %s1544 = sand.u32 %s474, 1
          %s1545 = scalar_lea.sflag [#allocation3], %s1544
          %s1546 = sand.u32 %s474, 1
          %s1547 = scalar_lea.vmem [#allocation2], %s1546
          %1548 = dma.done %s1545, 16
        $region116: #{tpu_custom_call.1} parent=107 // pred_fallthru
          _
      $region108: #{tpu_custom_call.1} parent=5 // pred_fallthru
        _
    $region6: #{tpu_custom_call.1} parent=1 // loop_footer
      %s34 = sadd.s32 1, %s30
    $region7: #{tpu_custom_call.1} parent=1 // loop_footer_branch
      %29 = sbr.rel target = $region3
    $region8: #{tpu_custom_call.1} parent=1 // loop_exit
      _
    %1549 = vsyncpa [#allocation3], 1
    %s1550 = scalar_lea.sflag [#allocation3], 1
    %1551 = vsyncpa %s1550, 1

// kernel: tpu_custom_call.1
$region0: #{tpu_custom_call.1}
  #allocation0 [shape = 'u32[]', space=smem, size = 0x4, offset = 0x4, fixed_abs, tag = 'smem constant byte address 0x4 - core index']
  #allocation1 [shape = 'u32[144,128]{1,0:T(1,128)}', space=vmem, size = 0x12000, scoped, tag = 'internal scratch']
  %s0 = inlined_call_operand.vmem [shape: bf16[2,64,128], index: 0, kind: input, shape index: {}]
  %s1 = inlined_call_operand.vmem [shape: bf16[40,64], index: 1, kind: input, shape index: {}]
  %s2 = inlined_call_operand.vmem [shape: f32[40,1], index: 2, kind: input, shape index: {}]
  %s3 = inlined_call_operand.vmem [shape: bf16[8,8], index: 3, kind: input, shape index: {}]
  %s4 = inlined_call_operand.vmem [shape: bf16[32,32], index: 4, kind: input, shape index: {}]
  %s5 = inlined_call_operand.vmem [shape: f32[32,1], index: 5, kind: input, shape index: {}]
  %s6 = inlined_call_operand.vmem [shape: bf16[32,32], index: 6, kind: input, shape index: {}]
  %s7 = inlined_call_operand.vmem [shape: f32[32,1], index: 7, kind: input, shape index: {}]
  %s8 = inlined_call_operand.vmem [shape: f32[32,1], index: 8, kind: input, shape index: {}]
  %s9 = inlined_call_operand.vmem [shape: f32[32,1], index: 9, kind: input, shape index: {}]
  %s10 = inlined_call_operand.vmem [shape: f32[32,1], index: 10, kind: input, shape index: {}]
  %s11 = inlined_call_operand.vmem [shape: f32[32,1], index: 11, kind: input, shape index: {}]
  %s12 = inlined_call_operand.vmem [shape: bf16[8,32], index: 12, kind: input, shape index: {}]
  %s13 = inlined_call_operand.vmem [shape: bf16[8,32], index: 13, kind: input, shape index: {}]
  %s14 = inlined_call_operand.vmem [shape: f32[8,1], index: 14, kind: input, shape index: {}]
  %s15 = inlined_call_operand.vmem [shape: bf16[32,32], index: 15, kind: input, shape index: {}]
  %s16 = inlined_call_operand.vmem [shape: f32[32,1], index: 16, kind: input, shape index: {}]
  %s17 = inlined_call_operand.vmem [shape: f32[32,8], index: 17, kind: input, shape index: {}]
  %s18 = inlined_call_operand.vmem [shape: f32[1,8], index: 18, kind: input, shape index: {}]
  %s19 = inlined_call_operand.vmem [shape: f32[2,8,1], index: 19, kind: output, shape index: {0}]
  %s20 = inlined_call_operand.hbm [shape: f32[2,1,8], index: 20, kind: output, shape index: {1}]
  %21 = xla_tuple %s19, %s20
  %s22 = sld [smem:[#allocation0]]
  $region117: #{tpu_custom_call.1} parent=0
    _
  %s24 = ssub.s32 1, %s22
  %s25 = scalar_select 0, %s24, %s22
  $region1: #{tpu_custom_call.1} parent=0
    #allocation2 [shape = 'u8[1024]{0}', space=vmem, size = 0x400, scoped, tag = 'output window, operand 1']
    #allocation3 [shape = 's32[2]{0}', space=sflag, size = 0x8, scoped, tag = 'scoped memory for tpu_custom_call.1']
    %26 = vsyncpa [#allocation3], 0
    %s27 = scalar_lea.sflag [#allocation3], 1
    %28 = vsyncpa %s27, 0
    loop: start=0, step=1, limit=4
    $region2: #{tpu_custom_call.1} parent=1 // loop_pre_header
      _
    $region3: #{tpu_custom_call.1} parent=1 // loop_header
      %s30 = sphi 0, %s34
      %p31 = scmp.ge.s32.totalorder %s30, 4
      %s40 = sphi 0, %s42
      %s43 = sphi 0, %s40
      %s44 = sphi 0, %s43
      %s60 = sphi 0, %s44
      %s64 = sphi 0, %s64
      %s66 = sphi 0, %s64
      %s67 = sphi 0, %s66
      %s81 = sphi 0, %s67
      %s85 = sphi 0, %s85
      %s87 = sphi 0, %s85
      %s88 = sphi 0, %s87
      %s102 = sphi 0, %s88
      %s106 = sphi 0, %s106
      %s108 = sphi 0, %s106
      %s109 = sphi 0, %s108
      %s123 = sphi 0, %s109
      %s127 = sphi 0, %s127
      %s129 = sphi 0, %s127
      %s130 = sphi 0, %s129
      %s144 = sphi 0, %s130
      %s148 = sphi 0, %s148
      %s150 = sphi 0, %s148
      %s151 = sphi 0, %s150
      %s165 = sphi 0, %s151
      %s169 = sphi 0, %s169
      %s171 = sphi 0, %s169
      %s172 = sphi 0, %s171
      %s186 = sphi 0, %s172
      %s190 = sphi 0, %s190
      %s192 = sphi 0, %s190
      %s193 = sphi 0, %s192
      %s207 = sphi 0, %s193
      %s211 = sphi 0, %s211
      %s213 = sphi 0, %s211
      %s214 = sphi 0, %s213
      %s228 = sphi 0, %s214
      %s232 = sphi 0, %s232
      %s234 = sphi 0, %s232
      %s235 = sphi 0, %s234
      %s249 = sphi 0, %s235
      %s253 = sphi 0, %s253
      %s255 = sphi 0, %s253
      %s256 = sphi 0, %s255
      %s270 = sphi 0, %s256
      %s274 = sphi 0, %s274
      %s276 = sphi 0, %s274
      %s277 = sphi 0, %s276
      %s291 = sphi 0, %s277
      %s295 = sphi 0, %s295
      %s297 = sphi 0, %s295
      %s298 = sphi 0, %s297
      %s312 = sphi 0, %s298
      %s316 = sphi 0, %s316
      %s318 = sphi 0, %s316
      %s319 = sphi 0, %s318
      %s333 = sphi 0, %s319
      %s337 = sphi 0, %s337
      %s339 = sphi 0, %s337
      %s340 = sphi 0, %s339
      %s354 = sphi 0, %s340
      %s358 = sphi 0, %s358
      %s360 = sphi 0, %s358
      %s361 = sphi 0, %s360
      %s375 = sphi 0, %s361
      %s379 = sphi 0, %s379
      %s381 = sphi 0, %s379
      %s382 = sphi 0, %s381
      %s396 = sphi 0, %s382
      %s400 = sphi 0, %s400
      %s402 = sphi 0, %s400
      %s403 = sphi 0, %s402
      %s417 = sphi 0, %s403
      %s421 = sphi 0, %s421
      %s423 = sphi 0, %s421
      %s424 = sphi 0, %s423
      %s438 = sphi 0, %s424
      %s444 = sphi 0, %s446
      %s447 = sphi 0, %s444
      %s448 = sphi 0, %s447
      %s464 = sphi 0, %s448
      %s470 = sphi 0, %s472
      %s473 = sphi 0, %s470
      %s474 = sphi 0, %s473
      %s490 = sphi 0, %s474
    $region4: #{tpu_custom_call.1} parent=1 // loop_header_branch
      %33 = sbr.rel (%p31) target = $region8
    $region5: #{tpu_custom_call.1} parent=1 // loop_body
      %s35 = ssub.s32 %s30, 1
      %s36 = ssub.s32 %s30, 2
      %s37 = sadd.s32 %s30, 1
      %s38 = ssub.s32 %s30, %s37
      %p39 = scmp.eq.s32.totalorder %s38, 0
      %s41 = sadd.s32 %s40, 1
      %s42 = scalar_select %p39, %s40, %s41
      %p45 = pneg %p39
      %p46 = scmp.eq.s32.totalorder %s30, 1
      %p47 = por %p45, %p46
      %p48 = scmp.ne.s32.totalorder %s40, %s43
      %p49 = scmp.eq.s32.totalorder %s30, 0
      %p50 = por %p48, %p49
      %p51 = scmp.ne.s32.totalorder %s40, %s43
      %p52 = scmp.eq.s32.totalorder %s35, 1
      %p53 = por %p51, %p52
      %p54 = scmp.ne.s32.totalorder %s43, %s44
      %p55 = scmp.eq.s32.totalorder %s35, 0
      %p56 = por %p54, %p55
      %p57 = scmp.ne.s32.totalorder %s43, %s44
      %p58 = scmp.eq.s32.totalorder %s36, 1
      %p59 = por %p57, %p58
      %p61 = scmp.ne.s32.totalorder %s44, %s60
      %p62 = scmp.eq.s32.totalorder %s36, 0
      %p63 = por %p61, %p62
      %s65 = sadd.s32 %s64, 1
      %p68 = scmp.eq.s32.totalorder %s30, 1
      %p69 = scmp.ne.s32.totalorder %s64, %s66
      %p70 = scmp.eq.s32.totalorder %s30, 0
      %p71 = por %p69, %p70
      %p72 = scmp.ne.s32.totalorder %s64, %s66
      %p73 = scmp.eq.s32.totalorder %s35, 1
      %p74 = por %p72, %p73
      %p75 = scmp.ne.s32.totalorder %s66, %s67
      %p76 = scmp.eq.s32.totalorder %s35, 0
      %p77 = por %p75, %p76
      %p78 = scmp.ne.s32.totalorder %s66, %s67
      %p79 = scmp.eq.s32.totalorder %s36, 1
      %p80 = por %p78, %p79
      %p82 = scmp.ne.s32.totalorder %s67, %s81
      %p83 = scmp.eq.s32.totalorder %s36, 0
      %p84 = por %p82, %p83
      %s86 = sadd.s32 %s85, 1
      %p89 = scmp.eq.s32.totalorder %s30, 1
      %p90 = scmp.ne.s32.totalorder %s85, %s87
      %p91 = scmp.eq.s32.totalorder %s30, 0
      %p92 = por %p90, %p91
      %p93 = scmp.ne.s32.totalorder %s85, %s87
      %p94 = scmp.eq.s32.totalorder %s35, 1
      %p95 = por %p93, %p94
      %p96 = scmp.ne.s32.totalorder %s87, %s88
      %p97 = scmp.eq.s32.totalorder %s35, 0
      %p98 = por %p96, %p97
      %p99 = scmp.ne.s32.totalorder %s87, %s88
      %p100 = scmp.eq.s32.totalorder %s36, 1
      %p101 = por %p99, %p100
      %p103 = scmp.ne.s32.totalorder %s88, %s102
      %p104 = scmp.eq.s32.totalorder %s36, 0
      %p105 = por %p103, %p104
      %s107 = sadd.s32 %s106, 1
      %p110 = scmp.eq.s32.totalorder %s30, 1
      %p111 = scmp.ne.s32.totalorder %s106, %s108
      %p112 = scmp.eq.s32.totalorder %s30, 0
      %p113 = por %p111, %p112
      %p114 = scmp.ne.s32.totalorder %s106, %s108
      %p115 = scmp.eq.s32.totalorder %s35, 1
      %p116 = por %p114, %p115
      %p117 = scmp.ne.s32.totalorder %s108, %s109
      %p118 = scmp.eq.s32.totalorder %s35, 0
      %p119 = por %p117, %p118
      %p120 = scmp.ne.s32.totalorder %s108, %s109
      %p121 = scmp.eq.s32.totalorder %s36, 1
      %p122 = por %p120, %p121
      %p124 = scmp.ne.s32.totalorder %s109, %s123
      %p125 = scmp.eq.s32.totalorder %s36, 0
      %p126 = por %p124, %p125
      %s128 = sadd.s32 %s127, 1
      %p131 = scmp.eq.s32.totalorder %s30, 1
      %p132 = scmp.ne.s32.totalorder %s127, %s129
      %p133 = scmp.eq.s32.totalorder %s30, 0
      %p134 = por %p132, %p133
      %p135 = scmp.ne.s32.totalorder %s127, %s129
      %p136 = scmp.eq.s32.totalorder %s35, 1
      %p137 = por %p135, %p136
      %p138 = scmp.ne.s32.totalorder %s129, %s130
      %p139 = scmp.eq.s32.totalorder %s35, 0
      %p140 = por %p138, %p139
      %p141 = scmp.ne.s32.totalorder %s129, %s130
      %p142 = scmp.eq.s32.totalorder %s36, 1
      %p143 = por %p141, %p142
      %p145 = scmp.ne.s32.totalorder %s130, %s144
      %p146 = scmp.eq.s32.totalorder %s36, 0
      %p147 = por %p145, %p146
      %s149 = sadd.s32 %s148, 1
      %p152 = scmp.eq.s32.totalorder %s30, 1
      %p153 = scmp.ne.s32.totalorder %s148, %s150
      %p154 = scmp.eq.s32.totalorder %s30, 0
      %p155 = por %p153, %p154
      %p156 = scmp.ne.s32.totalorder %s148, %s150
      %p157 = scmp.eq.s32.totalorder %s35, 1
      %p158 = por %p156, %p157
      %p159 = scmp.ne.s32.totalorder %s150, %s151
      %p160 = scmp.eq.s32.totalorder %s35, 0
      %p161 = por %p159, %p160
      %p162 = scmp.ne.s32.totalorder %s150, %s151
      %p163 = scmp.eq.s32.totalorder %s36, 1
      %p164 = por %p162, %p163
      %p166 = scmp.ne.s32.totalorder %s151, %s165
      %p167 = scmp.eq.s32.totalorder %s36, 0
      %p168 = por %p166, %p167
      %s170 = sadd.s32 %s169, 1
      %p173 = scmp.eq.s32.totalorder %s30, 1
      %p174 = scmp.ne.s32.totalorder %s169, %s171
      %p175 = scmp.eq.s32.totalorder %s30, 0
      %p176 = por %p174, %p175
      %p177 = scmp.ne.s32.totalorder %s169, %s171
      %p178 = scmp.eq.s32.totalorder %s35, 1
      %p179 = por %p177, %p178
      %p180 = scmp.ne.s32.totalorder %s171, %s172
      %p181 = scmp.eq.s32.totalorder %s35, 0
      %p182 = por %p180, %p181
      %p183 = scmp.ne.s32.totalorder %s171, %s172
      %p184 = scmp.eq.s32.totalorder %s36, 1
      %p185 = por %p183, %p184
      %p187 = scmp.ne.s32.totalorder %s172, %s186
      %p188 = scmp.eq.s32.totalorder %s36, 0
      %p189 = por %p187, %p188
      %s191 = sadd.s32 %s190, 1
      %p194 = scmp.eq.s32.totalorder %s30, 1
      %p195 = scmp.ne.s32.totalorder %s190, %s192
      %p196 = scmp.eq.s32.totalorder %s30, 0
      %p197 = por %p195, %p196
      %p198 = scmp.ne.s32.totalorder %s190, %s192
      %p199 = scmp.eq.s32.totalorder %s35, 1
      %p200 = por %p198, %p199
      %p201 = scmp.ne.s32.totalorder %s192, %s193
      %p202 = scmp.eq.s32.totalorder %s35, 0
      %p203 = por %p201, %p202
      %p204 = scmp.ne.s32.totalorder %s192, %s193
      %p205 = scmp.eq.s32.totalorder %s36, 1
      %p206 = por %p204, %p205
      %p208 = scmp.ne.s32.totalorder %s193, %s207
      %p209 = scmp.eq.s32.totalorder %s36, 0
      %p210 = por %p208, %p209
      %s212 = sadd.s32 %s211, 1
      %p215 = scmp.eq.s32.totalorder %s30, 1
      %p216 = scmp.ne.s32.totalorder %s211, %s213
      %p217 = scmp.eq.s32.totalorder %s30, 0
      %p218 = por %p216, %p217
      %p219 = scmp.ne.s32.totalorder %s211, %s213
      %p220 = scmp.eq.s32.totalorder %s35, 1
      %p221 = por %p219, %p220
      %p222 = scmp.ne.s32.totalorder %s213, %s214
      %p223 = scmp.eq.s32.totalorder %s35, 0
      %p224 = por %p222, %p223
      %p225 = scmp.ne.s32.totalorder %s213, %s214
      %p226 = scmp.eq.s32.totalorder %s36, 1
      %p227 = por %p225, %p226
      %p229 = scmp.ne.s32.totalorder %s214, %s228
      %p230 = scmp.eq.s32.totalorder %s36, 0
      %p231 = por %p229, %p230
      %s233 = sadd.s32 %s232, 1
      %p236 = scmp.eq.s32.totalorder %s30, 1
      %p237 = scmp.ne.s32.totalorder %s232, %s234
      %p238 = scmp.eq.s32.totalorder %s30, 0
      %p239 = por %p237, %p238
      %p240 = scmp.ne.s32.totalorder %s232, %s234
      %p241 = scmp.eq.s32.totalorder %s35, 1
      %p242 = por %p240, %p241
      %p243 = scmp.ne.s32.totalorder %s234, %s235
      %p244 = scmp.eq.s32.totalorder %s35, 0
      %p245 = por %p243, %p244
      %p246 = scmp.ne.s32.totalorder %s234, %s235
      %p247 = scmp.eq.s32.totalorder %s36, 1
      %p248 = por %p246, %p247
      %p250 = scmp.ne.s32.totalorder %s235, %s249
      %p251 = scmp.eq.s32.totalorder %s36, 0
      %p252 = por %p250, %p251
      %s254 = sadd.s32 %s253, 1
      %p257 = scmp.eq.s32.totalorder %s30, 1
      %p258 = scmp.ne.s32.totalorder %s253, %s255
      %p259 = scmp.eq.s32.totalorder %s30, 0
      %p260 = por %p258, %p259
      %p261 = scmp.ne.s32.totalorder %s253, %s255
      %p262 = scmp.eq.s32.totalorder %s35, 1
      %p263 = por %p261, %p262
      %p264 = scmp.ne.s32.totalorder %s255, %s256
      %p265 = scmp.eq.s32.totalorder %s35, 0
      %p266 = por %p264, %p265
      %p267 = scmp.ne.s32.totalorder %s255, %s256
      %p268 = scmp.eq.s32.totalorder %s36, 1
      %p269 = por %p267, %p268
      %p271 = scmp.ne.s32.totalorder %s256, %s270
      %p272 = scmp.eq.s32.totalorder %s36, 0
      %p273 = por %p271, %p272
      %s275 = sadd.s32 %s274, 1
      %p278 = scmp.eq.s32.totalorder %s30, 1
      %p279 = scmp.ne.s32.totalorder %s274, %s276
      %p280 = scmp.eq.s32.totalorder %s30, 0
      %p281 = por %p279, %p280
      %p282 = scmp.ne.s32.totalorder %s274, %s276
      %p283 = scmp.eq.s32.totalorder %s35, 1
      %p284 = por %p282, %p283
      %p285 = scmp.ne.s32.totalorder %s276, %s277
      %p286 = scmp.eq.s32.totalorder %s35, 0
      %p287 = por %p285, %p286
      %p288 = scmp.ne.s32.totalorder %s276, %s277
      %p289 = scmp.eq.s32.totalorder %s36, 1
      %p290 = por %p288, %p289
      %p292 = scmp.ne.s32.totalorder %s277, %s291
      %p293 = scmp.eq.s32.totalorder %s36, 0
      %p294 = por %p292, %p293
      %s296 = sadd.s32 %s295, 1
      %p299 = scmp.eq.s32.totalorder %s30, 1
      %p300 = scmp.ne.s32.totalorder %s295, %s297
      %p301 = scmp.eq.s32.totalorder %s30, 0
      %p302 = por %p300, %p301
      %p303 = scmp.ne.s32.totalorder %s295, %s297
      %p304 = scmp.eq.s32.totalorder %s35, 1
      %p305 = por %p303, %p304
      %p306 = scmp.ne.s32.totalorder %s297, %s298
      %p307 = scmp.eq.s32.totalorder %s35, 0
      %p308 = por %p306, %p307
      %p309 = scmp.ne.s32.totalorder %s297, %s298
      %p310 = scmp.eq.s32.totalorder %s36, 1
      %p311 = por %p309, %p310
      %p313 = scmp.ne.s32.totalorder %s298, %s312
      %p314 = scmp.eq.s32.totalorder %s36, 0
      %p315 = por %p313, %p314
      %s317 = sadd.s32 %s316, 1
      %p320 = scmp.eq.s32.totalorder %s30, 1
      %p321 = scmp.ne.s32.totalorder %s316, %s318
      %p322 = scmp.eq.s32.totalorder %s30, 0
      %p323 = por %p321, %p322
      %p324 = scmp.ne.s32.totalorder %s316, %s318
      %p325 = scmp.eq.s32.totalorder %s35, 1
      %p326 = por %p324, %p325
      %p327 = scmp.ne.s32.totalorder %s318, %s319
      %p328 = scmp.eq.s32.totalorder %s35, 0
      %p329 = por %p327, %p328
      %p330 = scmp.ne.s32.totalorder %s318, %s319
      %p331 = scmp.eq.s32.totalorder %s36, 1
      %p332 = por %p330, %p331
      %p334 = scmp.ne.s32.totalorder %s319, %s333
      %p335 = scmp.eq.s32.totalorder %s36, 0
      %p336 = por %p334, %p335
      %s338 = sadd.s32 %s337, 1
      %p341 = scmp.eq.s32.totalorder %s30, 1
      %p342 = scmp.ne.s32.totalorder %s337, %s339
      %p343 = scmp.eq.s32.totalorder %s30, 0
      %p344 = por %p342, %p343
      %p345 = scmp.ne.s32.totalorder %s337, %s339
      %p346 = scmp.eq.s32.totalorder %s35, 1
      %p347 = por %p345, %p346
      %p348 = scmp.ne.s32.totalorder %s339, %s340
      %p349 = scmp.eq.s32.totalorder %s35, 0
      %p350 = por %p348, %p349
      %p351 = scmp.ne.s32.totalorder %s339, %s340
      %p352 = scmp.eq.s32.totalorder %s36, 1
      %p353 = por %p351, %p352
      %p355 = scmp.ne.s32.totalorder %s340, %s354
      %p356 = scmp.eq.s32.totalorder %s36, 0
      %p357 = por %p355, %p356
      %s359 = sadd.s32 %s358, 1
      %p362 = scmp.eq.s32.totalorder %s30, 1
      %p363 = scmp.ne.s32.totalorder %s358, %s360
      %p364 = scmp.eq.s32.totalorder %s30, 0
      %p365 = por %p363, %p364
      %p366 = scmp.ne.s32.totalorder %s358, %s360
      %p367 = scmp.eq.s32.totalorder %s35, 1
      %p368 = por %p366, %p367
      %p369 = scmp.ne.s32.totalorder %s360, %s361
      %p370 = scmp.eq.s32.totalorder %s35, 0
      %p371 = por %p369, %p370
      %p372 = scmp.ne.s32.totalorder %s360, %s361
      %p373 = scmp.eq.s32.totalorder %s36, 1
      %p374 = por %p372, %p373
      %p376 = scmp.ne.s32.totalorder %s361, %s375
      %p377 = scmp.eq.s32.totalorder %s36, 0
      %p378 = por %p376, %p377
      %s380 = sadd.s32 %s379, 1
      %p383 = scmp.eq.s32.totalorder %s30, 1
      %p384 = scmp.ne.s32.totalorder %s379, %s381
      %p385 = scmp.eq.s32.totalorder %s30, 0
      %p386 = por %p384, %p385
      %p387 = scmp.ne.s32.totalorder %s379, %s381
      %p388 = scmp.eq.s32.totalorder %s35, 1
      %p389 = por %p387, %p388
      %p390 = scmp.ne.s32.totalorder %s381, %s382
      %p391 = scmp.eq.s32.totalorder %s35, 0
      %p392 = por %p390, %p391
      %p393 = scmp.ne.s32.totalorder %s381, %s382
      %p394 = scmp.eq.s32.totalorder %s36, 1
      %p395 = por %p393, %p394
      %p397 = scmp.ne.s32.totalorder %s382, %s396
      %p398 = scmp.eq.s32.totalorder %s36, 0
      %p399 = por %p397, %p398
      %s401 = sadd.s32 %s400, 1
      %p404 = scmp.eq.s32.totalorder %s30, 1
      %p405 = scmp.ne.s32.totalorder %s400, %s402
      %p406 = scmp.eq.s32.totalorder %s30, 0
      %p407 = por %p405, %p406
      %p408 = scmp.ne.s32.totalorder %s400, %s402
      %p409 = scmp.eq.s32.totalorder %s35, 1
      %p410 = por %p408, %p409
      %p411 = scmp.ne.s32.totalorder %s402, %s403
      %p412 = scmp.eq.s32.totalorder %s35, 0
      %p413 = por %p411, %p412
      %p414 = scmp.ne.s32.totalorder %s402, %s403
      %p415 = scmp.eq.s32.totalorder %s36, 1
      %p416 = por %p414, %p415
      %p418 = scmp.ne.s32.totalorder %s403, %s417
      %p419 = scmp.eq.s32.totalorder %s36, 0
      %p420 = por %p418, %p419
      %s422 = sadd.s32 %s421, 1
      %p425 = scmp.eq.s32.totalorder %s30, 1
      %p426 = scmp.ne.s32.totalorder %s421, %s423
      %p427 = scmp.eq.s32.totalorder %s30, 0
      %p428 = por %p426, %p427
      %p429 = scmp.ne.s32.totalorder %s421, %s423
      %p430 = scmp.eq.s32.totalorder %s35, 1
      %p431 = por %p429, %p430
      %p432 = scmp.ne.s32.totalorder %s423, %s424
      %p433 = scmp.eq.s32.totalorder %s35, 0
      %p434 = por %p432, %p433
      %p435 = scmp.ne.s32.totalorder %s423, %s424
      %p436 = scmp.eq.s32.totalorder %s36, 1
      %p437 = por %p435, %p436
      %p439 = scmp.ne.s32.totalorder %s424, %s438
      %p440 = scmp.eq.s32.totalorder %s36, 0
      %p441 = por %p439, %p440
      %s442 = ssub.s32 %s30, %s37
      %p443 = scmp.eq.s32.totalorder %s442, 0
      %s445 = sadd.s32 %s444, 1
      %s446 = scalar_select %p443, %s444, %s445
      %p449 = pneg %p443
      %p450 = scmp.eq.s32.totalorder %s30, 1
      %p451 = por %p449, %p450
      %p452 = scmp.ne.s32.totalorder %s444, %s447
      %p453 = scmp.eq.s32.totalorder %s30, 0
      %p454 = por %p452, %p453
      %p455 = scmp.ne.s32.totalorder %s444, %s447
      %p456 = scmp.eq.s32.totalorder %s35, 1
      %p457 = por %p455, %p456
      %p458 = scmp.ne.s32.totalorder %s447, %s448
      %p459 = scmp.eq.s32.totalorder %s35, 0
      %p460 = por %p458, %p459
      %p461 = scmp.ne.s32.totalorder %s447, %s448
      %p462 = scmp.eq.s32.totalorder %s36, 1
      %p463 = por %p461, %p462
      %p465 = scmp.ne.s32.totalorder %s448, %s464
      %p466 = scmp.eq.s32.totalorder %s36, 0
      %p467 = por %p465, %p466
      %s468 = ssub.s32 %s30, %s37
      %p469 = scmp.eq.s32.totalorder %s468, 0
      %s471 = sadd.s32 %s470, 1
      %s472 = scalar_select %p469, %s470, %s471
      %p475 = pneg %p469
      %p476 = scmp.eq.s32.totalorder %s30, 1
      %p477 = por %p475, %p476
      %p478 = scmp.ne.s32.totalorder %s470, %s473
      %p479 = scmp.eq.s32.totalorder %s30, 0
      %p480 = por %p478, %p479
      %p481 = scmp.ne.s32.totalorder %s470, %s473
      %p482 = scmp.eq.s32.totalorder %s35, 1
      %p483 = por %p481, %p482
      %p484 = scmp.ne.s32.totalorder %s473, %s474
      %p485 = scmp.eq.s32.totalorder %s35, 0
      %p486 = por %p484, %p485
      %p487 = scmp.ne.s32.totalorder %s473, %s474
      %p488 = scmp.eq.s32.totalorder %s36, 1
      %p489 = por %p487, %p488
      %p491 = scmp.ne.s32.totalorder %s474, %s490
      %p492 = scmp.eq.s32.totalorder %s36, 0
      %p493 = por %p491, %p492
      %p494 = scmp.le.s32.totalorder 1, %s30
      %p495 = scmp.lt.s32.totalorder %s30, 3
      %p496 = pnand %p494, %p495
      %p497 = pneg %p496
      // Predicated region
      $region9: #{tpu_custom_call.1} parent=5 // pred_check
        _
      $region10: #{tpu_custom_call.1} parent=5 // pred_check_branch
        %499 = sbr.rel (%p496) target = $region12
      $region11: #{tpu_custom_call.1} parent=5 // pred_region
        %s500 = ssub.s32 %s30, 1
        // Predicated region
        $region13: #{tpu_custom_call.1} parent=11 // pred_check
          %p501 = pneg %p77
        $region14: #{tpu_custom_call.1} parent=11 // pred_check_branch
          %503 = sbr.rel (%p501) target = $region16
        $region15: #{tpu_custom_call.1} parent=11 // pred_region
          _
        $region16: #{tpu_custom_call.1} parent=11 // pred_fallthru
          _
        // Predicated region
        $region17: #{tpu_custom_call.1} parent=11 // pred_check
          %p504 = pneg %p98
        $region18: #{tpu_custom_call.1} parent=11 // pred_check_branch
          %506 = sbr.rel (%p504) target = $region20
        $region19: #{tpu_custom_call.1} parent=11 // pred_region
          _
        $region20: #{tpu_custom_call.1} parent=11 // pred_fallthru
          _
        // Predicated region
        $region21: #{tpu_custom_call.1} parent=11 // pred_check
          %p507 = pneg %p119
        $region22: #{tpu_custom_call.1} parent=11 // pred_check_branch
          %509 = sbr.rel (%p507) target = $region24
        $region23: #{tpu_custom_call.1} parent=11 // pred_region
          _
        $region24: #{tpu_custom_call.1} parent=11 // pred_fallthru
          _
        // Predicated region
        $region25: #{tpu_custom_call.1} parent=11 // pred_check
          %p510 = pneg %p140
        $region26: #{tpu_custom_call.1} parent=11 // pred_check_branch
          %512 = sbr.rel (%p510) target = $region28
        $region27: #{tpu_custom_call.1} parent=11 // pred_region
          _
        $region28: #{tpu_custom_call.1} parent=11 // pred_fallthru
          _
        // Predicated region
        $region29: #{tpu_custom_call.1} parent=11 // pred_check
          %p513 = pneg %p161
        $region30: #{tpu_custom_call.1} parent=11 // pred_check_branch
          %515 = sbr.rel (%p513) target = $region32
        $region31: #{tpu_custom_call.1} parent=11 // pred_region
          _
        $region32: #{tpu_custom_call.1} parent=11 // pred_fallthru
          _
        // Predicated region
        $region33: #{tpu_custom_call.1} parent=11 // pred_check
          %p516 = pneg %p182
        $region34: #{tpu_custom_call.1} parent=11 // pred_check_branch
          %518 = sbr.rel (%p516) target = $region36
        $region35: #{tpu_custom_call.1} parent=11 // pred_region
          _
        $region36: #{tpu_custom_call.1} parent=11 // pred_fallthru
          _
        // Predicated region
        $region37: #{tpu_custom_call.1} parent=11 // pred_check
          %p519 = pneg %p203
        $region38: #{tpu_custom_call.1} parent=11 // pred_check_branch
          %521 = sbr.rel (%p519) target = $region40
        $region39: #{tpu_custom_call.1} parent=11 // pred_region
          _
        $region40: #{tpu_custom_call.1} parent=11 // pred_fallthru
          _
        // Predicated region
        $region41: #{tpu_custom_call.1} parent=11 // pred_check
          %p522 = pneg %p224
        $region42: #{tpu_custom_call.1} parent=11 // pred_check_branch
          %524 = sbr.rel (%p522) target = $region44
        $region43: #{tpu_custom_call.1} parent=11 // pred_region
          _
        $region44: #{tpu_custom_call.1} parent=11 // pred_fallthru
          _
        // Predicated region
        $region45: #{tpu_custom_call.1} parent=11 // pred_check
          %p525 = pneg %p245
        $region46: #{tpu_custom_call.1} parent=11 // pred_check_branch
          %527 = sbr.rel (%p525) target = $region48
        $region47: #{tpu_custom_call.1} parent=11 // pred_region
          _
        $region48: #{tpu_custom_call.1} parent=11 // pred_fallthru
          _
        // Predicated region
        $region49: #{tpu_custom_call.1} parent=11 // pred_check
          %p528 = pneg %p266
        $region50: #{tpu_custom_call.1} parent=11 // pred_check_branch
          %530 = sbr.rel (%p528) target = $region52
        $region51: #{tpu_custom_call.1} parent=11 // pred_region
          _
        $region52: #{tpu_custom_call.1} parent=11 // pred_fallthru
          _
        // Predicated region
        $region53: #{tpu_custom_call.1} parent=11 // pred_check
          %p531 = pneg %p287
        $region54: #{tpu_custom_call.1} parent=11 // pred_check_branch
          %533 = sbr.rel (%p531) target = $region56
        $region55: #{tpu_custom_call.1} parent=11 // pred_region
          _
        $region56: #{tpu_custom_call.1} parent=11 // pred_fallthru
          _
        // Predicated region
        $region57: #{tpu_custom_call.1} parent=11 // pred_check
          %p534 = pneg %p308
        $region58: #{tpu_custom_call.1} parent=11 // pred_check_branch
          %536 = sbr.rel (%p534) target = $region60
        $region59: #{tpu_custom_call.1} parent=11 // pred_region
          _
        $region60: #{tpu_custom_call.1} parent=11 // pred_fallthru
          _
        // Predicated region
        $region61: #{tpu_custom_call.1} parent=11 // pred_check
          %p537 = pneg %p329
        $region62: #{tpu_custom_call.1} parent=11 // pred_check_branch
          %539 = sbr.rel (%p537) target = $region64
        $region63: #{tpu_custom_call.1} parent=11 // pred_region
          _
        $region64: #{tpu_custom_call.1} parent=11 // pred_fallthru
          _
        // Predicated region
        $region65: #{tpu_custom_call.1} parent=11 // pred_check
          %p540 = pneg %p350
        $region66: #{tpu_custom_call.1} parent=11 // pred_check_branch
          %542 = sbr.rel (%p540) target = $region68
        $region67: #{tpu_custom_call.1} parent=11 // pred_region
          _
        $region68: #{tpu_custom_call.1} parent=11 // pred_fallthru
          _
        // Predicated region
        $region69: #{tpu_custom_call.1} parent=11 // pred_check
          %p543 = pneg %p371
        $region70: #{tpu_custom_call.1} parent=11 // pred_check_branch
          %545 = sbr.rel (%p543) target = $region72
        $region71: #{tpu_custom_call.1} parent=11 // pred_region
          _
        $region72: #{tpu_custom_call.1} parent=11 // pred_fallthru
          _
        // Predicated region
        $region73: #{tpu_custom_call.1} parent=11 // pred_check
          %p546 = pneg %p392
        $region74: #{tpu_custom_call.1} parent=11 // pred_check_branch
          %548 = sbr.rel (%p546) target = $region76
        $region75: #{tpu_custom_call.1} parent=11 // pred_region
          _
        $region76: #{tpu_custom_call.1} parent=11 // pred_fallthru
          _
        // Predicated region
        $region77: #{tpu_custom_call.1} parent=11 // pred_check
          %p549 = pneg %p413
        $region78: #{tpu_custom_call.1} parent=11 // pred_check_branch
          %551 = sbr.rel (%p549) target = $region80
        $region79: #{tpu_custom_call.1} parent=11 // pred_region
          _
        $region80: #{tpu_custom_call.1} parent=11 // pred_fallthru
          _
        // Predicated region
        $region81: #{tpu_custom_call.1} parent=11 // pred_check
          %p552 = pneg %p434
        $region82: #{tpu_custom_call.1} parent=11 // pred_check_branch
          %554 = sbr.rel (%p552) target = $region84
        $region83: #{tpu_custom_call.1} parent=11 // pred_region
          _
        $region84: #{tpu_custom_call.1} parent=11 // pred_fallthru
          _
      $region12: #{tpu_custom_call.1} parent=5 // pred_fallthru
        _
      %p555 = scmp.lt.s32.totalorder %s30, 2
      // Predicated region
      $region85: #{tpu_custom_call.1} parent=5 // pred_check
        %p556 = pneg %p555
      $region86: #{tpu_custom_call.1} parent=5 // pred_check_branch
        %558 = sbr.rel (%p556) target = $region88
      $region87: #{tpu_custom_call.1} parent=5 // pred_region
        // Predicated region
        $region89: #{tpu_custom_call.1} parent=87 // pred_check
          %p559 = pneg %p50
        $region90: #{tpu_custom_call.1} parent=87 // pred_check_branch
          %561 = sbr.rel (%p559) target = $region92
        $region91: #{tpu_custom_call.1} parent=87 // pred_region
          %p562 = scmp.lt.s32.totalorder %s30, 1
          %s563 = scalar_select %p562, %s30, 1
          %s564 = smul.addr %s563, 8
          %s565 = smul.addr %s564, 4
          %s566 = scalar_lea.vmem %s0, %s565
        $region92: #{tpu_custom_call.1} parent=87 // pred_fallthru
          _
      $region88: #{tpu_custom_call.1} parent=5 // pred_fallthru
        _
      %p567 = scmp.le.s32.totalorder 1, %s30
      %p568 = scmp.lt.s32.totalorder %s30, 3
      %p569 = pnand %p567, %p568
      %p570 = pneg %p569
      // Predicated region
      $region93: #{tpu_custom_call.1} parent=5 // pred_check
        _
      $region94: #{tpu_custom_call.1} parent=5 // pred_check_branch
        %572 = sbr.rel (%p569) target = $region96
      $region95: #{tpu_custom_call.1} parent=5 // pred_region
        %s573 = ssub.s32 %s30, 1
        %p574 = scmp.lt.s32.totalorder %s35, 1
        %s575 = scalar_select %p574, %s35, 1
        %s576 = smul.addr %s575, 8
        %s577 = smul.addr %s576, 4
        %s578 = scalar_lea.vmem %s0, %s577
        %p579 = pneg %p56
        %p580 = pneg %p53
        %p581 = pneg %p77
        %p582 = pneg %p74
        %p583 = pneg %p98
        %p584 = pneg %p95
        %p585 = pneg %p119
        %p586 = pneg %p116
        %p587 = pneg %p140
        %p588 = pneg %p137
        %p589 = pneg %p161
        %p590 = pneg %p158
        %p591 = pneg %p182
        %p592 = pneg %p179
        %p593 = pneg %p203
        %p594 = pneg %p200
        %p595 = pneg %p224
        %p596 = pneg %p221
        %p597 = pneg %p245
        %p598 = pneg %p242
        %p599 = pneg %p266
        %p600 = pneg %p263
        %p601 = pneg %p287
        %p602 = pneg %p284
        %p603 = pneg %p308
        %p604 = pneg %p305
        %p605 = pneg %p329
        %p606 = pneg %p326
        %p607 = pneg %p350
        %p608 = pneg %p347
        %p609 = pneg %p371
        %p610 = pneg %p368
        %p611 = pneg %p392
        %p612 = pneg %p389
        %p613 = pneg %p413
        %p614 = pneg %p410
        %p615 = pneg %p434
        %p616 = pneg %p431
        %p617 = pneg %p460
        %p618 = pneg %p457
        %p619 = scmp.lt.s32.totalorder %s35, 1
        %s620 = scalar_select %p619, %s35, 1
        %s621 = smul.addr %s620, 8
        %s622 = scalar_lea.vmem %s19, %s621
        %p623 = pneg %p486
        %p624 = pneg %p483
        %s625 = sand.u32 %s473, 1
        %s626 = scalar_lea.sflag [#allocation3], %s625
        %s627 = sand.u32 %s473, 1
        %s628 = scalar_lea.vmem [#allocation2], %s627
        %p629 = scmp.lt.s32.totalorder %s35, 1
        %s630 = scalar_select %p629, %s35, 1
        %s631 = smul.addr %s630, 8
        %s632 = smul.addr %s631, 4
        %s633 = scalar_lea.vmem %s0, %s632
        %p634 = scmp.lt.s32.totalorder %s35, 1
        %s635 = scalar_select %p634, %s35, 1
        %s636 = smul.addr %s635, 8
        %s637 = scalar_lea.vmem %s19, %s636
        %v639 = vld [vmem:[%s633] sm:$0xf]
        %v640 = vld [vmem:[%s633 + $0x4] sm:$0xf]
        %v641 = vld [vmem:[%s633 + $0x8] sm:$0xf]
        %v642 = vld [vmem:[%s633 + $0xc] sm:$0xf]
        %v643 = vld [vmem:[%s633 + $0x10] sm:$0xf]
        %v644 = vld [vmem:[%s633 + $0x14] sm:$0xf]
        %v645 = vld [vmem:[%s633 + $0x18] sm:$0xf]
        %v646 = vld [vmem:[%s633 + $0x1c] sm:$0xf]
        %v647 = vld [vmem:[%s1] sm:$0xf]
        %v648 = vld [vmem:[%s1 + $0x4] sm:$0xf]
        %v649 = vld [vmem:[%s1 + $0x8] sm:$0xf]
        %v650 = vld [vmem:[%s1 + $0xc] sm:$0xf]
        %v651 = vld [vmem:[%s1 + $0x10] sm:$0xf]
        %v652 = vld [vmem:[%s2] sm:$0xff]
        %v653 = vld [vmem:[%s2 + $0x8] sm:$0xff]
        %v654 = vld [vmem:[%s2 + $0x10] sm:$0xff]
        %v655 = vld [vmem:[%s2 + $0x18] sm:$0xff]
        %v656 = vld [vmem:[%s2 + $0x20] sm:$0xff]
        %658 = vset.pattern.permute.xlu0 0
        %659 = vperm.xlu0 %658, %v652
        %v660 = vpop.permute.xlu0 %659
        %663 = vset.pattern.permute.xlu0 0
        %664 = vperm.xlu0 %663, %v653
        %v665 = vpop.permute.xlu0 %664
        %668 = vset.pattern.permute.xlu0 0
        %669 = vperm.xlu0 %668, %v654
        %v670 = vpop.permute.xlu0 %669
        %673 = vset.pattern.permute.xlu0 0
        %674 = vperm.xlu0 %673, %v655
        %v675 = vpop.permute.xlu0 %674
        %678 = vset.pattern.permute.xlu0 0
        %679 = vperm.xlu0 %678, %v656
        %v680 = vpop.permute.xlu0 %679
        %v687 = vunpack.c.l.b16 %v647
        %v688 = vunpack.c.l.b16 %v648
        %v689 = vunpack.c.l.b16 %v649
        %v690 = vunpack.c.l.b16 %v650
        %v691 = vunpack.c.l.b16 %v651
        %v692 = vpack.c.b16 %v688, %v687
        %v693 = vpack.c.b16 %v690, %v689
        %v694 = vpack.c.b16 %v691, %v691
        %v703 = vunpack.c.l.b16 %v639
        %v704 = vunpack.c.l.b16 %v640
        %v705 = vunpack.c.l.b16 %v641
        %v706 = vunpack.c.l.b16 %v642
        %v707 = vunpack.c.l.b16 %v643
        %v708 = vunpack.c.l.b16 %v644
        %v709 = vunpack.c.l.b16 %v645
        %v710 = vunpack.c.l.b16 %v646
        %v711 = vpack.c.b16 %v704, %v703
        %v712 = vpack.c.b16 %v706, %v705
        %v713 = vpack.c.b16 %v708, %v707
        %v714 = vpack.c.b16 %v710, %v709
        %vm719 = vcmask 523264
        %v721 = vsel %vm719, %v692, 0
        %v724 = vsel %vm719, %v693, 0
        %v727 = vsel %vm719, %v694, 0
        %729 = vmatprep.subr.bf16.mxu0 0
        %730 = vmatpush1.bf16.msra.mxu0 0
        %731 = vmatprep.subr.bf16.mxu0 0
        %732 = vmatpush1.bf16.msra.mxu0 0
        %733 = vmatprep.subr.bf16.mxu0 0
        %734 = vmatpush1.bf16.msra.mxu0 0
        %735 = vmatprep.subr.bf16.mxu0 0
        %736 = vmatpush1.bf16.msra.mxu0 0
        %737 = vmatprep.subr.bf16.mxu0 0
        %738 = vmatpush1.bf16.msra.mxu0 %v714
        %739 = vmatprep.subr.bf16.mxu0 0
        %740 = vmatpush1.bf16.msra.mxu0 %v713
        %741 = vmatprep.subr.bf16.mxu0 0
        %742 = vmatpush1.bf16.msra.mxu0 %v712
        %743 = vmatprep.subr.bf16.mxu0 0
        %744 = vmatpush1.bf16.msra.mxu0 %v711
        %745 = vmatprep.subr.bf16.mxu0 0
        %746 = vmatpush2.bf16.msra.mxu0 0
        %747 = vmatprep.subr.bf16.mxu0 0
        %748 = vmatpush2.bf16.msra.mxu0 0
        %749 = vmatprep.subr.bf16.mxu0 0
        %750 = vmatpush2.bf16.msra.mxu0 0
        %751 = vmatprep.subr.bf16.mxu0 0
        %752 = vmatpush2.bf16.msra.mxu0 0
        %753 = vmatprep.subr.bf16.mxu0 0
        %754 = vmatpush2.bf16.msra.mxu0 0
        %755 = vmatprep.subr.bf16.mxu0 0
        %756 = vmatpush2.bf16.msra.mxu0 0
        %757 = vmatprep.subr.bf16.mxu0 0
        %758 = vmatpush2.bf16.msra.mxu0 0
        %759 = vmatprep.subr.bf16.mxu0 0
        %760 = vmatpush2.bf16.msra.mxu0 0
        %761 = vmatprep.mubr.bf16.mxu0 0
        %762 = vmatmul.mubr.bf16.gmra.mxu0 %v721
        %v763 = vpop.f32.mrf.mxu0
        %v764 = vadd.f32 %v660, %v763
        %v765 = vpop.f32.mrf.mxu0
        %v766 = vpop.f32.mrf.mxu0
        %v767 = vadd.f32 %v665, %v766
        %v768 = vpop.f32.mrf.mxu0
        %769 = vmatprep.mubr.bf16.mxu0 0
        %770 = vmatmul.mubr.bf16.gmra.mxu0 %v724
        %v771 = vpop.f32.mrf.mxu0
        %v772 = vadd.f32 %v670, %v771
        %v773 = vpop.f32.mrf.mxu0
        %v774 = vpop.f32.mrf.mxu0
        %v775 = vadd.f32 %v675, %v774
        %v776 = vpop.f32.mrf.mxu0
        %777 = vmatprep.mubr.bf16.mxu0 0
        %778 = vmatmul.mubr.bf16.gmra.mxu0 %v727
        %v779 = vpop.f32.mrf.mxu0
        %v780 = vadd.f32 %v680, %v779
        %v781 = vpop.f32.mrf.mxu0
        %v782 = vpop.f32.mrf.mxu0
        %v783 = vpop.f32.mrf.mxu0
        %784 = vdwg.mxu0
        %v785 = vlaneseq
        %v786 = vand.u32 %v785, 127
        %vm787 = vcmp.lt.s32.totalorder %v786, 64
        %v788 = vsel %vm787, 1, 0
        %vm789 = vcmp.eq.s32.totalorder %v788, 1
        %v790 = vsel %vm789, %v764, -inf
        %v791 = vxor.u32 %v764, 2147483648
        %v792 = vmul.f32 %v791, 1.442695
        %v793 = vpow.pop %v792
        %v794 = vadd.f32 %v793, 1.0
        %v795 = vrcp.pop %v794
        %v796 = vmul.f32 1.0, %v795
        %v797 = vsel %vm789, %v796, 0.0
        %798 = vmax.xlane.f32.xlu0 %v790
        %v799 = vpop.xlane.xlu0 %798
        %vm800 = vcmask 7168
        %801 = vst.msk [vmem:[%s637] sm:$0xff] %vm800, %v799
        %v802 = vpack.c.bf16 %v772, %v767
        %v803 = vpack.c.bf16 %v780, %v775
        %v804 = vpack.c.bf16 %v797, %v797
        %805 = vmatprep.subr.bf16.mxu0 0
        %806 = vmatpush1.bf16.xpose.msra.mxu0 0
        %807 = vmatprep.subr.bf16.mxu0 0
        %808 = vmatpush1.bf16.xpose.msra.mxu0 0
        %809 = vmatprep.subr.bf16.mxu0 0
        %810 = vmatpush1.bf16.xpose.msra.mxu0 0
        %811 = vmatprep.subr.bf16.mxu0 0
        %812 = vmatpush1.bf16.xpose.msra.mxu0 0
        %813 = vmatprep.subr.bf16.mxu0 0
        %814 = vmatpush1.bf16.xpose.msra.mxu0 0
        %815 = vmatprep.subr.bf16.mxu0 0
        %816 = vmatpush1.bf16.xpose.msra.mxu0 0
        %817 = vmatprep.subr.bf16.mxu0 0
        %818 = vmatpush1.bf16.xpose.msra.mxu0 0
        %819 = vmatprep.subr.bf16.mxu0 0
        %820 = vmatpush1.bf16.xpose.msra.mxu0 %v804
        %821 = vmatprep.subr.bf16.mxu0 0
        %822 = vmatpush2.bf16.xpose.msra.mxu0 0
        %823 = vmatprep.subr.bf16.mxu0 0
        %824 = vmatpush2.bf16.xpose.msra.mxu0 0
        %825 = vmatprep.subr.bf16.mxu0 0
        %826 = vmatpush2.bf16.xpose.msra.mxu0 0
        %827 = vmatprep.subr.bf16.mxu0 0
        %828 = vmatpush2.bf16.xpose.msra.mxu0 0
        %829 = vmatprep.subr.bf16.mxu0 0
        %830 = vmatpush2.bf16.xpose.msra.mxu0 0
        %831 = vmatprep.subr.bf16.mxu0 0
        %832 = vmatpush2.bf16.xpose.msra.mxu0 0
        %833 = vmatprep.subr.bf16.mxu0 0
        %834 = vmatpush2.bf16.xpose.msra.mxu0 0
        %835 = vmatprep.subr.bf16.mxu0 0
        %836 = vmatpush2.bf16.xpose.msra.mxu0 0
        %837 = vmatprep.mubr.bf16.mxu0 0
        %838 = vmatmul.mubr.bf16.gmra.mxu0 %v802
        %v839 = vpop.f32.mrf.mxu0
        %v840 = vadd.f32 0.0, %v839
        %v841 = vpop.f32.mrf.mxu0
        %v842 = vpop.f32.mrf.mxu0
        %v843 = vadd.f32 0.0, %v842
        %v844 = vpop.f32.mrf.mxu0
        %845 = vmatprep.mubr.bf16.mxu0 0
        %846 = vmatmul.mubr.bf16.gmra.mxu0 %v803
        %v847 = vpop.f32.mrf.mxu0
        %v848 = vadd.f32 0.0, %v847
        %v849 = vpop.f32.mrf.mxu0
        %v850 = vpop.f32.mrf.mxu0
        %v851 = vadd.f32 0.0, %v850
        %v852 = vpop.f32.mrf.mxu0
        %853 = vdwg.mxu0
        %v854 = vld [vmem:[%s3] sm:$0xf]
        %v855 = vpack.c.bf16 %v843, %v840
        %v856 = vpack.c.bf16 %v851, %v848
        %vm857 = vcmask 64512
        %v859 = vsel %vm857, %v855, 0
        %v862 = vsel %vm857, %v856, 0
        %vm864 = vcmask 1043456
        %v866 = vsel %vm864, %v854, 0
        %868 = vmatprep.subr.bf16.mxu0 0
        %869 = vmatpush1.bf16.msra.mxu0 0
        %870 = vmatprep.subr.bf16.mxu0 0
        %871 = vmatpush1.bf16.msra.mxu0 0
        %872 = vmatprep.subr.bf16.mxu0 0
        %873 = vmatpush1.bf16.msra.mxu0 0
        %874 = vmatprep.subr.bf16.mxu0 0
        %875 = vmatpush1.bf16.msra.mxu0 0
        %876 = vmatprep.subr.bf16.mxu0 0
        %877 = vmatpush1.bf16.msra.mxu0 0
        %878 = vmatprep.subr.bf16.mxu0 0
        %879 = vmatpush1.bf16.msra.mxu0 0
        %880 = vmatprep.subr.bf16.mxu0 0
        %881 = vmatpush1.bf16.msra.mxu0 0
        %882 = vmatprep.subr.bf16.mxu0 0
        %883 = vmatpush1.bf16.msra.mxu0 %v866
        %884 = vmatprep.subr.bf16.mxu0 0
        %885 = vmatpush2.bf16.msra.mxu0 0
        %886 = vmatprep.subr.bf16.mxu0 0
        %887 = vmatpush2.bf16.msra.mxu0 0
        %888 = vmatprep.subr.bf16.mxu0 0
        %889 = vmatpush2.bf16.msra.mxu0 0
        %890 = vmatprep.subr.bf16.mxu0 0
        %891 = vmatpush2.bf16.msra.mxu0 0
        %892 = vmatprep.subr.bf16.mxu0 0
        %893 = vmatpush2.bf16.msra.mxu0 0
        %894 = vmatprep.subr.bf16.mxu0 0
        %895 = vmatpush2.bf16.msra.mxu0 0
        %896 = vmatprep.subr.bf16.mxu0 0
        %897 = vmatpush2.bf16.msra.mxu0 0
        %898 = vmatprep.subr.bf16.mxu0 0
        %899 = vmatpush2.bf16.msra.mxu0 0
        %900 = vmatprep.mubr.bf16.mxu0 0
        %901 = vmatmul.mubr.bf16.gmra.mxu0 %v859
        %v902 = vpop.f32.mrf.mxu0
        %v903 = vadd.f32 0.0, %v902
        %v904 = vpop.f32.mrf.mxu0
        %v905 = vpop.f32.mrf.mxu0
        %v906 = vadd.f32 0.0, %v905
        %v907 = vpop.f32.mrf.mxu0
        %908 = vmatprep.mubr.bf16.mxu0 0
        %909 = vmatmul.mubr.bf16.gmra.mxu0 %v862
        %v910 = vpop.f32.mrf.mxu0
        %v911 = vadd.f32 0.0, %v910
        %v912 = vpop.f32.mrf.mxu0
        %v913 = vpop.f32.mrf.mxu0
        %v914 = vadd.f32 0.0, %v913
        %v915 = vpop.f32.mrf.mxu0
        %916 = vdwg.mxu0
        %vm917 = vcmp.ge.f32.partialorder %v903, 0.0
        %vm918 = vcmp.ge.f32.partialorder %v906, 0.0
        %vm919 = vcmp.ge.f32.partialorder %v911, 0.0
        %vm920 = vcmp.ge.f32.partialorder %v914, 0.0
        %v921 = vmul.f32 %v903, 0.2
        %v922 = vmul.f32 %v906, 0.2
        %v923 = vmul.f32 %v911, 0.2
        %v924 = vmul.f32 %v914, 0.2
        %v925 = vsel %vm917, %v903, %v921
        %v926 = vsel %vm918, %v906, %v922
        %v927 = vsel %vm919, %v911, %v923
        %v928 = vsel %vm920, %v914, %v924
        %v929 = vld [vmem:[%s4] sm:$0xf]
        %v930 = vld [vmem:[%s4 + $0x4] sm:$0xf]
        %v931 = vld [vmem:[%s4 + $0x8] sm:$0xf]
        %v932 = vld [vmem:[%s4 + $0xc] sm:$0xf]
        %v933 = vpack.c.bf16 %v926, %v925
        %v934 = vpack.c.bf16 %v928, %v927
        %v935 = vld [vmem:[%s5] sm:$0xff]
        %v936 = vld [vmem:[%s5 + $0x8] sm:$0xff]
        %v937 = vld [vmem:[%s5 + $0x10] sm:$0xff]
        %v938 = vld [vmem:[%s5 + $0x18] sm:$0xff]
        %940 = vset.pattern.permute.xlu0 0
        %941 = vperm.xlu0 %940, %v935
        %v942 = vpop.permute.xlu0 %941
        %945 = vset.pattern.permute.xlu0 0
        %946 = vperm.xlu0 %945, %v936
        %v947 = vpop.permute.xlu0 %946
        %950 = vset.pattern.permute.xlu0 0
        %951 = vperm.xlu0 %950, %v937
        %v952 = vpop.permute.xlu0 %951
        %955 = vset.pattern.permute.xlu0 0
        %956 = vperm.xlu0 %955, %v938
        %v957 = vpop.permute.xlu0 %956
        %v963 = vunpack.c.l.b16 %v929
        %v964 = vunpack.c.l.b16 %v930
        %v965 = vunpack.c.l.b16 %v931
        %v966 = vunpack.c.l.b16 %v932
        %v967 = vpack.c.b16 %v964, %v963
        %v968 = vpack.c.b16 %v966, %v965
        %vm969 = vcmask 261120
        %v971 = vsel %vm969, %v967, 0
        %v974 = vsel %vm969, %v968, 0
        %976 = vmatprep.subr.bf16.mxu0 0
        %977 = vmatpush1.bf16.msra.mxu0 0
        %978 = vmatprep.subr.bf16.mxu0 0
        %979 = vmatpush1.bf16.msra.mxu0 0
        %980 = vmatprep.subr.bf16.mxu0 0
        %981 = vmatpush1.bf16.msra.mxu0 0
        %982 = vmatprep.subr.bf16.mxu0 0
        %983 = vmatpush1.bf16.msra.mxu0 0
        %984 = vmatprep.subr.bf16.mxu0 0
        %985 = vmatpush1.bf16.msra.mxu0 0
        %986 = vmatprep.subr.bf16.mxu0 0
        %987 = vmatpush1.bf16.msra.mxu0 0
        %988 = vmatprep.subr.bf16.mxu0 0
        %989 = vmatpush1.bf16.msra.mxu0 %v934
        %990 = vmatprep.subr.bf16.mxu0 0
        %991 = vmatpush1.bf16.msra.mxu0 %v933
        %992 = vmatprep.subr.bf16.mxu0 0
        %993 = vmatpush2.bf16.msra.mxu0 0
        %994 = vmatprep.subr.bf16.mxu0 0
        %995 = vmatpush2.bf16.msra.mxu0 0
        %996 = vmatprep.subr.bf16.mxu0 0
        %997 = vmatpush2.bf16.msra.mxu0 0
        %998 = vmatprep.subr.bf16.mxu0 0
        %999 = vmatpush2.bf16.msra.mxu0 0
        %1000 = vmatprep.subr.bf16.mxu0 0
        %1001 = vmatpush2.bf16.msra.mxu0 0
        %1002 = vmatprep.subr.bf16.mxu0 0
        %1003 = vmatpush2.bf16.msra.mxu0 0
        %1004 = vmatprep.subr.bf16.mxu0 0
        %1005 = vmatpush2.bf16.msra.mxu0 0
        %1006 = vmatprep.subr.bf16.mxu0 0
        %1007 = vmatpush2.bf16.msra.mxu0 0
        %1008 = vmatprep.mubr.bf16.mxu0 0
        %1009 = vmatmul.mubr.bf16.gmra.mxu0 %v971
        %v1010 = vpop.f32.mrf.mxu0
        %v1011 = vadd.f32 %v942, %v1010
        %v1012 = vpop.f32.mrf.mxu0
        %v1013 = vpop.f32.mrf.mxu0
        %v1014 = vadd.f32 %v947, %v1013
        %v1015 = vpop.f32.mrf.mxu0
        %1016 = vmatprep.mubr.bf16.mxu0 0
        %1017 = vmatmul.mubr.bf16.gmra.mxu0 %v974
        %v1018 = vpop.f32.mrf.mxu0
        %v1019 = vadd.f32 %v952, %v1018
        %v1020 = vpop.f32.mrf.mxu0
        %v1021 = vpop.f32.mrf.mxu0
        %v1022 = vadd.f32 %v957, %v1021
        %v1023 = vpop.f32.mrf.mxu0
        %1024 = vdwg.mxu0
        %vm1025 = vcmp.ge.f32.partialorder %v1011, 0.0
        %vm1026 = vcmp.ge.f32.partialorder %v1014, 0.0
        %vm1027 = vcmp.ge.f32.partialorder %v1019, 0.0
        %vm1028 = vcmp.ge.f32.partialorder %v1022, 0.0
        %v1029 = vmul.f32 %v1011, 0.2
        %v1030 = vmul.f32 %v1014, 0.2
        %v1031 = vmul.f32 %v1019, 0.2
        %v1032 = vmul.f32 %v1022, 0.2
        %v1033 = vsel %vm1025, %v1011, %v1029
        %v1034 = vsel %vm1026, %v1014, %v1030
        %v1035 = vsel %vm1027, %v1019, %v1031
        %v1036 = vsel %vm1028, %v1022, %v1032
        %v1037 = vadd.f32 %v840, %v1033
        %v1038 = vadd.f32 %v843, %v1034
        %v1039 = vadd.f32 %v848, %v1035
        %v1040 = vadd.f32 %v851, %v1036
        %v1041 = vld [vmem:[%s6] sm:$0xf]
        %v1042 = vld [vmem:[%s6 + $0x4] sm:$0xf]
        %v1043 = vld [vmem:[%s6 + $0x8] sm:$0xf]
        %v1044 = vld [vmem:[%s6 + $0xc] sm:$0xf]
        %v1045 = vpack.c.bf16 %v1038, %v1037
        %v1046 = vpack.c.bf16 %v1040, %v1039
        %v1051 = vunpack.c.l.b16 %v1041
        %v1052 = vunpack.c.l.b16 %v1042
        %v1053 = vunpack.c.l.b16 %v1043
        %v1054 = vunpack.c.l.b16 %v1044
        %v1055 = vpack.c.b16 %v1052, %v1051
        %v1056 = vpack.c.b16 %v1054, %v1053
        %v1058 = vsel %vm969, %v1055, 0
        %v1061 = vsel %vm969, %v1056, 0
        %1063 = vmatprep.subr.bf16.mxu0 0
        %1064 = vmatpush1.bf16.msra.mxu0 0
        %1065 = vmatprep.subr.bf16.mxu0 0
        %1066 = vmatpush1.bf16.msra.mxu0 0
        %1067 = vmatprep.subr.bf16.mxu0 0
        %1068 = vmatpush1.bf16.msra.mxu0 0
        %1069 = vmatprep.subr.bf16.mxu0 0
        %1070 = vmatpush1.bf16.msra.mxu0 0
        %1071 = vmatprep.subr.bf16.mxu0 0
        %1072 = vmatpush1.bf16.msra.mxu0 0
        %1073 = vmatprep.subr.bf16.mxu0 0
        %1074 = vmatpush1.bf16.msra.mxu0 0
        %1075 = vmatprep.subr.bf16.mxu0 0
        %1076 = vmatpush1.bf16.msra.mxu0 %v1046
        %1077 = vmatprep.subr.bf16.mxu0 0
        %1078 = vmatpush1.bf16.msra.mxu0 %v1045
        %1079 = vmatprep.subr.bf16.mxu0 0
        %1080 = vmatpush2.bf16.msra.mxu0 0
        %1081 = vmatprep.subr.bf16.mxu0 0
        %1082 = vmatpush2.bf16.msra.mxu0 0
        %1083 = vmatprep.subr.bf16.mxu0 0
        %1084 = vmatpush2.bf16.msra.mxu0 0
        %1085 = vmatprep.subr.bf16.mxu0 0
        %1086 = vmatpush2.bf16.msra.mxu0 0
        %1087 = vmatprep.subr.bf16.mxu0 0
        %1088 = vmatpush2.bf16.msra.mxu0 0
        %1089 = vmatprep.subr.bf16.mxu0 0
        %1090 = vmatpush2.bf16.msra.mxu0 0
        %1091 = vmatprep.subr.bf16.mxu0 0
        %1092 = vmatpush2.bf16.msra.mxu0 0
        %1093 = vmatprep.subr.bf16.mxu0 0
        %1094 = vmatpush2.bf16.msra.mxu0 0
        %1095 = vmatprep.mubr.bf16.mxu0 0
        %1096 = vmatmul.mubr.bf16.gmra.mxu0 %v1058
        %v1097 = vpop.f32.mrf.mxu0
        %v1098 = vadd.f32 0.0, %v1097
        %v1099 = vpop.f32.mrf.mxu0
        %v1100 = vpop.f32.mrf.mxu0
        %v1101 = vadd.f32 0.0, %v1100
        %v1102 = vpop.f32.mrf.mxu0
        %1103 = vmatprep.mubr.bf16.mxu0 0
        %1104 = vmatmul.mubr.bf16.gmra.mxu0 %v1061
        %v1105 = vpop.f32.mrf.mxu0
        %v1106 = vadd.f32 0.0, %v1105
        %v1107 = vpop.f32.mrf.mxu0
        %v1108 = vpop.f32.mrf.mxu0
        %v1109 = vadd.f32 0.0, %v1108
        %v1110 = vpop.f32.mrf.mxu0
        %1111 = vdwg.mxu0
        %v1112 = vsel %vm857, %v1098, 0.0
        %1113 = vadd.xlane.f32.xlu0 %v1112
        %v1114 = vpop.xlane.xlu0 %1113
        %v1115 = vsel %vm857, %v1101, 0.0
        %1116 = vadd.xlane.f32.xlu0 %v1115
        %v1117 = vpop.xlane.xlu0 %1116
        %v1118 = vsel %vm857, %v1106, 0.0
        %1119 = vadd.xlane.f32.xlu0 %v1118
        %v1120 = vpop.xlane.xlu0 %1119
        %v1121 = vsel %vm857, %v1109, 0.0
        %1122 = vadd.xlane.f32.xlu0 %v1121
        %v1123 = vpop.xlane.xlu0 %1122
        %v1124 = vrcp.pop 8.0
        %v1125 = vmul.f32 %v1114, %v1124
        %v1126 = vmul.f32 %v1117, %v1124
        %v1127 = vmul.f32 %v1120, %v1124
        %v1128 = vmul.f32 %v1123, %v1124
        %v1129 = vld [vmem:[%s7] sm:$0xff]
        %v1130 = vld [vmem:[%s7 + $0x8] sm:$0xff]
        %v1131 = vld [vmem:[%s7 + $0x10] sm:$0xff]
        %v1132 = vld [vmem:[%s7 + $0x18] sm:$0xff]
        %v1133 = vadd.f32 %v1125, %v1129
        %v1134 = vadd.f32 %v1126, %v1130
        %v1135 = vadd.f32 %v1127, %v1131
        %v1136 = vadd.f32 %v1128, %v1132
        %v1137 = vld [vmem:[%s10] sm:$0xff]
        %v1138 = vld [vmem:[%s10 + $0x8] sm:$0xff]
        %v1139 = vld [vmem:[%s10 + $0x10] sm:$0xff]
        %v1140 = vld [vmem:[%s10 + $0x18] sm:$0xff]
        %v1141 = vsub.f32 %v1133, %v1137
        %v1142 = vsub.f32 %v1134, %v1138
        %v1143 = vsub.f32 %v1135, %v1139
        %v1144 = vsub.f32 %v1136, %v1140
        %v1145 = vld [vmem:[%s11] sm:$0xff]
        %v1146 = vld [vmem:[%s11 + $0x8] sm:$0xff]
        %v1147 = vld [vmem:[%s11 + $0x10] sm:$0xff]
        %v1148 = vld [vmem:[%s11 + $0x18] sm:$0xff]
        %v1149 = vadd.f32 %v1145, 1e-05
        %v1150 = vadd.f32 %v1146, 1e-05
        %v1151 = vadd.f32 %v1147, 1e-05
        %v1152 = vadd.f32 %v1148, 1e-05
        %v1153 = vrsqrt.pop %v1149
        %v1154 = vrsqrt.pop %v1150
        %v1155 = vrsqrt.pop %v1151
        %v1156 = vrsqrt.pop %v1152
        %v1157 = vmul.f32 %v1141, %v1153
        %v1158 = vmul.f32 %v1142, %v1154
        %v1159 = vmul.f32 %v1143, %v1155
        %v1160 = vmul.f32 %v1144, %v1156
        %v1161 = vld [vmem:[%s8] sm:$0xff]
        %v1162 = vld [vmem:[%s8 + $0x8] sm:$0xff]
        %v1163 = vld [vmem:[%s8 + $0x10] sm:$0xff]
        %v1164 = vld [vmem:[%s8 + $0x18] sm:$0xff]
        %v1165 = vmul.f32 %v1157, %v1161
        %v1166 = vmul.f32 %v1158, %v1162
        %v1167 = vmul.f32 %v1159, %v1163
        %v1168 = vmul.f32 %v1160, %v1164
        %v1169 = vld [vmem:[%s9] sm:$0xff]
        %v1170 = vld [vmem:[%s9 + $0x8] sm:$0xff]
        %v1171 = vld [vmem:[%s9 + $0x10] sm:$0xff]
        %v1172 = vld [vmem:[%s9 + $0x18] sm:$0xff]
        %v1173 = vadd.f32 %v1165, %v1169
        %v1174 = vadd.f32 %v1166, %v1170
        %v1175 = vadd.f32 %v1167, %v1171
        %v1176 = vadd.f32 %v1168, %v1172
        %vm1177 = vcmp.ge.f32.partialorder %v1173, 0.0
        %vm1178 = vcmp.ge.f32.partialorder %v1174, 0.0
        %vm1179 = vcmp.ge.f32.partialorder %v1175, 0.0
        %vm1180 = vcmp.ge.f32.partialorder %v1176, 0.0
        %v1181 = vmul.f32 %v1173, 0.2
        %v1182 = vmul.f32 %v1174, 0.2
        %v1183 = vmul.f32 %v1175, 0.2
        %v1184 = vmul.f32 %v1176, 0.2
        %v1185 = vsel %vm1177, %v1173, %v1181
        %v1186 = vsel %vm1178, %v1174, %v1182
        %v1187 = vsel %vm1179, %v1175, %v1183
        %v1188 = vsel %vm1180, %v1176, %v1184
        %v1189 = vld [vmem:[%s12] sm:$0xf]
        %v1190 = vpack.c.bf16 %v1186, %v1185
        %v1191 = vpack.c.bf16 %v1188, %v1187
        %v1193 = vsel %vm969, %v1189, 0
        %1195 = vmatprep.subr.bf16.mxu0 0
        %1196 = vmatpush1.bf16.msra.mxu0 0
        %1197 = vmatprep.subr.bf16.mxu0 0
        %1198 = vmatpush1.bf16.msra.mxu0 0
        %1199 = vmatprep.subr.bf16.mxu0 0
        %1200 = vmatpush1.bf16.msra.mxu0 0
        %1201 = vmatprep.subr.bf16.mxu0 0
        %1202 = vmatpush1.bf16.msra.mxu0 0
        %1203 = vmatprep.subr.bf16.mxu0 0
        %1204 = vmatpush1.bf16.msra.mxu0 0
        %1205 = vmatprep.subr.bf16.mxu0 0
        %1206 = vmatpush1.bf16.msra.mxu0 0
        %1207 = vmatprep.subr.bf16.mxu0 0
        %1208 = vmatpush1.bf16.msra.mxu0 %v1191
        %1209 = vmatprep.subr.bf16.mxu0 0
        %1210 = vmatpush1.bf16.msra.mxu0 %v1190
        %1211 = vmatprep.subr.bf16.mxu0 0
        %1212 = vmatpush2.bf16.msra.mxu0 0
        %1213 = vmatprep.subr.bf16.mxu0 0
        %1214 = vmatpush2.bf16.msra.mxu0 0
        %1215 = vmatprep.subr.bf16.mxu0 0
        %1216 = vmatpush2.bf16.msra.mxu0 0
        %1217 = vmatprep.subr.bf16.mxu0 0
        %1218 = vmatpush2.bf16.msra.mxu0 0
        %1219 = vmatprep.subr.bf16.mxu0 0
        %1220 = vmatpush2.bf16.msra.mxu0 0
        %1221 = vmatprep.subr.bf16.mxu0 0
        %1222 = vmatpush2.bf16.msra.mxu0 0
        %1223 = vmatprep.subr.bf16.mxu0 0
        %1224 = vmatpush2.bf16.msra.mxu0 0
        %1225 = vmatprep.subr.bf16.mxu0 0
        %1226 = vmatpush2.bf16.msra.mxu0 0
        %1227 = vmatprep.mubr.bf16.mxu0 0
        %1228 = vmatmul.mubr.bf16.gmra.mxu0 %v1193
        %v1229 = vpop.f32.mrf.mxu0
        %v1230 = vadd.f32 0.0, %v1229
        %v1231 = vpop.f32.mrf.mxu0
        %v1232 = vpop.f32.mrf.mxu0
        %v1233 = vpop.f32.mrf.mxu0
        %1234 = vdwg.mxu0
        %v1235 = vld [vmem:[%s13] sm:$0xf]
        %v1237 = vsel %vm969, %v1235, 0
        %1239 = vmatprep.subr.bf16.mxu0 0
        %1240 = vmatpush1.bf16.msra.mxu0 0
        %1241 = vmatprep.subr.bf16.mxu0 0
        %1242 = vmatpush1.bf16.msra.mxu0 0
        %1243 = vmatprep.subr.bf16.mxu0 0
        %1244 = vmatpush1.bf16.msra.mxu0 0
        %1245 = vmatprep.subr.bf16.mxu0 0
        %1246 = vmatpush1.bf16.msra.mxu0 0
        %1247 = vmatprep.subr.bf16.mxu0 0
        %1248 = vmatpush1.bf16.msra.mxu0 0
        %1249 = vmatprep.subr.bf16.mxu0 0
        %1250 = vmatpush1.bf16.msra.mxu0 0
        %1251 = vmatprep.subr.bf16.mxu0 0
        %1252 = vmatpush1.bf16.msra.mxu0 %v1046
        %1253 = vmatprep.subr.bf16.mxu0 0
        %1254 = vmatpush1.bf16.msra.mxu0 %v1045
        %1255 = vmatprep.subr.bf16.mxu0 0
        %1256 = vmatpush2.bf16.msra.mxu0 0
        %1257 = vmatprep.subr.bf16.mxu0 0
        %1258 = vmatpush2.bf16.msra.mxu0 0
        %1259 = vmatprep.subr.bf16.mxu0 0
        %1260 = vmatpush2.bf16.msra.mxu0 0
        %1261 = vmatprep.subr.bf16.mxu0 0
        %1262 = vmatpush2.bf16.msra.mxu0 0
        %1263 = vmatprep.subr.bf16.mxu0 0
        %1264 = vmatpush2.bf16.msra.mxu0 0
        %1265 = vmatprep.subr.bf16.mxu0 0
        %1266 = vmatpush2.bf16.msra.mxu0 0
        %1267 = vmatprep.subr.bf16.mxu0 0
        %1268 = vmatpush2.bf16.msra.mxu0 0
        %1269 = vmatprep.subr.bf16.mxu0 0
        %1270 = vmatpush2.bf16.msra.mxu0 0
        %1271 = vmatprep.mubr.bf16.mxu0 0
        %1272 = vmatmul.mubr.bf16.gmra.mxu0 %v1237
        %v1273 = vpop.f32.mrf.mxu0
        %v1274 = vadd.f32 0.0, %v1273
        %v1275 = vpop.f32.mrf.mxu0
        %v1276 = vpop.f32.mrf.mxu0
        %v1277 = vpop.f32.mrf.mxu0
        %1278 = vdwg.mxu0
        %1280 = vset.pattern.permute.xlu0 0
        %1281 = vperm.xlu0 %1280, %v1230
        %v1282 = vpop.permute.xlu0 %1281
        %v1284 = vadd.f32 %v1282, %v1274
        %v1285 = vld [vmem:[%s14] sm:$0xff]
        %1287 = vset.pattern.permute.xlu0 0
        %1288 = vperm.xlu0 %1287, %v1285
        %v1289 = vpop.permute.xlu0 %1288
        %v1291 = vadd.f32 %v1284, %v1289
        %v1292 = vxor.u32 %v1291, 2147483648
        %v1293 = vmul.f32 %v1292, 1.442695
        %v1294 = vpow.pop %v1293
        %v1295 = vadd.f32 %v1294, 1.0
        %v1296 = vrcp.pop %v1295
        %v1297 = vmul.f32 1.0, %v1296
        %v1298 = vpack.c.bf16 %v1297, %v1297
        %v1300 = vsel %vm857, %v1045, 0
        %v1303 = vsel %vm857, %v1046, 0
        %v1306 = vsel %vm864, %v1298, 0
        %1308 = vmatprep.subr.bf16.mxu0 0
        %1309 = vmatpush1.bf16.msra.mxu0 0
        %1310 = vmatprep.subr.bf16.mxu0 0
        %1311 = vmatpush1.bf16.msra.mxu0 0
        %1312 = vmatprep.subr.bf16.mxu0 0
        %1313 = vmatpush1.bf16.msra.mxu0 0
        %1314 = vmatprep.subr.bf16.mxu0 0
        %1315 = vmatpush1.bf16.msra.mxu0 0
        %1316 = vmatprep.subr.bf16.mxu0 0
        %1317 = vmatpush1.bf16.msra.mxu0 0
        %1318 = vmatprep.subr.bf16.mxu0 0
        %1319 = vmatpush1.bf16.msra.mxu0 0
        %1320 = vmatprep.subr.bf16.mxu0 0
        %1321 = vmatpush1.bf16.msra.mxu0 0
        %1322 = vmatprep.subr.bf16.mxu0 0
        %1323 = vmatpush1.bf16.msra.mxu0 %v1306
        %1324 = vmatprep.subr.bf16.mxu0 0
        %1325 = vmatpush2.bf16.msra.mxu0 0
        %1326 = vmatprep.subr.bf16.mxu0 0
        %1327 = vmatpush2.bf16.msra.mxu0 0
        %1328 = vmatprep.subr.bf16.mxu0 0
        %1329 = vmatpush2.bf16.msra.mxu0 0
        %1330 = vmatprep.subr.bf16.mxu0 0
        %1331 = vmatpush2.bf16.msra.mxu0 0
        %1332 = vmatprep.subr.bf16.mxu0 0
        %1333 = vmatpush2.bf16.msra.mxu0 0
        %1334 = vmatprep.subr.bf16.mxu0 0
        %1335 = vmatpush2.bf16.msra.mxu0 0
        %1336 = vmatprep.subr.bf16.mxu0 0
        %1337 = vmatpush2.bf16.msra.mxu0 0
        %1338 = vmatprep.subr.bf16.mxu0 0
        %1339 = vmatpush2.bf16.msra.mxu0 0
        %1340 = vmatprep.mubr.bf16.mxu0 0
        %1341 = vmatmul.mubr.bf16.gmra.mxu0 %v1300
        %v1342 = vpop.f32.mrf.mxu0
        %v1343 = vadd.f32 0.0, %v1342
        %v1344 = vpop.f32.mrf.mxu0
        %v1345 = vpop.f32.mrf.mxu0
        %v1346 = vadd.f32 0.0, %v1345
        %v1347 = vpop.f32.mrf.mxu0
        %1348 = vmatprep.mubr.bf16.mxu0 0
        %1349 = vmatmul.mubr.bf16.gmra.mxu0 %v1303
        %v1350 = vpop.f32.mrf.mxu0
        %v1351 = vadd.f32 0.0, %v1350
        %v1352 = vpop.f32.mrf.mxu0
        %v1353 = vpop.f32.mrf.mxu0
        %v1354 = vadd.f32 0.0, %v1353
        %v1355 = vpop.f32.mrf.mxu0
        %1356 = vdwg.mxu0
        %vm1357 = vcmp.ge.f32.partialorder %v1343, 0.0
        %vm1358 = vcmp.ge.f32.partialorder %v1346, 0.0
        %vm1359 = vcmp.ge.f32.partialorder %v1351, 0.0
        %vm1360 = vcmp.ge.f32.partialorder %v1354, 0.0
        %v1361 = vmul.f32 %v1343, 0.2
        %v1362 = vmul.f32 %v1346, 0.2
        %v1363 = vmul.f32 %v1351, 0.2
        %v1364 = vmul.f32 %v1354, 0.2
        %v1365 = vsel %vm1357, %v1343, %v1361
        %v1366 = vsel %vm1358, %v1346, %v1362
        %v1367 = vsel %vm1359, %v1351, %v1363
        %v1368 = vsel %vm1360, %v1354, %v1364
        %v1369 = vld [vmem:[%s15] sm:$0xf]
        %v1370 = vld [vmem:[%s15 + $0x4] sm:$0xf]
        %v1371 = vld [vmem:[%s15 + $0x8] sm:$0xf]
        %v1372 = vld [vmem:[%s15 + $0xc] sm:$0xf]
        %v1373 = vpack.c.bf16 %v1366, %v1365
        %v1374 = vpack.c.bf16 %v1368, %v1367
        %v1375 = vld [vmem:[%s16] sm:$0xff]
        %v1376 = vld [vmem:[%s16 + $0x8] sm:$0xff]
        %v1377 = vld [vmem:[%s16 + $0x10] sm:$0xff]
        %v1378 = vld [vmem:[%s16 + $0x18] sm:$0xff]
        %1380 = vset.pattern.permute.xlu0 0
        %1381 = vperm.xlu0 %1380, %v1375
        %v1382 = vpop.permute.xlu0 %1381
        %1385 = vset.pattern.permute.xlu0 0
        %1386 = vperm.xlu0 %1385, %v1376
        %v1387 = vpop.permute.xlu0 %1386
        %1390 = vset.pattern.permute.xlu0 0
        %1391 = vperm.xlu0 %1390, %v1377
        %v1392 = vpop.permute.xlu0 %1391
        %1395 = vset.pattern.permute.xlu0 0
        %1396 = vperm.xlu0 %1395, %v1378
        %v1397 = vpop.permute.xlu0 %1396
        %v1403 = vunpack.c.l.b16 %v1369
        %v1404 = vunpack.c.l.b16 %v1370
        %v1405 = vunpack.c.l.b16 %v1371
        %v1406 = vunpack.c.l.b16 %v1372
        %v1407 = vpack.c.b16 %v1404, %v1403
        %v1408 = vpack.c.b16 %v1406, %v1405
        %v1410 = vsel %vm969, %v1407, 0
        %v1413 = vsel %vm969, %v1408, 0
        %1415 = vmatprep.subr.bf16.mxu0 0
        %1416 = vmatpush1.bf16.msra.mxu0 0
        %1417 = vmatprep.subr.bf16.mxu0 0
        %1418 = vmatpush1.bf16.msra.mxu0 0
        %1419 = vmatprep.subr.bf16.mxu0 0
        %1420 = vmatpush1.bf16.msra.mxu0 0
        %1421 = vmatprep.subr.bf16.mxu0 0
        %1422 = vmatpush1.bf16.msra.mxu0 0
        %1423 = vmatprep.subr.bf16.mxu0 0
        %1424 = vmatpush1.bf16.msra.mxu0 0
        %1425 = vmatprep.subr.bf16.mxu0 0
        %1426 = vmatpush1.bf16.msra.mxu0 0
        %1427 = vmatprep.subr.bf16.mxu0 0
        %1428 = vmatpush1.bf16.msra.mxu0 %v1374
        %1429 = vmatprep.subr.bf16.mxu0 0
        %1430 = vmatpush1.bf16.msra.mxu0 %v1373
        %1431 = vmatprep.subr.bf16.mxu0 0
        %1432 = vmatpush2.bf16.msra.mxu0 0
        %1433 = vmatprep.subr.bf16.mxu0 0
        %1434 = vmatpush2.bf16.msra.mxu0 0
        %1435 = vmatprep.subr.bf16.mxu0 0
        %1436 = vmatpush2.bf16.msra.mxu0 0
        %1437 = vmatprep.subr.bf16.mxu0 0
        %1438 = vmatpush2.bf16.msra.mxu0 0
        %1439 = vmatprep.subr.bf16.mxu0 0
        %1440 = vmatpush2.bf16.msra.mxu0 0
        %1441 = vmatprep.subr.bf16.mxu0 0
        %1442 = vmatpush2.bf16.msra.mxu0 0
        %1443 = vmatprep.subr.bf16.mxu0 0
        %1444 = vmatpush2.bf16.msra.mxu0 0
        %1445 = vmatprep.subr.bf16.mxu0 0
        %1446 = vmatpush2.bf16.msra.mxu0 0
        %1447 = vmatprep.mubr.bf16.mxu0 0
        %1448 = vmatmul.mubr.bf16.gmra.mxu0 %v1410
        %v1449 = vpop.f32.mrf.mxu0
        %v1450 = vadd.f32 %v1382, %v1449
        %v1451 = vpop.f32.mrf.mxu0
        %v1452 = vpop.f32.mrf.mxu0
        %v1453 = vadd.f32 %v1387, %v1452
        %v1454 = vpop.f32.mrf.mxu0
        %1455 = vmatprep.mubr.bf16.mxu0 0
        %1456 = vmatmul.mubr.bf16.gmra.mxu0 %v1413
        %v1457 = vpop.f32.mrf.mxu0
        %v1458 = vadd.f32 %v1392, %v1457
        %v1459 = vpop.f32.mrf.mxu0
        %v1460 = vpop.f32.mrf.mxu0
        %v1461 = vadd.f32 %v1397, %v1460
        %v1462 = vpop.f32.mrf.mxu0
        %1463 = vdwg.mxu0
        %vm1464 = vcmp.ge.f32.partialorder %v1450, 0.0
        %vm1465 = vcmp.ge.f32.partialorder %v1453, 0.0
        %vm1466 = vcmp.ge.f32.partialorder %v1458, 0.0
        %vm1467 = vcmp.ge.f32.partialorder %v1461, 0.0
        %v1468 = vmul.f32 %v1450, 0.2
        %v1469 = vmul.f32 %v1453, 0.2
        %v1470 = vmul.f32 %v1458, 0.2
        %v1471 = vmul.f32 %v1461, 0.2
        %v1472 = vsel %vm1464, %v1450, %v1468
        %v1473 = vsel %vm1465, %v1453, %v1469
        %v1474 = vsel %vm1466, %v1458, %v1470
        %v1475 = vsel %vm1467, %v1461, %v1471
        %v1476 = vadd.f32 %v840, %v1472
        %v1477 = vadd.f32 %v843, %v1473
        %v1478 = vadd.f32 %v848, %v1474
        %v1479 = vadd.f32 %v851, %v1475
        %v1480 = vld [vmem:[%s17] sm:$0xff]
        %v1481 = vld [vmem:[%s17 + $0x8] sm:$0xff]
        %v1482 = vld [vmem:[%s17 + $0x10] sm:$0xff]
        %v1483 = vld [vmem:[%s17 + $0x18] sm:$0xff]
        %v1484 = vmul.f32 %v1480, %v1476
        %v1485 = vmul.f32 %v1481, %v1477
        %v1486 = vmul.f32 %v1482, %v1478
        %v1487 = vmul.f32 %v1483, %v1479
        %v1488 = vsel %vm857, %v1484, 0.0
        %v1489 = vsel %vm857, %v1485, 0.0
        %v1490 = vadd.f32 %v1488, %v1489
        %v1491 = vsel %vm857, %v1486, 0.0
        %v1492 = vadd.f32 %v1490, %v1491
        %v1493 = vsel %vm857, %v1487, 0.0
        %v1494 = vadd.f32 %v1492, %v1493
        %v1495 = vrot.slane %v1494, 4
        %v1496 = vadd.f32 %v1494, %v1495
        %v1497 = vrot.slane %v1496, 2
        %v1498 = vadd.f32 %v1496, %v1497
        %v1499 = vrot.slane %v1498, 1
        %v1500 = vadd.f32 %v1498, %v1499
        %v1501 = vld [vmem:[%s18] sm:$0x1]
        %v1502 = vadd.f32 %v1500, %v1501
        %vm1503 = vcmask 57344
        %1504 = vst.msk [vmem:[%s628] sm:$0x1] %vm1503, %v1502
        %p1505 = scmp.lt.s32.totalorder %s35, 1
        %s1506 = scalar_select %p1505, %s35, 1
        %s1507 = smul.addr %s1506, 8
        %s1508 = scalar_lea.vmem %s19, %s1507
        %s1509 = sand.u32 %s473, 1
        %s1510 = scalar_lea.sflag [#allocation3], %s1509
        %s1511 = sand.u32 %s473, 1
        %s1512 = scalar_lea.vmem [#allocation2], %s1511
        // Predicated region
        $region97: #{tpu_custom_call.1} parent=95 // pred_check
          %p1513 = pneg %p457
        $region98: #{tpu_custom_call.1} parent=95 // pred_check_branch
          %1515 = sbr.rel (%p1513) target = $region100
        $region99: #{tpu_custom_call.1} parent=95 // pred_region
          _
        $region100: #{tpu_custom_call.1} parent=95 // pred_fallthru
          _
        // Predicated region
        $region101: #{tpu_custom_call.1} parent=95 // pred_check
          %p1516 = pneg %p483
        $region102: #{tpu_custom_call.1} parent=95 // pred_check_branch
          %1518 = sbr.rel (%p1516) target = $region104
        $region103: #{tpu_custom_call.1} parent=95 // pred_region
          %s1520 = ssub.s32 16, 16
          %1521 = vsyncadd %s1510, %s1520
          %s1522 = smul.addr %s35, 16
          %s1523 = scalar_lea.hbm %s20, %s1522
          %s1525 = sshll.u32 %s1512, 4
          %s1526 = int_to_ptr.vmem [resolvable:$true] %s1525
          %1528 = dma.vmem_to_hbm [thread:$0]  %s1526, 16, %s1523, %s1510
        $region104: #{tpu_custom_call.1} parent=95 // pred_fallthru
          _
      $region96: #{tpu_custom_call.1} parent=5 // pred_fallthru
        _
      %p1529 = scmp.le.s32.totalorder 2, %s30
      // Predicated region
      $region105: #{tpu_custom_call.1} parent=5 // pred_check
        %p1530 = pneg %p1529
      $region106: #{tpu_custom_call.1} parent=5 // pred_check_branch
        %1532 = sbr.rel (%p1530) target = $region108
      $region107: #{tpu_custom_call.1} parent=5 // pred_region
        %s1533 = ssub.s32 %s30, 2
        // Predicated region
        $region109: #{tpu_custom_call.1} parent=107 // pred_check
          %p1534 = pneg %p463
        $region110: #{tpu_custom_call.1} parent=107 // pred_check_branch
          %1536 = sbr.rel (%p1534) target = $region112
        $region111: #{tpu_custom_call.1} parent=107 // pred_region
          %p1537 = scmp.lt.s32.totalorder %s36, 1
          %s1538 = scalar_select %p1537, %s36, 1
          %s1539 = smul.addr %s1538, 8
          %s1540 = scalar_lea.vmem %s19, %s1539
        $region112: #{tpu_custom_call.1} parent=107 // pred_fallthru
          _
        // Predicated region
        $region113: #{tpu_custom_call.1} parent=107 // pred_check
          %p1541 = pneg %p489
        $region114: #{tpu_custom_call.1} parent=107 // pred_check_branch
          %1543 = sbr.rel (%p1541) target = $region116
        $region115: #{tpu_custom_call.1} parent=107 // pred_region
          %s1544 = sand.u32 %s474, 1
          %s1545 = scalar_lea.sflag [#allocation3], %s1544
          %s1546 = sand.u32 %s474, 1
          %s1547 = scalar_lea.vmem [#allocation2], %s1546
          %1548 = dma.done %s1545, 16
        $region116: #{tpu_custom_call.1} parent=107 // pred_fallthru
          _
      $region108: #{tpu_custom_call.1} parent=5 // pred_fallthru
        _
    $region6: #{tpu_custom_call.1} parent=1 // loop_footer
      %s34 = sadd.s32 1, %s30
    $region7: #{tpu_custom_call.1} parent=1 // loop_footer_branch
      %29 = sbr.rel target = $region3
    $region8: #{tpu_custom_call.1} parent=1 // loop_exit
      _
    %1549 = vsyncpa [#allocation3], 1
    %s1550 = scalar_lea.sflag [#allocation3], 1
    %1551 = vsyncpa %s1550, 1

</llo_original>
